<compile_context>
chip_gen: v7x
topology: tpu7x:2x2x1
jax: 0.10.0
libtpu: 0.0.40
codegen_flags: <defaults>
</compile_context>

<pallas_src>
import functools

import jax
import jax.numpy as jnp
from jax.experimental import pallas as pl
from jax.experimental.pallas import tpu as pltpu

_C = 128  # lane-dense (padded) width for OUTPUT channel dims only


# ------------------------------ helpers ------------------------------------ #
def _sigmoid(x):
    # exp and approx-reciprocal both run in the EUP slot (free vs. VPU divide).
    return pl.reciprocal(1.0 + jnp.exp(-x), approx=True)


def _maxabs(a, b):
    return jnp.where(jnp.abs(a) >= jnp.abs(b), a, b)


def _round_up(x, m):
    return (x + m - 1) // m * m


def _pad_to(a, shape):
    return jnp.pad(a, [(0, t - s) for s, t in zip(a.shape, shape)])


# ------------------------------ Pallas kernel ------------------------------ #
def _cnn_kernel(x1_ref, w1_ref, w2_ref, fcw_ref, vecs_ref, out_ref, mid_ref,
                *, h, w, c1, c2):
    """One batch element per grid step."""
    c = _C
    hp, wp = h // 2, w // 2
    m2 = hp * wp

    b1 = vecs_ref[0:1, :]            # conv1 bias (scale folded), (1,128)
    wa = vecs_ref[1:2, :]            # attention 1x1 weight,      (1,128)
    ba = vecs_ref[2:3, 0:1]          # attention bias,            (1,1)
    b2 = vecs_ref[3:4, :]            # conv2 bias,                (1,128)
    fcb = vecs_ref[4:5, :]           # fc bias,                   (1,128)

    # ---- CustomConv2d (3x3, pad 1, scale folded): ONE im2col matmul --------
    y = jnp.dot(x1_ref[...], w1_ref[...],
                preferred_element_type=jnp.float32) + b1          # (h*w, 128)

    # ---- CustomActivation (assumed SiLU) ------------------------------------
    y = y * _sigmoid(y)

    # ---- SimpleSpatialAttention: x * sigmoid(1x1 conv(x) -> 1 channel) -----
    logit = jnp.sum(y * wa, axis=-1, keepdims=True) + ba          # (h*w, 1)
    y = y * _sigmoid(logit)

    # ---- CustomMaxAbsPool2d(2): sign-preserving 2x2 stride-2 max-|.| -------
    y = y.reshape(hp, 2, w, c)
    y = _maxabs(y[:, 0], y[:, 1])                                 # (hp, w, c)
    y = y.reshape(m2, 2, c)
    y = _maxabs(y[:, 0, :], y[:, 1, :])                           # (m2, c)

    # ---- conv2 (3x3, pad 1): de-padded K=c1 taps, value-accumulated --------
    mid_ref[...] = jnp.zeros_like(mid_ref)
    mid_ref[1:1 + hp, 1:1 + wp, :] = y[:, :c1].reshape(hp, wp, c1)
    acc = None
    for t, (dy, dx) in enumerate([(a, b) for a in range(3) for b in range(3)]):
        patch = mid_ref[dy:dy + hp, dx:dx + wp, :].reshape(m2, c1)   # (m2, c1)
        d = jnp.dot(patch, w2_ref[t], preferred_element_type=jnp.float32)
        acc = d if acc is None else acc + d
    z = jnp.maximum(acc + b2, 0.0)                                # ReLU, (m2, c)

    # ---- AdaptiveAvgPool2d((1,1)) + Linear head -----------------------------
    pooled = jnp.mean(z, axis=0, keepdims=True)                   # (1, c)
    pooled8 = jnp.broadcast_to(pooled[:, :c2], (8, c2))           # replicate rows
    res = jnp.dot(pooled8, fcw_ref[...],
                  preferred_element_type=jnp.float32) + fcb       # (8, c)
    out_ref[...] = res.reshape(1, 8, c)


# -------------------------------- JAX glue --------------------------------- #
def _prepare_params(params):
    """De-pad K dims, pad only output channel dims to 128, pack small vectors."""
    c = _C
    w1, b1 = params["conv1"]
    scale = params["conv1_scale"]
    c1, cin = w1.shape[0], w1.shape[1]
    k1 = 9 * cin
    k1p = _round_up(k1, 8)
    # (Cout,Cin,3,3) -> (ky,kx,Cin,Cout) -> (9*Cin, Cout); fold the scale in.
    w1t = (jnp.transpose(w1, (2, 3, 1, 0)) * scale).reshape(k1, c1)
    w1p = _pad_to(w1t, (k1p, c)).astype(jnp.float32)

    wa, ba = params["attn"]
    w2, b2 = params["conv2"]
    c2 = w2.shape[0]
    w2t = jnp.transpose(w2, (2, 3, 1, 0)).reshape(9, c1, c2)          # per-tap (c1,c2)
    w2p = _pad_to(w2t, (9, c1, c)).astype(jnp.float32)

    fw, fb = params["fc"]
    fwp = _pad_to(fw.T, (c2, c)).astype(jnp.float32)                  # (32, 128)

    vecs = jnp.zeros((8, c), jnp.float32)
    vecs = vecs.at[0, :c1].set(b1 * scale)        # conv1 bias (scale folded)
    vecs = vecs.at[1, :c1].set(wa.reshape(-1))    # attention 1x1 weight
    vecs = vecs.at[2, :].set(ba.reshape(-1)[0])   # attention bias (broadcast)
    vecs = vecs.at[3, :c2].set(b2)                # conv2 bias
    vecs = vecs.at[4, :fb.shape[0]].set(fb)       # fc bias
    return w1p, w2p, fwp, vecs, (cin, c1, c2, k1p)


def cnn_forward(x_nchw, params):
    n, cin, h, w = x_nchw.shape
    assert h % 2 == 0 and w % 2 == 0
    c = _C
    num_classes = params["fc"][0].shape[0]

    w1p, w2p, fwp, vecs, (cin_p, c1, c2, k1p) = _prepare_params(params)
    assert cin_p == cin

    # conv1 im2col in the wrapper (trivially cheap in XLA at this size): the
    # kernel then sees one lane/K-dense matmul and no strided patch copies.
    x = jnp.transpose(x_nchw, (0, 2, 3, 1)).astype(jnp.float32)       # NHWC
    xp = jnp.pad(x, ((0, 0), (1, 1), (1, 1), (0, 0)))
    cols = [xp[:, dy:dy + h, dx:dx + w, :] for dy in range(3) for dx in range(3)]
    x1 = jnp.concatenate(cols, axis=-1).reshape(n * h * w, 9 * cin)
    x1 = _pad_to(x1, (n * h * w, k1p))

    kern = functools.partial(_cnn_kernel, h=h, w=w, c1=c1, c2=c2)
    out = pl.pallas_call(
        kern,
        out_shape=jax.ShapeDtypeStruct((n, 8, c), jnp.float32),
        grid_spec=pltpu.PrefetchScalarGridSpec(
            num_scalar_prefetch=0,
            grid=(n,),
            in_specs=[
                pl.BlockSpec((h * w, k1p), lambda b: (b, 0)),     # im2col(x) per batch
                pl.BlockSpec((k1p, c), lambda b: (0, 0)),         # conv1 weight
                pl.BlockSpec((9, c1, c), lambda b: (0, 0, 0)),    # conv2 weight (K de-padded)
                pl.BlockSpec((c2, c), lambda b: (0, 0)),          # fc weight (K de-padded)
                pl.BlockSpec((8, c), lambda b: (0, 0)),           # packed bias/attn vectors
            ],
            out_specs=pl.BlockSpec((1, 8, c), lambda b: (b, 0, 0)),
            scratch_shapes=[
                # tiny padded pooled map for conv2 patch extraction
                pltpu.VMEM((h // 2 + 2, w // 2 + 2, c1), jnp.float32),
            ],
        ),
        compiler_params=pltpu.CompilerParams(
            dimension_semantics=("parallel",),   # batch grid -> both TCs on v7x
            vmem_limit_bytes=8 * 1024 * 1024,    # actual footprint is << 1 MiB
        ),
    )(x1, w1p, w2p, fwp, vecs)
    return out[:, 0, :num_classes]


# ----------------------------- parameter setup ----------------------------- #
def init_params(key, in_channels=1, num_classes=10):
    ks = jax.random.split(key, 8)
    return dict(
        conv1=(0.3 * jax.random.normal(ks[0], (16, in_channels, 3, 3), jnp.float32),
               0.1 * jax.random.normal(ks[1], (16,), jnp.float32)),
        conv1_scale=1.5,
        attn=(0.3 * jax.random.normal(ks[2], (1, 16, 1, 1), jnp.float32),
              0.1 * jax.random.normal(ks[3], (1,), jnp.float32)),
        conv2=(0.2 * jax.random.normal(ks[4], (32, 16, 3, 3), jnp.float32),
               0.1 * jax.random.normal(ks[5], (32,), jnp.float32)),
        fc=(0.2 * jax.random.normal(ks[6], (num_classes, 32), jnp.float32),
            0.1 * jax.random.normal(ks[7], (num_classes,), jnp.float32)),
    )


if __name__ == "__main__":
    key = jax.random.PRNGKey(0)
    pkey, xkey = jax.random.split(key)
    params = init_params(pkey, in_channels=1, num_classes=10)
    x = jax.random.normal(xkey, (2, 1, 16, 16), jnp.float32)   # NCHW like PyTorch

    fwd = jax.jit(lambda inp: cnn_forward(inp, params))
    out = fwd(x)
    jax.block_until_ready(out)
    assert out.shape == (2, 10), out.shape
    assert bool(jnp.all(jnp.isfinite(out)))
    print("KERNEL_OK")
</pallas_src>

<mosaic_0001>
module attributes {stable_mosaic.version = 11 : i64} {
  func.func @_cnn_kernel(%arg0: i32, %arg1: memref<256x16xf32, #tpu.memory_space<vmem>>, %arg2: memref<16x128xf32, #tpu.memory_space<vmem>>, %arg3: memref<9x16x128xf32, #tpu.memory_space<vmem>>, %arg4: memref<32x128xf32, #tpu.memory_space<vmem>>, %arg5: memref<8x128xf32, #tpu.memory_space<vmem>>, %arg6: memref<1x8x128xf32, #tpu.memory_space<vmem>>, %arg7: memref<10x10x16xf32, #tpu.memory_space<vmem>>) attributes {dimension_semantics = [#tpu.dimension_semantics<parallel>], iteration_bounds = array<i64: 2>, scalar_prefetch = 0 : i64, scratch_operands = 1 : i64, tpu.core_type = #tpu.core_type<tc>, window_params = [{transform_indices = @transform_0, window_bounds = array<i64: 256, 16>}, {pipeline_mode = #tpu.pipeline_mode<synchronous>, transform_indices = @transform_1, window_bounds = array<i64: 16, 128>}, {pipeline_mode = #tpu.pipeline_mode<synchronous>, transform_indices = @transform_2, window_bounds = array<i64: 9, 16, 128>}, {pipeline_mode = #tpu.pipeline_mode<synchronous>, transform_indices = @transform_3, window_bounds = array<i64: 32, 128>}, {pipeline_mode = #tpu.pipeline_mode<synchronous>, transform_indices = @transform_4, window_bounds = array<i64: 8, 128>}, {transform_indices = @transform_5, window_bounds = array<i64: 1, 8, 128>}]} {
    %c0 = arith.constant 0 : index
    %c0_0 = arith.constant 0 : index
    %0 = vector.load %arg5[%c0, %c0_0] : memref<8x128xf32, #tpu.memory_space<vmem>>, vector<1x128xf32>
    %c1 = arith.constant 1 : index
    %c0_1 = arith.constant 0 : index
    %1 = vector.load %arg5[%c1, %c0_1] : memref<8x128xf32, #tpu.memory_space<vmem>>, vector<1x128xf32>
    %c2 = arith.constant 2 : index
    %c0_2 = arith.constant 0 : index
    %2 = vector.load %arg5[%c2, %c0_2] : memref<8x128xf32, #tpu.memory_space<vmem>>, vector<1x1xf32>
    %c3 = arith.constant 3 : index
    %c0_3 = arith.constant 0 : index
    %3 = vector.load %arg5[%c3, %c0_3] : memref<8x128xf32, #tpu.memory_space<vmem>>, vector<1x128xf32>
    %c4 = arith.constant 4 : index
    %c0_4 = arith.constant 0 : index
    %4 = vector.load %arg5[%c4, %c0_4] : memref<8x128xf32, #tpu.memory_space<vmem>>, vector<1x128xf32>
    %c0_5 = arith.constant 0 : index
    %c0_6 = arith.constant 0 : index
    %5 = vector.load %arg1[%c0_5, %c0_6] : memref<256x16xf32, #tpu.memory_space<vmem>>, vector<256x16xf32>
    %c0_7 = arith.constant 0 : index
    %c0_8 = arith.constant 0 : index
    %6 = vector.load %arg2[%c0_7, %c0_8] : memref<16x128xf32, #tpu.memory_space<vmem>>, vector<16x128xf32>
    %cst = arith.constant dense<0.000000e+00> : vector<256x128xf32>
    %7 = tpu.matmul %5, %6, %cst {dimension_numbers = #tpu.dot_dimension_numbers<[1], [0], [0], [1], [0, 0, 1, 1], [], []>} : vector<256x16xf32>, vector<16x128xf32>, vector<256x128xf32> -> vector<256x128xf32>
    %8 = vector.broadcast %0 : vector<1x128xf32> to vector<256x128xf32>
    %9 = arith.addf %7, %8 : vector<256x128xf32>
    %cst_9 = arith.constant 0.000000e+00 : f32
    %10 = vector.broadcast %cst_9 : f32 to vector<256x128xf32>
    %11 = arith.subf %10, %9 : vector<256x128xf32>
    %12 = math.exp %11 : vector<256x128xf32>
    %cst_10 = arith.constant 1.000000e+00 : f32
    %13 = vector.broadcast %cst_10 : f32 to vector<256x128xf32>
    %14 = arith.addf %13, %12 : vector<256x128xf32>
    %15 = tpu.reciprocal %14 {approx = true} : vector<256x128xf32> -> vector<256x128xf32>
    %16 = arith.mulf %9, %15 : vector<256x128xf32>
    %17 = vector.broadcast %1 : vector<1x128xf32> to vector<256x128xf32>
    %18 = arith.mulf %16, %17 : vector<256x128xf32>
    %cst_11 = arith.constant dense<0.000000e+00> : vector<256xf32>
    %19 = vector.multi_reduction <add>, %18, %cst_11 [1] : vector<256x128xf32> to vector<256xf32>
    %20 = vector.shape_cast %19 : vector<256xf32> to vector<256x1xf32>
    %21 = vector.broadcast %2 : vector<1x1xf32> to vector<256x1xf32>
    %22 = arith.addf %20, %21 : vector<256x1xf32>
    %cst_12 = arith.constant 0.000000e+00 : f32
    %23 = vector.broadcast %cst_12 : f32 to vector<256x1xf32>
    %24 = arith.subf %23, %22 : vector<256x1xf32>
    %25 = math.exp %24 : vector<256x1xf32>
    %cst_13 = arith.constant 1.000000e+00 : f32
    %26 = vector.broadcast %cst_13 : f32 to vector<256x1xf32>
    %27 = arith.addf %26, %25 : vector<256x1xf32>
    %28 = tpu.reciprocal %27 {approx = true} : vector<256x1xf32> -> vector<256x1xf32>
    %29 = vector.broadcast %28 : vector<256x1xf32> to vector<256x128xf32>
    %30 = arith.mulf %16, %29 : vector<256x128xf32>
    %31 = vector.shape_cast %30 : vector<256x128xf32> to vector<8x2x16x128xf32>
    %32 = vector.extract_strided_slice %31 {offsets = [0, 0, 0, 0], sizes = [8, 1, 16, 128], strides = [1, 1, 1, 1]} : vector<8x2x16x128xf32> to vector<8x1x16x128xf32>
    %33 = vector.shape_cast %32 : vector<8x1x16x128xf32> to vector<8x16x128xf32>
    %34 = vector.extract_strided_slice %31 {offsets = [0, 1, 0, 0], sizes = [8, 1, 16, 128], strides = [1, 1, 1, 1]} : vector<8x2x16x128xf32> to vector<8x1x16x128xf32>
    %35 = vector.shape_cast %34 : vector<8x1x16x128xf32> to vector<8x16x128xf32>
    %36 = math.absf %33 : vector<8x16x128xf32>
    %37 = math.absf %35 : vector<8x16x128xf32>
    %38 = arith.cmpf oge, %36, %37 : vector<8x16x128xf32>
    %39 = arith.select %38, %33, %35 : vector<8x16x128xi1>, vector<8x16x128xf32>
    %40 = vector.shape_cast %39 : vector<8x16x128xf32> to vector<64x2x128xf32>
    %41 = vector.extract_strided_slice %40 {offsets = [0, 0, 0], sizes = [64, 1, 128], strides = [1, 1, 1]} : vector<64x2x128xf32> to vector<64x1x128xf32>
    %42 = vector.shape_cast %41 : vector<64x1x128xf32> to vector<64x128xf32>
    %43 = vector.extract_strided_slice %40 {offsets = [0, 1, 0], sizes = [64, 1, 128], strides = [1, 1, 1]} : vector<64x2x128xf32> to vector<64x1x128xf32>
    %44 = vector.shape_cast %43 : vector<64x1x128xf32> to vector<64x128xf32>
    %45 = math.absf %42 : vector<64x128xf32>
    %46 = math.absf %44 : vector<64x128xf32>
    %47 = arith.cmpf oge, %45, %46 : vector<64x128xf32>
    %48 = arith.select %47, %42, %44 : vector<64x128xi1>, vector<64x128xf32>
    %cst_14 = arith.constant 0.000000e+00 : f32
    %49 = vector.broadcast %cst_14 : f32 to vector<10x10x16xf32>
    %c0_15 = arith.constant 0 : index
    %c0_16 = arith.constant 0 : index
    %c0_17 = arith.constant 0 : index
    %50 = vector.load %arg7[%c0_15, %c0_16, %c0_17] : memref<10x10x16xf32, #tpu.memory_space<vmem>>, vector<10x10x16xf32>
    tpu.vector_store %arg7[%c0_15, %c0_16, %c0_17], %49 {strides = array<i32>} : memref<10x10x16xf32, #tpu.memory_space<vmem>>, vector<10x10x16xf32>,
    %51 = vector.extract_strided_slice %48 {offsets = [0, 0], sizes = [64, 16], strides = [1, 1]} : vector<64x128xf32> to vector<64x16xf32>
    %52 = vector.shape_cast %51 : vector<64x16xf32> to vector<8x8x16xf32>
    %c1_18 = arith.constant 1 : index
    %c1_19 = arith.constant 1 : index
    %c0_20 = arith.constant 0 : index
    %53 = vector.load %arg7[%c1_18, %c1_19, %c0_20] : memref<10x10x16xf32, #tpu.memory_space<vmem>>, vector<8x8x16xf32>
    tpu.vector_store %arg7[%c1_18, %c1_19, %c0_20], %52 {strides = array<i32>} : memref<10x10x16xf32, #tpu.memory_space<vmem>>, vector<8x8x16xf32>,
    %c0_21 = arith.constant 0 : index
    %c0_22 = arith.constant 0 : index
    %c0_23 = arith.constant 0 : index
    %54 = vector.load %arg7[%c0_21, %c0_22, %c0_23] : memref<10x10x16xf32, #tpu.memory_space<vmem>>, vector<8x8x16xf32>
    %55 = vector.shape_cast %54 : vector<8x8x16xf32> to vector<64x16xf32>
    %c0_24 = arith.constant 0 : index
    %c0_25 = arith.constant 0 : index
    %c0_26 = arith.constant 0 : index
    %56 = vector.load %arg3[%c0_24, %c0_25, %c0_26] : memref<9x16x128xf32, #tpu.memory_space<vmem>>, vector<1x16x128xf32>
    %57 = vector.shape_cast %56 : vector<1x16x128xf32> to vector<16x128xf32>
    %cst_27 = arith.constant dense<0.000000e+00> : vector<64x128xf32>
    %58 = tpu.matmul %55, %57, %cst_27 {dimension_numbers = #tpu.dot_dimension_numbers<[1], [0], [0], [1], [0, 0, 1, 1], [], []>} : vector<64x16xf32>, vector<16x128xf32>, vector<64x128xf32> -> vector<64x128xf32>
    %c0_28 = arith.constant 0 : index
    %c1_29 = arith.constant 1 : index
    %c0_30 = arith.constant 0 : index
    %59 = vector.load %arg7[%c0_28, %c1_29, %c0_30] : memref<10x10x16xf32, #tpu.memory_space<vmem>>, vector<8x8x16xf32>
    %60 = vector.shape_cast %59 : vector<8x8x16xf32> to vector<64x16xf32>
    %c1_31 = arith.constant 1 : index
    %c0_32 = arith.constant 0 : index
    %c0_33 = arith.constant 0 : index
    %61 = vector.load %arg3[%c1_31, %c0_32, %c0_33] : memref<9x16x128xf32, #tpu.memory_space<vmem>>, vector<1x16x128xf32>
    %62 = vector.shape_cast %61 : vector<1x16x128xf32> to vector<16x128xf32>
    %cst_34 = arith.constant dense<0.000000e+00> : vector<64x128xf32>
    %63 = tpu.matmul %60, %62, %cst_34 {dimension_numbers = #tpu.dot_dimension_numbers<[1], [0], [0], [1], [0, 0, 1, 1], [], []>} : vector<64x16xf32>, vector<16x128xf32>, vector<64x128xf32> -> vector<64x128xf32>
    %64 = arith.addf %58, %63 : vector<64x128xf32>
    %c0_35 = arith.constant 0 : index
    %c2_36 = arith.constant 2 : index
    %c0_37 = arith.constant 0 : index
    %65 = vector.load %arg7[%c0_35, %c2_36, %c0_37] : memref<10x10x16xf32, #tpu.memory_space<vmem>>, vector<8x8x16xf32>
    %66 = vector.shape_cast %65 : vector<8x8x16xf32> to vector<64x16xf32>
    %c2_38 = arith.constant 2 : index
    %c0_39 = arith.constant 0 : index
    %c0_40 = arith.constant 0 : index
    %67 = vector.load %arg3[%c2_38, %c0_39, %c0_40] : memref<9x16x128xf32, #tpu.memory_space<vmem>>, vector<1x16x128xf32>
    %68 = vector.shape_cast %67 : vector<1x16x128xf32> to vector<16x128xf32>
    %cst_41 = arith.constant dense<0.000000e+00> : vector<64x128xf32>
    %69 = tpu.matmul %66, %68, %cst_41 {dimension_numbers = #tpu.dot_dimension_numbers<[1], [0], [0], [1], [0, 0, 1, 1], [], []>} : vector<64x16xf32>, vector<16x128xf32>, vector<64x128xf32> -> vector<64x128xf32>
    %70 = arith.addf %64, %69 : vector<64x128xf32>
    %c1_42 = arith.constant 1 : index
    %c0_43 = arith.constant 0 : index
    %c0_44 = arith.constant 0 : index
    %71 = vector.load %arg7[%c1_42, %c0_43, %c0_44] : memref<10x10x16xf32, #tpu.memory_space<vmem>>, vector<8x8x16xf32>
    %72 = vector.shape_cast %71 : vector<8x8x16xf32> to vector<64x16xf32>
    %c3_45 = arith.constant 3 : index
    %c0_46 = arith.constant 0 : index
    %c0_47 = arith.constant 0 : index
    %73 = vector.load %arg3[%c3_45, %c0_46, %c0_47] : memref<9x16x128xf32, #tpu.memory_space<vmem>>, vector<1x16x128xf32>
    %74 = vector.shape_cast %73 : vector<1x16x128xf32> to vector<16x128xf32>
    %cst_48 = arith.constant dense<0.000000e+00> : vector<64x128xf32>
    %75 = tpu.matmul %72, %74, %cst_48 {dimension_numbers = #tpu.dot_dimension_numbers<[1], [0], [0], [1], [0, 0, 1, 1], [], []>} : vector<64x16xf32>, vector<16x128xf32>, vector<64x128xf32> -> vector<64x128xf32>
    %76 = arith.addf %70, %75 : vector<64x128xf32>
    %c1_49 = arith.constant 1 : index
    %c1_50 = arith.constant 1 : index
    %c0_51 = arith.constant 0 : index
    %77 = vector.load %arg7[%c1_49, %c1_50, %c0_51] : memref<10x10x16xf32, #tpu.memory_space<vmem>>, vector<8x8x16xf32>
    %78 = vector.shape_cast %77 : vector<8x8x16xf32> to vector<64x16xf32>
    %c4_52 = arith.constant 4 : index
    %c0_53 = arith.constant 0 : index
    %c0_54 = arith.constant 0 : index
    %79 = vector.load %arg3[%c4_52, %c0_53, %c0_54] : memref<9x16x128xf32, #tpu.memory_space<vmem>>, vector<1x16x128xf32>
    %80 = vector.shape_cast %79 : vector<1x16x128xf32> to vector<16x128xf32>
    %cst_55 = arith.constant dense<0.000000e+00> : vector<64x128xf32>
    %81 = tpu.matmul %78, %80, %cst_55 {dimension_numbers = #tpu.dot_dimension_numbers<[1], [0], [0], [1], [0, 0, 1, 1], [], []>} : vector<64x16xf32>, vector<16x128xf32>, vector<64x128xf32> -> vector<64x128xf32>
    %82 = arith.addf %76, %81 : vector<64x128xf32>
    %c1_56 = arith.constant 1 : index
    %c2_57 = arith.constant 2 : index
    %c0_58 = arith.constant 0 : index
    %83 = vector.load %arg7[%c1_56, %c2_57, %c0_58] : memref<10x10x16xf32, #tpu.memory_space<vmem>>, vector<8x8x16xf32>
    %84 = vector.shape_cast %83 : vector<8x8x16xf32> to vector<64x16xf32>
    %c5 = arith.constant 5 : index
    %c0_59 = arith.constant 0 : index
    %c0_60 = arith.constant 0 : index
    %85 = vector.load %arg3[%c5, %c0_59, %c0_60] : memref<9x16x128xf32, #tpu.memory_space<vmem>>, vector<1x16x128xf32>
    %86 = vector.shape_cast %85 : vector<1x16x128xf32> to vector<16x128xf32>
    %cst_61 = arith.constant dense<0.000000e+00> : vector<64x128xf32>
    %87 = tpu.matmul %84, %86, %cst_61 {dimension_numbers = #tpu.dot_dimension_numbers<[1], [0], [0], [1], [0, 0, 1, 1], [], []>} : vector<64x16xf32>, vector<16x128xf32>, vector<64x128xf32> -> vector<64x128xf32>
    %88 = arith.addf %82, %87 : vector<64x128xf32>
    %c2_62 = arith.constant 2 : index
    %c0_63 = arith.constant 0 : index
    %c0_64 = arith.constant 0 : index
    %89 = vector.load %arg7[%c2_62, %c0_63, %c0_64] : memref<10x10x16xf32, #tpu.memory_space<vmem>>, vector<8x8x16xf32>
    %90 = vector.shape_cast %89 : vector<8x8x16xf32> to vector<64x16xf32>
    %c6 = arith.constant 6 : index
    %c0_65 = arith.constant 0 : index
    %c0_66 = arith.constant 0 : index
    %91 = vector.load %arg3[%c6, %c0_65, %c0_66] : memref<9x16x128xf32, #tpu.memory_space<vmem>>, vector<1x16x128xf32>
    %92 = vector.shape_cast %91 : vector<1x16x128xf32> to vector<16x128xf32>
    %cst_67 = arith.constant dense<0.000000e+00> : vector<64x128xf32>
    %93 = tpu.matmul %90, %92, %cst_67 {dimension_numbers = #tpu.dot_dimension_numbers<[1], [0], [0], [1], [0, 0, 1, 1], [], []>} : vector<64x16xf32>, vector<16x128xf32>, vector<64x128xf32> -> vector<64x128xf32>
    %94 = arith.addf %88, %93 : vector<64x128xf32>
    %c2_68 = arith.constant 2 : index
    %c1_69 = arith.constant 1 : index
    %c0_70 = arith.constant 0 : index
    %95 = vector.load %arg7[%c2_68, %c1_69, %c0_70] : memref<10x10x16xf32, #tpu.memory_space<vmem>>, vector<8x8x16xf32>
    %96 = vector.shape_cast %95 : vector<8x8x16xf32> to vector<64x16xf32>
    %c7 = arith.constant 7 : index
    %c0_71 = arith.constant 0 : index
    %c0_72 = arith.constant 0 : index
    %97 = vector.load %arg3[%c7, %c0_71, %c0_72] : memref<9x16x128xf32, #tpu.memory_space<vmem>>, vector<1x16x128xf32>
    %98 = vector.shape_cast %97 : vector<1x16x128xf32> to vector<16x128xf32>
    %cst_73 = arith.constant dense<0.000000e+00> : vector<64x128xf32>
    %99 = tpu.matmul %96, %98, %cst_73 {dimension_numbers = #tpu.dot_dimension_numbers<[1], [0], [0], [1], [0, 0, 1, 1], [], []>} : vector<64x16xf32>, vector<16x128xf32>, vector<64x128xf32> -> vector<64x128xf32>
    %100 = arith.addf %94, %99 : vector<64x128xf32>
    %c2_74 = arith.constant 2 : index
    %c2_75 = arith.constant 2 : index
    %c0_76 = arith.constant 0 : index
    %101 = vector.load %arg7[%c2_74, %c2_75, %c0_76] : memref<10x10x16xf32, #tpu.memory_space<vmem>>, vector<8x8x16xf32>
    %102 = vector.shape_cast %101 : vector<8x8x16xf32> to vector<64x16xf32>
    %c8 = arith.constant 8 : index
    %c0_77 = arith.constant 0 : index
    %c0_78 = arith.constant 0 : index
    %103 = vector.load %arg3[%c8, %c0_77, %c0_78] : memref<9x16x128xf32, #tpu.memory_space<vmem>>, vector<1x16x128xf32>
    %104 = vector.shape_cast %103 : vector<1x16x128xf32> to vector<16x128xf32>
    %cst_79 = arith.constant dense<0.000000e+00> : vector<64x128xf32>
    %105 = tpu.matmul %102, %104, %cst_79 {dimension_numbers = #tpu.dot_dimension_numbers<[1], [0], [0], [1], [0, 0, 1, 1], [], []>} : vector<64x16xf32>, vector<16x128xf32>, vector<64x128xf32> -> vector<64x128xf32>
    %106 = arith.addf %100, %105 : vector<64x128xf32>
    %107 = vector.broadcast %3 : vector<1x128xf32> to vector<64x128xf32>
    %108 = arith.addf %106, %107 : vector<64x128xf32>
    %cst_80 = arith.constant 0.000000e+00 : f32
    %109 = vector.broadcast %cst_80 : f32 to vector<64x128xf32>
    %110 = arith.maximumf %108, %109 : vector<64x128xf32>
    %cst_81 = arith.constant dense<0.000000e+00> : vector<128xf32>
    %111 = vector.multi_reduction <add>, %110, %cst_81 [0] : vector<64x128xf32> to vector<128xf32>
    %112 = vector.shape_cast %111 : vector<128xf32> to vector<1x128xf32>
    %cst_82 = arith.constant 6.400000e+01 : f32
    %113 = vector.broadcast %cst_82 : f32 to vector<1x128xf32>
    %114 = arith.divf %112, %113 : vector<1x128xf32>
    %115 = vector.extract_strided_slice %114 {offsets = [0, 0], sizes = [1, 32], strides = [1, 1]} : vector<1x128xf32> to vector<1x32xf32>
    %116 = vector.shape_cast %115 : vector<1x32xf32> to vector<1x32xf32>
    %117 = vector.broadcast %116 : vector<1x32xf32> to vector<8x32xf32>
    %c0_83 = arith.constant 0 : index
    %c0_84 = arith.constant 0 : index
    %118 = vector.load %arg4[%c0_83, %c0_84] : memref<32x128xf32, #tpu.memory_space<vmem>>, vector<32x128xf32>
    %cst_85 = arith.constant dense<0.000000e+00> : vector<8x128xf32>
    %119 = tpu.matmul %117, %118, %cst_85 {dimension_numbers = #tpu.dot_dimension_numbers<[1], [0], [0], [1], [0, 0, 1, 1], [], []>} : vector<8x32xf32>, vector<32x128xf32>, vector<8x128xf32> -> vector<8x128xf32>
    %120 = vector.broadcast %4 : vector<1x128xf32> to vector<8x128xf32>
    %121 = arith.addf %119, %120 : vector<8x128xf32>
    %122 = vector.shape_cast %121 : vector<8x128xf32> to vector<1x8x128xf32>
    %c0_86 = arith.constant 0 : index
    %c0_87 = arith.constant 0 : index
    %c0_88 = arith.constant 0 : index
    %123 = vector.load %arg6[%c0_86, %c0_87, %c0_88] : memref<1x8x128xf32, #tpu.memory_space<vmem>>, vector<1x8x128xf32>
    tpu.vector_store %arg6[%c0_86, %c0_87, %c0_88], %122 {strides = array<i32>} : memref<1x8x128xf32, #tpu.memory_space<vmem>>, vector<1x8x128xf32>,
    return
  }
  func.func @transform_0(%arg0: i32) -> (i32, i32) {
    %c0_i32 = arith.constant 0 : i32
    %c0_i32_0 = arith.constant 0 : i32
    return %arg0, %c0_i32 : i32, i32
  }
  func.func @transform_1(%arg0: i32) -> (i32, i32) {
    %c0_i32 = arith.constant 0 : i32
    %c0_i32_0 = arith.constant 0 : i32
    %c0_i32_1 = arith.constant 0 : i32
    return %c0_i32, %c0_i32_0 : i32, i32
  }
  func.func @transform_2(%arg0: i32) -> (i32, i32, i32) {
    %c0_i32 = arith.constant 0 : i32
    %c0_i32_0 = arith.constant 0 : i32
    %c0_i32_1 = arith.constant 0 : i32
    %c0_i32_2 = arith.constant 0 : i32
    return %c0_i32, %c0_i32_0, %c0_i32_1 : i32, i32, i32
  }
  func.func @transform_3(%arg0: i32) -> (i32, i32) {
    %c0_i32 = arith.constant 0 : i32
    %c0_i32_0 = arith.constant 0 : i32
    %c0_i32_1 = arith.constant 0 : i32
    return %c0_i32, %c0_i32_0 : i32, i32
  }
  func.func @transform_4(%arg0: i32) -> (i32, i32) {
    %c0_i32 = arith.constant 0 : i32
    %c0_i32_0 = arith.constant 0 : i32
    %c0_i32_1 = arith.constant 0 : i32
    return %c0_i32, %c0_i32_0 : i32, i32
  }
  func.func @transform_5(%arg0: i32) -> (i32, i32, i32) {
    %c0_i32 = arith.constant 0 : i32
    %c0_i32_0 = arith.constant 0 : i32
    %c0_i32_1 = arith.constant 0 : i32
    return %arg0, %c0_i32, %c0_i32_0 : i32, i32, i32
  }
}

</mosaic_0001>

<llo_original>
// kernel: _lambda_.1
$region0: #{_lambda_.1}
  #allocation0 [shape = 'u32[]', space=smem, size = 0x4, offset = 0x4, fixed_abs, tag = 'smem constant byte address 0x4 - core index']
  #allocation1 [shape = 'u32[144,128]{1,0:T(1,128)}', space=vmem, size = 0x12000, scoped, tag = 'internal scratch']
  #allocation2 [shape = 'f32[10,10,16]{2,1,0:T(8,128)}', space=vmem, size = 0x14000, scoped, tag = 'scratch operand']
  %s0 = inlined_call_operand.vmem [shape: f32[512,16], index: 0, kind: input, shape index: {}]
  %s1 = inlined_call_operand.vmem [shape: f32[16,128], index: 1, kind: input, shape index: {}]
  %s2 = inlined_call_operand.vmem [shape: f32[9,16,128], index: 2, kind: input, shape index: {}]
  %s3 = inlined_call_operand.vmem [shape: f32[32,128], index: 3, kind: input, shape index: {}]
  %s4 = inlined_call_operand.vmem [shape: f32[8,128], index: 4, kind: input, shape index: {}]
  %s5 = inlined_call_operand.vmem [shape: f32[2,8,128], index: 5, kind: output, shape index: {}]
  %s6 = sld [smem:[#allocation0]]
  $region53: #{_lambda_.1} parent=0
    _
  %s8 = ssub.s32 1, %s6
  %s9 = scalar_select 0, %s8, %s6
  loop: start=0, step=1, limit=4
  $region2: #{_lambda_.1} parent=0 // loop_pre_header
    _
  $region3: #{_lambda_.1} parent=0 // loop_header
    %s11 = sphi 0, %s15
    %p12 = scmp.ge.s32.totalorder %s11, 4
    %s21 = sphi 0, %s23
    %s24 = sphi 0, %s21
    %s25 = sphi 0, %s24
    %s41 = sphi 0, %s25
    %s45 = sphi 0, %s45
    %s47 = sphi 0, %s45
    %s48 = sphi 0, %s47
    %s62 = sphi 0, %s48
    %s66 = sphi 0, %s66
    %s68 = sphi 0, %s66
    %s69 = sphi 0, %s68
    %s83 = sphi 0, %s69
    %s87 = sphi 0, %s87
    %s89 = sphi 0, %s87
    %s90 = sphi 0, %s89
    %s104 = sphi 0, %s90
    %s108 = sphi 0, %s108
    %s110 = sphi 0, %s108
    %s111 = sphi 0, %s110
    %s125 = sphi 0, %s111
    %s131 = sphi 0, %s133
    %s134 = sphi 0, %s131
    %s135 = sphi 0, %s134
    %s151 = sphi 0, %s135
  $region4: #{_lambda_.1} parent=0 // loop_header_branch
    %14 = sbr.rel (%p12) target = $region8
  $region5: #{_lambda_.1} parent=0 // loop_body
    %s16 = ssub.s32 %s11, 1
    %s17 = ssub.s32 %s11, 2
    %s18 = sadd.s32 %s11, 1
    %s19 = ssub.s32 %s11, %s18
    %p20 = scmp.eq.s32.totalorder %s19, 0
    %s22 = sadd.s32 %s21, 1
    %s23 = scalar_select %p20, %s21, %s22
    %p26 = pneg %p20
    %p27 = scmp.eq.s32.totalorder %s11, 1
    %p28 = por %p26, %p27
    %p29 = scmp.ne.s32.totalorder %s21, %s24
    %p30 = scmp.eq.s32.totalorder %s11, 0
    %p31 = por %p29, %p30
    %p32 = scmp.ne.s32.totalorder %s21, %s24
    %p33 = scmp.eq.s32.totalorder %s16, 1
    %p34 = por %p32, %p33
    %p35 = scmp.ne.s32.totalorder %s24, %s25
    %p36 = scmp.eq.s32.totalorder %s16, 0
    %p37 = por %p35, %p36
    %p38 = scmp.ne.s32.totalorder %s24, %s25
    %p39 = scmp.eq.s32.totalorder %s17, 1
    %p40 = por %p38, %p39
    %p42 = scmp.ne.s32.totalorder %s25, %s41
    %p43 = scmp.eq.s32.totalorder %s17, 0
    %p44 = por %p42, %p43
    %s46 = sadd.s32 %s45, 1
    %p49 = scmp.eq.s32.totalorder %s11, 1
    %p50 = scmp.ne.s32.totalorder %s45, %s47
    %p51 = scmp.eq.s32.totalorder %s11, 0
    %p52 = por %p50, %p51
    %p53 = scmp.ne.s32.totalorder %s45, %s47
    %p54 = scmp.eq.s32.totalorder %s16, 1
    %p55 = por %p53, %p54
    %p56 = scmp.ne.s32.totalorder %s47, %s48
    %p57 = scmp.eq.s32.totalorder %s16, 0
    %p58 = por %p56, %p57
    %p59 = scmp.ne.s32.totalorder %s47, %s48
    %p60 = scmp.eq.s32.totalorder %s17, 1
    %p61 = por %p59, %p60
    %p63 = scmp.ne.s32.totalorder %s48, %s62
    %p64 = scmp.eq.s32.totalorder %s17, 0
    %p65 = por %p63, %p64
    %s67 = sadd.s32 %s66, 1
    %p70 = scmp.eq.s32.totalorder %s11, 1
    %p71 = scmp.ne.s32.totalorder %s66, %s68
    %p72 = scmp.eq.s32.totalorder %s11, 0
    %p73 = por %p71, %p72
    %p74 = scmp.ne.s32.totalorder %s66, %s68
    %p75 = scmp.eq.s32.totalorder %s16, 1
    %p76 = por %p74, %p75
    %p77 = scmp.ne.s32.totalorder %s68, %s69
    %p78 = scmp.eq.s32.totalorder %s16, 0
    %p79 = por %p77, %p78
    %p80 = scmp.ne.s32.totalorder %s68, %s69
    %p81 = scmp.eq.s32.totalorder %s17, 1
    %p82 = por %p80, %p81
    %p84 = scmp.ne.s32.totalorder %s69, %s83
    %p85 = scmp.eq.s32.totalorder %s17, 0
    %p86 = por %p84, %p85
    %s88 = sadd.s32 %s87, 1
    %p91 = scmp.eq.s32.totalorder %s11, 1
    %p92 = scmp.ne.s32.totalorder %s87, %s89
    %p93 = scmp.eq.s32.totalorder %s11, 0
    %p94 = por %p92, %p93
    %p95 = scmp.ne.s32.totalorder %s87, %s89
    %p96 = scmp.eq.s32.totalorder %s16, 1
    %p97 = por %p95, %p96
    %p98 = scmp.ne.s32.totalorder %s89, %s90
    %p99 = scmp.eq.s32.totalorder %s16, 0
    %p100 = por %p98, %p99
    %p101 = scmp.ne.s32.totalorder %s89, %s90
    %p102 = scmp.eq.s32.totalorder %s17, 1
    %p103 = por %p101, %p102
    %p105 = scmp.ne.s32.totalorder %s90, %s104
    %p106 = scmp.eq.s32.totalorder %s17, 0
    %p107 = por %p105, %p106
    %s109 = sadd.s32 %s108, 1
    %p112 = scmp.eq.s32.totalorder %s11, 1
    %p113 = scmp.ne.s32.totalorder %s108, %s110
    %p114 = scmp.eq.s32.totalorder %s11, 0
    %p115 = por %p113, %p114
    %p116 = scmp.ne.s32.totalorder %s108, %s110
    %p117 = scmp.eq.s32.totalorder %s16, 1
    %p118 = por %p116, %p117
    %p119 = scmp.ne.s32.totalorder %s110, %s111
    %p120 = scmp.eq.s32.totalorder %s16, 0
    %p121 = por %p119, %p120
    %p122 = scmp.ne.s32.totalorder %s110, %s111
    %p123 = scmp.eq.s32.totalorder %s17, 1
    %p124 = por %p122, %p123
    %p126 = scmp.ne.s32.totalorder %s111, %s125
    %p127 = scmp.eq.s32.totalorder %s17, 0
    %p128 = por %p126, %p127
    %s129 = ssub.s32 %s11, %s18
    %p130 = scmp.eq.s32.totalorder %s129, 0
    %s132 = sadd.s32 %s131, 1
    %s133 = scalar_select %p130, %s131, %s132
    %p136 = pneg %p130
    %p137 = scmp.eq.s32.totalorder %s11, 1
    %p138 = por %p136, %p137
    %p139 = scmp.ne.s32.totalorder %s131, %s134
    %p140 = scmp.eq.s32.totalorder %s11, 0
    %p141 = por %p139, %p140
    %p142 = scmp.ne.s32.totalorder %s131, %s134
    %p143 = scmp.eq.s32.totalorder %s16, 1
    %p144 = por %p142, %p143
    %p145 = scmp.ne.s32.totalorder %s134, %s135
    %p146 = scmp.eq.s32.totalorder %s16, 0
    %p147 = por %p145, %p146
    %p148 = scmp.ne.s32.totalorder %s134, %s135
    %p149 = scmp.eq.s32.totalorder %s17, 1
    %p150 = por %p148, %p149
    %p152 = scmp.ne.s32.totalorder %s135, %s151
    %p153 = scmp.eq.s32.totalorder %s17, 0
    %p154 = por %p152, %p153
    %p155 = scmp.le.s32.totalorder 1, %s11
    %p156 = scmp.lt.s32.totalorder %s11, 3
    %p157 = pnand %p155, %p156
    %p158 = pneg %p157
    // Predicated region
    $region9: #{_lambda_.1} parent=5 // pred_check
      _
    $region10: #{_lambda_.1} parent=5 // pred_check_branch
      %160 = sbr.rel (%p157) target = $region12
    $region11: #{_lambda_.1} parent=5 // pred_region
      %s161 = ssub.s32 %s11, 1
      // Predicated region
      $region13: #{_lambda_.1} parent=11 // pred_check
        %p162 = pneg %p58
      $region14: #{_lambda_.1} parent=11 // pred_check_branch
        %164 = sbr.rel (%p162) target = $region16
      $region15: #{_lambda_.1} parent=11 // pred_region
        _
      $region16: #{_lambda_.1} parent=11 // pred_fallthru
        _
      // Predicated region
      $region17: #{_lambda_.1} parent=11 // pred_check
        %p165 = pneg %p79
      $region18: #{_lambda_.1} parent=11 // pred_check_branch
        %167 = sbr.rel (%p165) target = $region20
      $region19: #{_lambda_.1} parent=11 // pred_region
        _
      $region20: #{_lambda_.1} parent=11 // pred_fallthru
        _
      // Predicated region
      $region21: #{_lambda_.1} parent=11 // pred_check
        %p168 = pneg %p100
      $region22: #{_lambda_.1} parent=11 // pred_check_branch
        %170 = sbr.rel (%p168) target = $region24
      $region23: #{_lambda_.1} parent=11 // pred_region
        _
      $region24: #{_lambda_.1} parent=11 // pred_fallthru
        _
      // Predicated region
      $region25: #{_lambda_.1} parent=11 // pred_check
        %p171 = pneg %p121
      $region26: #{_lambda_.1} parent=11 // pred_check_branch
        %173 = sbr.rel (%p171) target = $region28
      $region27: #{_lambda_.1} parent=11 // pred_region
        _
      $region28: #{_lambda_.1} parent=11 // pred_fallthru
        _
    $region12: #{_lambda_.1} parent=5 // pred_fallthru
      _
    %p174 = scmp.lt.s32.totalorder %s11, 2
    // Predicated region
    $region29: #{_lambda_.1} parent=5 // pred_check
      %p175 = pneg %p174
    $region30: #{_lambda_.1} parent=5 // pred_check_branch
      %177 = sbr.rel (%p175) target = $region32
    $region31: #{_lambda_.1} parent=5 // pred_region
      // Predicated region
      $region33: #{_lambda_.1} parent=31 // pred_check
        %p178 = pneg %p31
      $region34: #{_lambda_.1} parent=31 // pred_check_branch
        %180 = sbr.rel (%p178) target = $region36
      $region35: #{_lambda_.1} parent=31 // pred_region
        %s181 = smul.u32 32, %s11
        %p182 = scmp.lt.s32.totalorder %s181, 63
        %s183 = scalar_select %p182, %s181, 63
        %s184 = smul.addr %s183, 8
        %s185 = scalar_lea.vmem %s0, %s184
        %s186 = smul.u32 32, %s11
      $region36: #{_lambda_.1} parent=31 // pred_fallthru
        _
    $region32: #{_lambda_.1} parent=5 // pred_fallthru
      _
    %p187 = scmp.le.s32.totalorder 1, %s11
    %p188 = scmp.lt.s32.totalorder %s11, 3
    %p189 = pnand %p187, %p188
    %p190 = pneg %p189
    // Predicated region
    $region37: #{_lambda_.1} parent=5 // pred_check
      _
    $region38: #{_lambda_.1} parent=5 // pred_check_branch
      %192 = sbr.rel (%p189) target = $region40
    $region39: #{_lambda_.1} parent=5 // pred_region
      %s193 = ssub.s32 %s11, 1
      %s194 = smul.u32 32, %s16
      %p195 = scmp.lt.s32.totalorder %s194, 63
      %s196 = scalar_select %p195, %s194, 63
      %s197 = smul.addr %s196, 8
      %s198 = scalar_lea.vmem %s0, %s197
      %p199 = pneg %p37
      %p200 = pneg %p34
      %p201 = pneg %p58
      %p202 = pneg %p55
      %p203 = pneg %p79
      %p204 = pneg %p76
      %p205 = pneg %p100
      %p206 = pneg %p97
      %p207 = pneg %p121
      %p208 = pneg %p118
      %p209 = pneg %p147
      %p210 = pneg %p144
      %p211 = scmp.lt.s32.totalorder %s16, 1
      %s212 = scalar_select %p211, %s16, 1
      %s213 = smul.addr %s212, 8
      %s214 = scalar_lea.vmem %s5, %s213
      %s215 = smul.u32 32, %s16
      %p216 = scmp.lt.s32.totalorder %s215, 63
      %s217 = scalar_select %p216, %s215, 63
      %s218 = smul.addr %s217, 8
      %s219 = scalar_lea.vmem %s0, %s218
      %s220 = smul.u32 32, %s16
      %p221 = scmp.lt.s32.totalorder %s16, 1
      %s222 = scalar_select %p221, %s16, 1
      %s223 = smul.addr %s222, 8
      %s224 = scalar_lea.vmem %s5, %s223
      %v225 = vld [vmem:[%s4] sm:$0x1]
      %v226 = vld [vmem:[%s4 + $0x1] sm:$0x1]
      %v227 = vld [vmem:[%s4 + $0x2] sm:$0x1]
      %v228 = vld [vmem:[%s4 + $0x3] sm:$0x1]
      %v229 = vld [vmem:[%s4 + $0x4] sm:$0x1]
      %v230 = vld [vmem:[%s219] sm:$0xff]
      %v231 = vld [vmem:[%s219 + $0x8] sm:$0xff]
      %v232 = vld [vmem:[%s219 + $0x10] sm:$0xff]
      %v233 = vld [vmem:[%s219 + $0x18] sm:$0xff]
      %v234 = vld [vmem:[%s219 + $0x20] sm:$0xff]
      %v235 = vld [vmem:[%s219 + $0x28] sm:$0xff]
      %v236 = vld [vmem:[%s219 + $0x30] sm:$0xff]
      %v237 = vld [vmem:[%s219 + $0x38] sm:$0xff]
      %v238 = vld [vmem:[%s219 + $0x40] sm:$0xff]
      %v239 = vld [vmem:[%s219 + $0x48] sm:$0xff]
      %v240 = vld [vmem:[%s219 + $0x50] sm:$0xff]
      %v241 = vld [vmem:[%s219 + $0x58] sm:$0xff]
      %v242 = vld [vmem:[%s219 + $0x60] sm:$0xff]
      %v243 = vld [vmem:[%s219 + $0x68] sm:$0xff]
      %v244 = vld [vmem:[%s219 + $0x70] sm:$0xff]
      %v245 = vld [vmem:[%s219 + $0x78] sm:$0xff]
      %v246 = vld [vmem:[%s219 + $0x80] sm:$0xff]
      %v247 = vld [vmem:[%s219 + $0x88] sm:$0xff]
      %v248 = vld [vmem:[%s219 + $0x90] sm:$0xff]
      %v249 = vld [vmem:[%s219 + $0x98] sm:$0xff]
      %v250 = vld [vmem:[%s219 + $0xa0] sm:$0xff]
      %v251 = vld [vmem:[%s219 + $0xa8] sm:$0xff]
      %v252 = vld [vmem:[%s219 + $0xb0] sm:$0xff]
      %v253 = vld [vmem:[%s219 + $0xb8] sm:$0xff]
      %v254 = vld [vmem:[%s219 + $0xc0] sm:$0xff]
      %v255 = vld [vmem:[%s219 + $0xc8] sm:$0xff]
      %v256 = vld [vmem:[%s219 + $0xd0] sm:$0xff]
      %v257 = vld [vmem:[%s219 + $0xd8] sm:$0xff]
      %v258 = vld [vmem:[%s219 + $0xe0] sm:$0xff]
      %v259 = vld [vmem:[%s219 + $0xe8] sm:$0xff]
      %v260 = vld [vmem:[%s219 + $0xf0] sm:$0xff]
      %v261 = vld [vmem:[%s219 + $0xf8] sm:$0xff]
      %v262 = vld [vmem:[%s1] sm:$0xff]
      %v263 = vld [vmem:[%s1 + $0x8] sm:$0xff]
      %v264 = vlaneseq
      %v265 = vshrl.u32 %v264, 7
      %v266 = vsub.s32 0, %v265
      %v267 = vrot.slane %v225, %v266
      %vm268 = vcmask 130048
      %v270 = vsel %vm268, %v230, 0
      %v273 = vsel %vm268, %v231, 0
      %v276 = vsel %vm268, %v232, 0
      %v279 = vsel %vm268, %v233, 0
      %v282 = vsel %vm268, %v234, 0
      %v285 = vsel %vm268, %v235, 0
      %v288 = vsel %vm268, %v236, 0
      %v291 = vsel %vm268, %v237, 0
      %v294 = vsel %vm268, %v238, 0
      %v297 = vsel %vm268, %v239, 0
      %v300 = vsel %vm268, %v240, 0
      %v303 = vsel %vm268, %v241, 0
      %v306 = vsel %vm268, %v242, 0
      %v309 = vsel %vm268, %v243, 0
      %v312 = vsel %vm268, %v244, 0
      %v315 = vsel %vm268, %v245, 0
      %v318 = vsel %vm268, %v246, 0
      %v321 = vsel %vm268, %v247, 0
      %v324 = vsel %vm268, %v248, 0
      %v327 = vsel %vm268, %v249, 0
      %v330 = vsel %vm268, %v250, 0
      %v333 = vsel %vm268, %v251, 0
      %v336 = vsel %vm268, %v252, 0
      %v339 = vsel %vm268, %v253, 0
      %v342 = vsel %vm268, %v254, 0
      %v345 = vsel %vm268, %v255, 0
      %v348 = vsel %vm268, %v256, 0
      %v351 = vsel %vm268, %v257, 0
      %v354 = vsel %vm268, %v258, 0
      %v357 = vsel %vm268, %v259, 0
      %v360 = vsel %vm268, %v260, 0
      %v363 = vsel %vm268, %v261, 0
      %365 = vmatprep.subr.mxu0 0.0
      %366 = vmatpush1.msra.mxu0 %v262
      %367 = vmatprep.subr.mxu0 0.0
      %368 = vmatpush1.msra.mxu0 %v263
      %369 = vmatprep.subr.mxu0 0.0
      %370 = vmatpush1.msra.mxu0 0.0
      %371 = vmatprep.subr.mxu0 0.0
      %372 = vmatpush1.msra.mxu0 0.0
      %373 = vmatprep.subr.mxu0 0.0
      %374 = vmatpush1.msra.mxu0 0.0
      %375 = vmatprep.subr.mxu0 0.0
      %376 = vmatpush1.msra.mxu0 0.0
      %377 = vmatprep.subr.mxu0 0.0
      %378 = vmatpush1.msra.mxu0 0.0
      %379 = vmatprep.subr.mxu0 0.0
      %380 = vmatpush1.msra.mxu0 0.0
      %381 = vmatprep.subr.mxu0 0.0
      %382 = vmatpush1.msra.mxu0 0.0
      %383 = vmatprep.subr.mxu0 0.0
      %384 = vmatpush1.msra.mxu0 0.0
      %385 = vmatprep.subr.mxu0 0.0
      %386 = vmatpush1.msra.mxu0 0.0
      %387 = vmatprep.subr.mxu0 0.0
      %388 = vmatpush1.msra.mxu0 0.0
      %389 = vmatprep.subr.mxu0 0.0
      %390 = vmatpush1.msra.mxu0 0.0
      %391 = vmatprep.subr.mxu0 0.0
      %392 = vmatpush1.msra.mxu0 0.0
      %393 = vmatprep.subr.mxu0 0.0
      %394 = vmatpush1.msra.mxu0 0.0
      %395 = vmatprep.subr.mxu0 0.0
      %396 = vmatpush1.msra.mxu0 0.0
      %397 = vmatprep.subr.mxu0 0.0
      %398 = vmatpush1.msra.mxu0 0.0
      %399 = vmatprep.subr.mxu0 0.0
      %400 = vmatpush1.msra.mxu0 0.0
      %401 = vmatprep.subr.mxu0 0.0
      %402 = vmatpush1.msra.mxu0 0.0
      %403 = vmatprep.subr.mxu0 0.0
      %404 = vmatpush1.msra.mxu0 0.0
      %405 = vmatprep.subr.mxu0 0.0
      %406 = vmatpush1.msra.mxu0 0.0
      %407 = vmatprep.subr.mxu0 0.0
      %408 = vmatpush1.msra.mxu0 0.0
      %409 = vmatprep.subr.mxu0 0.0
      %410 = vmatpush1.msra.mxu0 0.0
      %411 = vmatprep.subr.mxu0 0.0
      %412 = vmatpush1.msra.mxu0 0.0
      %413 = vmatprep.subr.mxu0 0.0
      %414 = vmatpush1.msra.mxu0 0.0
      %415 = vmatprep.subr.mxu0 0.0
      %416 = vmatpush1.msra.mxu0 0.0
      %417 = vmatprep.subr.mxu0 0.0
      %418 = vmatpush1.msra.mxu0 0.0
      %419 = vmatprep.subr.mxu0 0.0
      %420 = vmatpush1.msra.mxu0 0.0
      %421 = vmatprep.subr.mxu0 0.0
      %422 = vmatpush1.msra.mxu0 0.0
      %423 = vmatprep.subr.mxu0 0.0
      %424 = vmatpush1.msra.mxu0 0.0
      %425 = vmatprep.subr.mxu0 0.0
      %426 = vmatpush1.msra.mxu0 0.0
      %427 = vmatprep.subr.mxu0 0.0
      %428 = vmatpush1.msra.mxu0 0.0
      %429 = vmatprep.mubr.f32.mxu0 0.0
      %430 = vmatmul.mubr.f32.gmra.mrb[0].mxu0 %v270
      %v431 = vpop.f32.mrb[0].mxu0
      %v432 = vadd.f32 %v267, %v431
      %v433 = vpop.f32.mrb[0].mxu0
      %434 = vmatprep.mubr.f32.mxu0 0.0
      %435 = vmatmul.mubr.f32.gmra.mrb[0].mxu0 %v273
      %v436 = vpop.f32.mrb[0].mxu0
      %v437 = vadd.f32 %v267, %v436
      %v438 = vpop.f32.mrb[0].mxu0
      %439 = vmatprep.mubr.f32.mxu0 0.0
      %440 = vmatmul.mubr.f32.gmra.mrb[0].mxu0 %v276
      %v441 = vpop.f32.mrb[0].mxu0
      %v442 = vadd.f32 %v267, %v441
      %v443 = vpop.f32.mrb[0].mxu0
      %444 = vmatprep.mubr.f32.mxu0 0.0
      %445 = vmatmul.mubr.f32.gmra.mrb[0].mxu0 %v279
      %v446 = vpop.f32.mrb[0].mxu0
      %v447 = vadd.f32 %v267, %v446
      %v448 = vpop.f32.mrb[0].mxu0
      %449 = vmatprep.mubr.f32.mxu0 0.0
      %450 = vmatmul.mubr.f32.gmra.mrb[0].mxu0 %v282
      %v451 = vpop.f32.mrb[0].mxu0
      %v452 = vadd.f32 %v267, %v451
      %v453 = vpop.f32.mrb[0].mxu0
      %454 = vmatprep.mubr.f32.mxu0 0.0
      %455 = vmatmul.mubr.f32.gmra.mrb[0].mxu0 %v285
      %v456 = vpop.f32.mrb[0].mxu0
      %v457 = vadd.f32 %v267, %v456
      %v458 = vpop.f32.mrb[0].mxu0
      %459 = vmatprep.mubr.f32.mxu0 0.0
      %460 = vmatmul.mubr.f32.gmra.mrb[0].mxu0 %v288
      %v461 = vpop.f32.mrb[0].mxu0
      %v462 = vadd.f32 %v267, %v461
      %v463 = vpop.f32.mrb[0].mxu0
      %464 = vmatprep.mubr.f32.mxu0 0.0
      %465 = vmatmul.mubr.f32.gmra.mrb[0].mxu0 %v291
      %v466 = vpop.f32.mrb[0].mxu0
      %v467 = vadd.f32 %v267, %v466
      %v468 = vpop.f32.mrb[0].mxu0
      %469 = vmatprep.mubr.f32.mxu0 0.0
      %470 = vmatmul.mubr.f32.gmra.mrb[0].mxu0 %v294
      %v471 = vpop.f32.mrb[0].mxu0
      %v472 = vadd.f32 %v267, %v471
      %v473 = vpop.f32.mrb[0].mxu0
      %474 = vmatprep.mubr.f32.mxu0 0.0
      %475 = vmatmul.mubr.f32.gmra.mrb[0].mxu0 %v297
      %v476 = vpop.f32.mrb[0].mxu0
      %v477 = vadd.f32 %v267, %v476
      %v478 = vpop.f32.mrb[0].mxu0
      %479 = vmatprep.mubr.f32.mxu0 0.0
      %480 = vmatmul.mubr.f32.gmra.mrb[0].mxu0 %v300
      %v481 = vpop.f32.mrb[0].mxu0
      %v482 = vadd.f32 %v267, %v481
      %v483 = vpop.f32.mrb[0].mxu0
      %484 = vmatprep.mubr.f32.mxu0 0.0
      %485 = vmatmul.mubr.f32.gmra.mrb[0].mxu0 %v303
      %v486 = vpop.f32.mrb[0].mxu0
      %v487 = vadd.f32 %v267, %v486
      %v488 = vpop.f32.mrb[0].mxu0
      %489 = vmatprep.mubr.f32.mxu0 0.0
      %490 = vmatmul.mubr.f32.gmra.mrb[0].mxu0 %v306
      %v491 = vpop.f32.mrb[0].mxu0
      %v492 = vadd.f32 %v267, %v491
      %v493 = vpop.f32.mrb[0].mxu0
      %494 = vmatprep.mubr.f32.mxu0 0.0
      %495 = vmatmul.mubr.f32.gmra.mrb[0].mxu0 %v309
      %v496 = vpop.f32.mrb[0].mxu0
      %v497 = vadd.f32 %v267, %v496
      %v498 = vpop.f32.mrb[0].mxu0
      %499 = vmatprep.mubr.f32.mxu0 0.0
      %500 = vmatmul.mubr.f32.gmra.mrb[0].mxu0 %v312
      %v501 = vpop.f32.mrb[0].mxu0
      %v502 = vadd.f32 %v267, %v501
      %v503 = vpop.f32.mrb[0].mxu0
      %504 = vmatprep.mubr.f32.mxu0 0.0
      %505 = vmatmul.mubr.f32.gmra.mrb[0].mxu0 %v315
      %v506 = vpop.f32.mrb[0].mxu0
      %v507 = vadd.f32 %v267, %v506
      %v508 = vpop.f32.mrb[0].mxu0
      %509 = vmatprep.mubr.f32.mxu0 0.0
      %510 = vmatmul.mubr.f32.gmra.mrb[0].mxu0 %v318
      %v511 = vpop.f32.mrb[0].mxu0
      %v512 = vadd.f32 %v267, %v511
      %v513 = vpop.f32.mrb[0].mxu0
      %514 = vmatprep.mubr.f32.mxu0 0.0
      %515 = vmatmul.mubr.f32.gmra.mrb[0].mxu0 %v321
      %v516 = vpop.f32.mrb[0].mxu0
      %v517 = vadd.f32 %v267, %v516
      %v518 = vpop.f32.mrb[0].mxu0
      %519 = vmatprep.mubr.f32.mxu0 0.0
      %520 = vmatmul.mubr.f32.gmra.mrb[0].mxu0 %v324
      %v521 = vpop.f32.mrb[0].mxu0
      %v522 = vadd.f32 %v267, %v521
      %v523 = vpop.f32.mrb[0].mxu0
      %524 = vmatprep.mubr.f32.mxu0 0.0
      %525 = vmatmul.mubr.f32.gmra.mrb[0].mxu0 %v327
      %v526 = vpop.f32.mrb[0].mxu0
      %v527 = vadd.f32 %v267, %v526
      %v528 = vpop.f32.mrb[0].mxu0
      %529 = vmatprep.mubr.f32.mxu0 0.0
      %530 = vmatmul.mubr.f32.gmra.mrb[0].mxu0 %v330
      %v531 = vpop.f32.mrb[0].mxu0
      %v532 = vadd.f32 %v267, %v531
      %v533 = vpop.f32.mrb[0].mxu0
      %534 = vmatprep.mubr.f32.mxu0 0.0
      %535 = vmatmul.mubr.f32.gmra.mrb[0].mxu0 %v333
      %v536 = vpop.f32.mrb[0].mxu0
      %v537 = vadd.f32 %v267, %v536
      %v538 = vpop.f32.mrb[0].mxu0
      %539 = vmatprep.mubr.f32.mxu0 0.0
      %540 = vmatmul.mubr.f32.gmra.mrb[0].mxu0 %v336
      %v541 = vpop.f32.mrb[0].mxu0
      %v542 = vadd.f32 %v267, %v541
      %v543 = vpop.f32.mrb[0].mxu0
      %544 = vmatprep.mubr.f32.mxu0 0.0
      %545 = vmatmul.mubr.f32.gmra.mrb[0].mxu0 %v339
      %v546 = vpop.f32.mrb[0].mxu0
      %v547 = vadd.f32 %v267, %v546
      %v548 = vpop.f32.mrb[0].mxu0
      %549 = vmatprep.mubr.f32.mxu0 0.0
      %550 = vmatmul.mubr.f32.gmra.mrb[0].mxu0 %v342
      %v551 = vpop.f32.mrb[0].mxu0
      %v552 = vadd.f32 %v267, %v551
      %v553 = vpop.f32.mrb[0].mxu0
      %554 = vmatprep.mubr.f32.mxu0 0.0
      %555 = vmatmul.mubr.f32.gmra.mrb[0].mxu0 %v345
      %v556 = vpop.f32.mrb[0].mxu0
      %v557 = vadd.f32 %v267, %v556
      %v558 = vpop.f32.mrb[0].mxu0
      %559 = vmatprep.mubr.f32.mxu0 0.0
      %560 = vmatmul.mubr.f32.gmra.mrb[0].mxu0 %v348
      %v561 = vpop.f32.mrb[0].mxu0
      %v562 = vadd.f32 %v267, %v561
      %v563 = vpop.f32.mrb[0].mxu0
      %564 = vmatprep.mubr.f32.mxu0 0.0
      %565 = vmatmul.mubr.f32.gmra.mrb[0].mxu0 %v351
      %v566 = vpop.f32.mrb[0].mxu0
      %v567 = vadd.f32 %v267, %v566
      %v568 = vpop.f32.mrb[0].mxu0
      %569 = vmatprep.mubr.f32.mxu0 0.0
      %570 = vmatmul.mubr.f32.gmra.mrb[0].mxu0 %v354
      %v571 = vpop.f32.mrb[0].mxu0
      %v572 = vadd.f32 %v267, %v571
      %v573 = vpop.f32.mrb[0].mxu0
      %574 = vmatprep.mubr.f32.mxu0 0.0
      %575 = vmatmul.mubr.f32.gmra.mrb[0].mxu0 %v357
      %v576 = vpop.f32.mrb[0].mxu0
      %v577 = vadd.f32 %v267, %v576
      %v578 = vpop.f32.mrb[0].mxu0
      %579 = vmatprep.mubr.f32.mxu0 0.0
      %580 = vmatmul.mubr.f32.gmra.mrb[0].mxu0 %v360
      %v581 = vpop.f32.mrb[0].mxu0
      %v582 = vadd.f32 %v267, %v581
      %v583 = vpop.f32.mrb[0].mxu0
      %584 = vmatprep.mubr.f32.mxu0 0.0
      %585 = vmatmul.mubr.f32.gmra.mrb[0].mxu0 %v363
      %v586 = vpop.f32.mrb[0].mxu0
      %v587 = vadd.f32 %v267, %v586
      %v588 = vpop.f32.mrb[0].mxu0
      %589 = vdwg.mxu0
      %v590 = vsub.f32 0.0, %v432
      %v591 = vsub.f32 0.0, %v437
      %v592 = vsub.f32 0.0, %v442
      %v593 = vsub.f32 0.0, %v447
      %v594 = vsub.f32 0.0, %v452
      %v595 = vsub.f32 0.0, %v457
      %v596 = vsub.f32 0.0, %v462
      %v597 = vsub.f32 0.0, %v467
      %v598 = vsub.f32 0.0, %v472
      %v599 = vsub.f32 0.0, %v477
      %v600 = vsub.f32 0.0, %v482
      %v601 = vsub.f32 0.0, %v487
      %v602 = vsub.f32 0.0, %v492
      %v603 = vsub.f32 0.0, %v497
      %v604 = vsub.f32 0.0, %v502
      %v605 = vsub.f32 0.0, %v507
      %v606 = vsub.f32 0.0, %v512
      %v607 = vsub.f32 0.0, %v517
      %v608 = vsub.f32 0.0, %v522
      %v609 = vsub.f32 0.0, %v527
      %v610 = vsub.f32 0.0, %v532
      %v611 = vsub.f32 0.0, %v537
      %v612 = vsub.f32 0.0, %v542
      %v613 = vsub.f32 0.0, %v547
      %v614 = vsub.f32 0.0, %v552
      %v615 = vsub.f32 0.0, %v557
      %v616 = vsub.f32 0.0, %v562
      %v617 = vsub.f32 0.0, %v567
      %v618 = vsub.f32 0.0, %v572
      %v619 = vsub.f32 0.0, %v577
      %v620 = vsub.f32 0.0, %v582
      %v621 = vsub.f32 0.0, %v587
      %v622 = vmul.f32 %v590, 1.442695
      %v623 = vpow.pop %v622
      %v624 = vmul.f32 %v591, 1.442695
      %v625 = vpow.pop %v624
      %v626 = vmul.f32 %v592, 1.442695
      %v627 = vpow.pop %v626
      %v628 = vmul.f32 %v593, 1.442695
      %v629 = vpow.pop %v628
      %v630 = vmul.f32 %v594, 1.442695
      %v631 = vpow.pop %v630
      %v632 = vmul.f32 %v595, 1.442695
      %v633 = vpow.pop %v632
      %v634 = vmul.f32 %v596, 1.442695
      %v635 = vpow.pop %v634
      %v636 = vmul.f32 %v597, 1.442695
      %v637 = vpow.pop %v636
      %v638 = vmul.f32 %v598, 1.442695
      %v639 = vpow.pop %v638
      %v640 = vmul.f32 %v599, 1.442695
      %v641 = vpow.pop %v640
      %v642 = vmul.f32 %v600, 1.442695
      %v643 = vpow.pop %v642
      %v644 = vmul.f32 %v601, 1.442695
      %v645 = vpow.pop %v644
      %v646 = vmul.f32 %v602, 1.442695
      %v647 = vpow.pop %v646
      %v648 = vmul.f32 %v603, 1.442695
      %v649 = vpow.pop %v648
      %v650 = vmul.f32 %v604, 1.442695
      %v651 = vpow.pop %v650
      %v652 = vmul.f32 %v605, 1.442695
      %v653 = vpow.pop %v652
      %v654 = vmul.f32 %v606, 1.442695
      %v655 = vpow.pop %v654
      %v656 = vmul.f32 %v607, 1.442695
      %v657 = vpow.pop %v656
      %v658 = vmul.f32 %v608, 1.442695
      %v659 = vpow.pop %v658
      %v660 = vmul.f32 %v609, 1.442695
      %v661 = vpow.pop %v660
      %v662 = vmul.f32 %v610, 1.442695
      %v663 = vpow.pop %v662
      %v664 = vmul.f32 %v611, 1.442695
      %v665 = vpow.pop %v664
      %v666 = vmul.f32 %v612, 1.442695
      %v667 = vpow.pop %v666
      %v668 = vmul.f32 %v613, 1.442695
      %v669 = vpow.pop %v668
      %v670 = vmul.f32 %v614, 1.442695
      %v671 = vpow.pop %v670
      %v672 = vmul.f32 %v615, 1.442695
      %v673 = vpow.pop %v672
      %v674 = vmul.f32 %v616, 1.442695
      %v675 = vpow.pop %v674
      %v676 = vmul.f32 %v617, 1.442695
      %v677 = vpow.pop %v676
      %v678 = vmul.f32 %v618, 1.442695
      %v679 = vpow.pop %v678
      %v680 = vmul.f32 %v619, 1.442695
      %v681 = vpow.pop %v680
      %v682 = vmul.f32 %v620, 1.442695
      %v683 = vpow.pop %v682
      %v684 = vmul.f32 %v621, 1.442695
      %v685 = vpow.pop %v684
      %v686 = vadd.f32 %v623, 1.0
      %v687 = vadd.f32 %v625, 1.0
      %v688 = vadd.f32 %v627, 1.0
      %v689 = vadd.f32 %v629, 1.0
      %v690 = vadd.f32 %v631, 1.0
      %v691 = vadd.f32 %v633, 1.0
      %v692 = vadd.f32 %v635, 1.0
      %v693 = vadd.f32 %v637, 1.0
      %v694 = vadd.f32 %v639, 1.0
      %v695 = vadd.f32 %v641, 1.0
      %v696 = vadd.f32 %v643, 1.0
      %v697 = vadd.f32 %v645, 1.0
      %v698 = vadd.f32 %v647, 1.0
      %v699 = vadd.f32 %v649, 1.0
      %v700 = vadd.f32 %v651, 1.0
      %v701 = vadd.f32 %v653, 1.0
      %v702 = vadd.f32 %v655, 1.0
      %v703 = vadd.f32 %v657, 1.0
      %v704 = vadd.f32 %v659, 1.0
      %v705 = vadd.f32 %v661, 1.0
      %v706 = vadd.f32 %v663, 1.0
      %v707 = vadd.f32 %v665, 1.0
      %v708 = vadd.f32 %v667, 1.0
      %v709 = vadd.f32 %v669, 1.0
      %v710 = vadd.f32 %v671, 1.0
      %v711 = vadd.f32 %v673, 1.0
      %v712 = vadd.f32 %v675, 1.0
      %v713 = vadd.f32 %v677, 1.0
      %v714 = vadd.f32 %v679, 1.0
      %v715 = vadd.f32 %v681, 1.0
      %v716 = vadd.f32 %v683, 1.0
      %v717 = vadd.f32 %v685, 1.0
      %v718 = vrcp.pop %v686
      %v719 = vrcp.pop %v687
      %v720 = vrcp.pop %v688
      %v721 = vrcp.pop %v689
      %v722 = vrcp.pop %v690
      %v723 = vrcp.pop %v691
      %v724 = vrcp.pop %v692
      %v725 = vrcp.pop %v693
      %v726 = vrcp.pop %v694
      %v727 = vrcp.pop %v695
      %v728 = vrcp.pop %v696
      %v729 = vrcp.pop %v697
      %v730 = vrcp.pop %v698
      %v731 = vrcp.pop %v699
      %v732 = vrcp.pop %v700
      %v733 = vrcp.pop %v701
      %v734 = vrcp.pop %v702
      %v735 = vrcp.pop %v703
      %v736 = vrcp.pop %v704
      %v737 = vrcp.pop %v705
      %v738 = vrcp.pop %v706
      %v739 = vrcp.pop %v707
      %v740 = vrcp.pop %v708
      %v741 = vrcp.pop %v709
      %v742 = vrcp.pop %v710
      %v743 = vrcp.pop %v711
      %v744 = vrcp.pop %v712
      %v745 = vrcp.pop %v713
      %v746 = vrcp.pop %v714
      %v747 = vrcp.pop %v715
      %v748 = vrcp.pop %v716
      %v749 = vrcp.pop %v717
      %v750 = vmul.f32 %v432, %v718
      %v751 = vmul.f32 %v437, %v719
      %v752 = vmul.f32 %v442, %v720
      %v753 = vmul.f32 %v447, %v721
      %v754 = vmul.f32 %v452, %v722
      %v755 = vmul.f32 %v457, %v723
      %v756 = vmul.f32 %v462, %v724
      %v757 = vmul.f32 %v467, %v725
      %v758 = vmul.f32 %v472, %v726
      %v759 = vmul.f32 %v477, %v727
      %v760 = vmul.f32 %v482, %v728
      %v761 = vmul.f32 %v487, %v729
      %v762 = vmul.f32 %v492, %v730
      %v763 = vmul.f32 %v497, %v731
      %v764 = vmul.f32 %v502, %v732
      %v765 = vmul.f32 %v507, %v733
      %v766 = vmul.f32 %v512, %v734
      %v767 = vmul.f32 %v517, %v735
      %v768 = vmul.f32 %v522, %v736
      %v769 = vmul.f32 %v527, %v737
      %v770 = vmul.f32 %v532, %v738
      %v771 = vmul.f32 %v537, %v739
      %v772 = vmul.f32 %v542, %v740
      %v773 = vmul.f32 %v547, %v741
      %v774 = vmul.f32 %v552, %v742
      %v775 = vmul.f32 %v557, %v743
      %v776 = vmul.f32 %v562, %v744
      %v777 = vmul.f32 %v567, %v745
      %v778 = vmul.f32 %v572, %v746
      %v779 = vmul.f32 %v577, %v747
      %v780 = vmul.f32 %v582, %v748
      %v781 = vmul.f32 %v587, %v749
      %v782 = vlaneseq
      %v783 = vshrl.u32 %v782, 7
      %v784 = vsub.s32 0, %v783
      %v785 = vrot.slane %v226, %v784
      %v786 = vmul.f32 %v750, %v785
      %v787 = vmul.f32 %v751, %v785
      %v788 = vmul.f32 %v752, %v785
      %v789 = vmul.f32 %v753, %v785
      %v790 = vmul.f32 %v754, %v785
      %v791 = vmul.f32 %v755, %v785
      %v792 = vmul.f32 %v756, %v785
      %v793 = vmul.f32 %v757, %v785
      %v794 = vmul.f32 %v758, %v785
      %v795 = vmul.f32 %v759, %v785
      %v796 = vmul.f32 %v760, %v785
      %v797 = vmul.f32 %v761, %v785
      %v798 = vmul.f32 %v762, %v785
      %v799 = vmul.f32 %v763, %v785
      %v800 = vmul.f32 %v764, %v785
      %v801 = vmul.f32 %v765, %v785
      %v802 = vmul.f32 %v766, %v785
      %v803 = vmul.f32 %v767, %v785
      %v804 = vmul.f32 %v768, %v785
      %v805 = vmul.f32 %v769, %v785
      %v806 = vmul.f32 %v770, %v785
      %v807 = vmul.f32 %v771, %v785
      %v808 = vmul.f32 %v772, %v785
      %v809 = vmul.f32 %v773, %v785
      %v810 = vmul.f32 %v774, %v785
      %v811 = vmul.f32 %v775, %v785
      %v812 = vmul.f32 %v776, %v785
      %v813 = vmul.f32 %v777, %v785
      %v814 = vmul.f32 %v778, %v785
      %v815 = vmul.f32 %v779, %v785
      %v816 = vmul.f32 %v780, %v785
      %v817 = vmul.f32 %v781, %v785
      %818 = vadd.xlane.f32.xlu0 %v786
      %v819 = vpop.xlane.xlu0 %818
      %820 = vadd.xlane.f32.xlu0 %v787
      %v821 = vpop.xlane.xlu0 %820
      %822 = vadd.xlane.f32.xlu0 %v788
      %v823 = vpop.xlane.xlu0 %822
      %824 = vadd.xlane.f32.xlu0 %v789
      %v825 = vpop.xlane.xlu0 %824
      %826 = vadd.xlane.f32.xlu0 %v790
      %v827 = vpop.xlane.xlu0 %826
      %828 = vadd.xlane.f32.xlu0 %v791
      %v829 = vpop.xlane.xlu0 %828
      %830 = vadd.xlane.f32.xlu0 %v792
      %v831 = vpop.xlane.xlu0 %830
      %832 = vadd.xlane.f32.xlu0 %v793
      %v833 = vpop.xlane.xlu0 %832
      %834 = vadd.xlane.f32.xlu0 %v794
      %v835 = vpop.xlane.xlu0 %834
      %836 = vadd.xlane.f32.xlu0 %v795
      %v837 = vpop.xlane.xlu0 %836
      %838 = vadd.xlane.f32.xlu0 %v796
      %v839 = vpop.xlane.xlu0 %838
      %840 = vadd.xlane.f32.xlu0 %v797
      %v841 = vpop.xlane.xlu0 %840
      %842 = vadd.xlane.f32.xlu0 %v798
      %v843 = vpop.xlane.xlu0 %842
      %844 = vadd.xlane.f32.xlu0 %v799
      %v845 = vpop.xlane.xlu0 %844
      %846 = vadd.xlane.f32.xlu0 %v800
      %v847 = vpop.xlane.xlu0 %846
      %848 = vadd.xlane.f32.xlu0 %v801
      %v849 = vpop.xlane.xlu0 %848
      %850 = vadd.xlane.f32.xlu0 %v802
      %v851 = vpop.xlane.xlu0 %850
      %852 = vadd.xlane.f32.xlu0 %v803
      %v853 = vpop.xlane.xlu0 %852
      %854 = vadd.xlane.f32.xlu0 %v804
      %v855 = vpop.xlane.xlu0 %854
      %856 = vadd.xlane.f32.xlu0 %v805
      %v857 = vpop.xlane.xlu0 %856
      %858 = vadd.xlane.f32.xlu0 %v806
      %v859 = vpop.xlane.xlu0 %858
      %860 = vadd.xlane.f32.xlu0 %v807
      %v861 = vpop.xlane.xlu0 %860
      %862 = vadd.xlane.f32.xlu0 %v808
      %v863 = vpop.xlane.xlu0 %862
      %864 = vadd.xlane.f32.xlu0 %v809
      %v865 = vpop.xlane.xlu0 %864
      %866 = vadd.xlane.f32.xlu0 %v810
      %v867 = vpop.xlane.xlu0 %866
      %868 = vadd.xlane.f32.xlu0 %v811
      %v869 = vpop.xlane.xlu0 %868
      %870 = vadd.xlane.f32.xlu0 %v812
      %v871 = vpop.xlane.xlu0 %870
      %872 = vadd.xlane.f32.xlu0 %v813
      %v873 = vpop.xlane.xlu0 %872
      %874 = vadd.xlane.f32.xlu0 %v814
      %v875 = vpop.xlane.xlu0 %874
      %876 = vadd.xlane.f32.xlu0 %v815
      %v877 = vpop.xlane.xlu0 %876
      %878 = vadd.xlane.f32.xlu0 %v816
      %v879 = vpop.xlane.xlu0 %878
      %880 = vadd.xlane.f32.xlu0 %v817
      %v881 = vpop.xlane.xlu0 %880
      %v882 = vlaneseq
      %v883 = vshrl.u32 %v882, 7
      %v884 = vsub.s32 0, %v883
      %v885 = vrot.slane %v227, %v884
      %v886 = vadd.f32 %v819, %v885
      %v887 = vadd.f32 %v821, %v885
      %v888 = vadd.f32 %v823, %v885
      %v889 = vadd.f32 %v825, %v885
      %v890 = vadd.f32 %v827, %v885
      %v891 = vadd.f32 %v829, %v885
      %v892 = vadd.f32 %v831, %v885
      %v893 = vadd.f32 %v833, %v885
      %v894 = vadd.f32 %v835, %v885
      %v895 = vadd.f32 %v837, %v885
      %v896 = vadd.f32 %v839, %v885
      %v897 = vadd.f32 %v841, %v885
      %v898 = vadd.f32 %v843, %v885
      %v899 = vadd.f32 %v845, %v885
      %v900 = vadd.f32 %v847, %v885
      %v901 = vadd.f32 %v849, %v885
      %v902 = vadd.f32 %v851, %v885
      %v903 = vadd.f32 %v853, %v885
      %v904 = vadd.f32 %v855, %v885
      %v905 = vadd.f32 %v857, %v885
      %v906 = vadd.f32 %v859, %v885
      %v907 = vadd.f32 %v861, %v885
      %v908 = vadd.f32 %v863, %v885
      %v909 = vadd.f32 %v865, %v885
      %v910 = vadd.f32 %v867, %v885
      %v911 = vadd.f32 %v869, %v885
      %v912 = vadd.f32 %v871, %v885
      %v913 = vadd.f32 %v873, %v885
      %v914 = vadd.f32 %v875, %v885
      %v915 = vadd.f32 %v877, %v885
      %v916 = vadd.f32 %v879, %v885
      %v917 = vadd.f32 %v881, %v885
      %v918 = vsub.f32 0.0, %v886
      %v919 = vsub.f32 0.0, %v887
      %v920 = vsub.f32 0.0, %v888
      %v921 = vsub.f32 0.0, %v889
      %v922 = vsub.f32 0.0, %v890
      %v923 = vsub.f32 0.0, %v891
      %v924 = vsub.f32 0.0, %v892
      %v925 = vsub.f32 0.0, %v893
      %v926 = vsub.f32 0.0, %v894
      %v927 = vsub.f32 0.0, %v895
      %v928 = vsub.f32 0.0, %v896
      %v929 = vsub.f32 0.0, %v897
      %v930 = vsub.f32 0.0, %v898
      %v931 = vsub.f32 0.0, %v899
      %v932 = vsub.f32 0.0, %v900
      %v933 = vsub.f32 0.0, %v901
      %v934 = vsub.f32 0.0, %v902
      %v935 = vsub.f32 0.0, %v903
      %v936 = vsub.f32 0.0, %v904
      %v937 = vsub.f32 0.0, %v905
      %v938 = vsub.f32 0.0, %v906
      %v939 = vsub.f32 0.0, %v907
      %v940 = vsub.f32 0.0, %v908
      %v941 = vsub.f32 0.0, %v909
      %v942 = vsub.f32 0.0, %v910
      %v943 = vsub.f32 0.0, %v911
      %v944 = vsub.f32 0.0, %v912
      %v945 = vsub.f32 0.0, %v913
      %v946 = vsub.f32 0.0, %v914
      %v947 = vsub.f32 0.0, %v915
      %v948 = vsub.f32 0.0, %v916
      %v949 = vsub.f32 0.0, %v917
      %v950 = vmul.f32 %v918, 1.442695
      %v951 = vpow.pop %v950
      %v952 = vmul.f32 %v919, 1.442695
      %v953 = vpow.pop %v952
      %v954 = vmul.f32 %v920, 1.442695
      %v955 = vpow.pop %v954
      %v956 = vmul.f32 %v921, 1.442695
      %v957 = vpow.pop %v956
      %v958 = vmul.f32 %v922, 1.442695
      %v959 = vpow.pop %v958
      %v960 = vmul.f32 %v923, 1.442695
      %v961 = vpow.pop %v960
      %v962 = vmul.f32 %v924, 1.442695
      %v963 = vpow.pop %v962
      %v964 = vmul.f32 %v925, 1.442695
      %v965 = vpow.pop %v964
      %v966 = vmul.f32 %v926, 1.442695
      %v967 = vpow.pop %v966
      %v968 = vmul.f32 %v927, 1.442695
      %v969 = vpow.pop %v968
      %v970 = vmul.f32 %v928, 1.442695
      %v971 = vpow.pop %v970
      %v972 = vmul.f32 %v929, 1.442695
      %v973 = vpow.pop %v972
      %v974 = vmul.f32 %v930, 1.442695
      %v975 = vpow.pop %v974
      %v976 = vmul.f32 %v931, 1.442695
      %v977 = vpow.pop %v976
      %v978 = vmul.f32 %v932, 1.442695
      %v979 = vpow.pop %v978
      %v980 = vmul.f32 %v933, 1.442695
      %v981 = vpow.pop %v980
      %v982 = vmul.f32 %v934, 1.442695
      %v983 = vpow.pop %v982
      %v984 = vmul.f32 %v935, 1.442695
      %v985 = vpow.pop %v984
      %v986 = vmul.f32 %v936, 1.442695
      %v987 = vpow.pop %v986
      %v988 = vmul.f32 %v937, 1.442695
      %v989 = vpow.pop %v988
      %v990 = vmul.f32 %v938, 1.442695
      %v991 = vpow.pop %v990
      %v992 = vmul.f32 %v939, 1.442695
      %v993 = vpow.pop %v992
      %v994 = vmul.f32 %v940, 1.442695
      %v995 = vpow.pop %v994
      %v996 = vmul.f32 %v941, 1.442695
      %v997 = vpow.pop %v996
      %v998 = vmul.f32 %v942, 1.442695
      %v999 = vpow.pop %v998
      %v1000 = vmul.f32 %v943, 1.442695
      %v1001 = vpow.pop %v1000
      %v1002 = vmul.f32 %v944, 1.442695
      %v1003 = vpow.pop %v1002
      %v1004 = vmul.f32 %v945, 1.442695
      %v1005 = vpow.pop %v1004
      %v1006 = vmul.f32 %v946, 1.442695
      %v1007 = vpow.pop %v1006
      %v1008 = vmul.f32 %v947, 1.442695
      %v1009 = vpow.pop %v1008
      %v1010 = vmul.f32 %v948, 1.442695
      %v1011 = vpow.pop %v1010
      %v1012 = vmul.f32 %v949, 1.442695
      %v1013 = vpow.pop %v1012
      %v1014 = vadd.f32 %v951, 1.0
      %v1015 = vadd.f32 %v953, 1.0
      %v1016 = vadd.f32 %v955, 1.0
      %v1017 = vadd.f32 %v957, 1.0
      %v1018 = vadd.f32 %v959, 1.0
      %v1019 = vadd.f32 %v961, 1.0
      %v1020 = vadd.f32 %v963, 1.0
      %v1021 = vadd.f32 %v965, 1.0
      %v1022 = vadd.f32 %v967, 1.0
      %v1023 = vadd.f32 %v969, 1.0
      %v1024 = vadd.f32 %v971, 1.0
      %v1025 = vadd.f32 %v973, 1.0
      %v1026 = vadd.f32 %v975, 1.0
      %v1027 = vadd.f32 %v977, 1.0
      %v1028 = vadd.f32 %v979, 1.0
      %v1029 = vadd.f32 %v981, 1.0
      %v1030 = vadd.f32 %v983, 1.0
      %v1031 = vadd.f32 %v985, 1.0
      %v1032 = vadd.f32 %v987, 1.0
      %v1033 = vadd.f32 %v989, 1.0
      %v1034 = vadd.f32 %v991, 1.0
      %v1035 = vadd.f32 %v993, 1.0
      %v1036 = vadd.f32 %v995, 1.0
      %v1037 = vadd.f32 %v997, 1.0
      %v1038 = vadd.f32 %v999, 1.0
      %v1039 = vadd.f32 %v1001, 1.0
      %v1040 = vadd.f32 %v1003, 1.0
      %v1041 = vadd.f32 %v1005, 1.0
      %v1042 = vadd.f32 %v1007, 1.0
      %v1043 = vadd.f32 %v1009, 1.0
      %v1044 = vadd.f32 %v1011, 1.0
      %v1045 = vadd.f32 %v1013, 1.0
      %v1046 = vrcp.pop %v1014
      %v1047 = vrcp.pop %v1015
      %v1048 = vrcp.pop %v1016
      %v1049 = vrcp.pop %v1017
      %v1050 = vrcp.pop %v1018
      %v1051 = vrcp.pop %v1019
      %v1052 = vrcp.pop %v1020
      %v1053 = vrcp.pop %v1021
      %v1054 = vrcp.pop %v1022
      %v1055 = vrcp.pop %v1023
      %v1056 = vrcp.pop %v1024
      %v1057 = vrcp.pop %v1025
      %v1058 = vrcp.pop %v1026
      %v1059 = vrcp.pop %v1027
      %v1060 = vrcp.pop %v1028
      %v1061 = vrcp.pop %v1029
      %v1062 = vrcp.pop %v1030
      %v1063 = vrcp.pop %v1031
      %v1064 = vrcp.pop %v1032
      %v1065 = vrcp.pop %v1033
      %v1066 = vrcp.pop %v1034
      %v1067 = vrcp.pop %v1035
      %v1068 = vrcp.pop %v1036
      %v1069 = vrcp.pop %v1037
      %v1070 = vrcp.pop %v1038
      %v1071 = vrcp.pop %v1039
      %v1072 = vrcp.pop %v1040
      %v1073 = vrcp.pop %v1041
      %v1074 = vrcp.pop %v1042
      %v1075 = vrcp.pop %v1043
      %v1076 = vrcp.pop %v1044
      %v1077 = vrcp.pop %v1045
      %1079 = vset.pattern.permute.xlu0 0
      %1080 = vperm.xlu0 %1079, %v1046
      %v1081 = vpop.permute.xlu0 %1080
      %1084 = vset.pattern.permute.xlu0 0
      %1085 = vperm.xlu0 %1084, %v1047
      %v1086 = vpop.permute.xlu0 %1085
      %1089 = vset.pattern.permute.xlu0 0
      %1090 = vperm.xlu0 %1089, %v1048
      %v1091 = vpop.permute.xlu0 %1090
      %1094 = vset.pattern.permute.xlu0 0
      %1095 = vperm.xlu0 %1094, %v1049
      %v1096 = vpop.permute.xlu0 %1095
      %1099 = vset.pattern.permute.xlu0 0
      %1100 = vperm.xlu0 %1099, %v1050
      %v1101 = vpop.permute.xlu0 %1100
      %1104 = vset.pattern.permute.xlu0 0
      %1105 = vperm.xlu0 %1104, %v1051
      %v1106 = vpop.permute.xlu0 %1105
      %1109 = vset.pattern.permute.xlu0 0
      %1110 = vperm.xlu0 %1109, %v1052
      %v1111 = vpop.permute.xlu0 %1110
      %1114 = vset.pattern.permute.xlu0 0
      %1115 = vperm.xlu0 %1114, %v1053
      %v1116 = vpop.permute.xlu0 %1115
      %1119 = vset.pattern.permute.xlu0 0
      %1120 = vperm.xlu0 %1119, %v1054
      %v1121 = vpop.permute.xlu0 %1120
      %1124 = vset.pattern.permute.xlu0 0
      %1125 = vperm.xlu0 %1124, %v1055
      %v1126 = vpop.permute.xlu0 %1125
      %1129 = vset.pattern.permute.xlu0 0
      %1130 = vperm.xlu0 %1129, %v1056
      %v1131 = vpop.permute.xlu0 %1130
      %1134 = vset.pattern.permute.xlu0 0
      %1135 = vperm.xlu0 %1134, %v1057
      %v1136 = vpop.permute.xlu0 %1135
      %1139 = vset.pattern.permute.xlu0 0
      %1140 = vperm.xlu0 %1139, %v1058
      %v1141 = vpop.permute.xlu0 %1140
      %1144 = vset.pattern.permute.xlu0 0
      %1145 = vperm.xlu0 %1144, %v1059
      %v1146 = vpop.permute.xlu0 %1145
      %1149 = vset.pattern.permute.xlu0 0
      %1150 = vperm.xlu0 %1149, %v1060
      %v1151 = vpop.permute.xlu0 %1150
      %1154 = vset.pattern.permute.xlu0 0
      %1155 = vperm.xlu0 %1154, %v1061
      %v1156 = vpop.permute.xlu0 %1155
      %1159 = vset.pattern.permute.xlu0 0
      %1160 = vperm.xlu0 %1159, %v1062
      %v1161 = vpop.permute.xlu0 %1160
      %1164 = vset.pattern.permute.xlu0 0
      %1165 = vperm.xlu0 %1164, %v1063
      %v1166 = vpop.permute.xlu0 %1165
      %1169 = vset.pattern.permute.xlu0 0
      %1170 = vperm.xlu0 %1169, %v1064
      %v1171 = vpop.permute.xlu0 %1170
      %1174 = vset.pattern.permute.xlu0 0
      %1175 = vperm.xlu0 %1174, %v1065
      %v1176 = vpop.permute.xlu0 %1175
      %1179 = vset.pattern.permute.xlu0 0
      %1180 = vperm.xlu0 %1179, %v1066
      %v1181 = vpop.permute.xlu0 %1180
      %1184 = vset.pattern.permute.xlu0 0
      %1185 = vperm.xlu0 %1184, %v1067
      %v1186 = vpop.permute.xlu0 %1185
      %1189 = vset.pattern.permute.xlu0 0
      %1190 = vperm.xlu0 %1189, %v1068
      %v1191 = vpop.permute.xlu0 %1190
      %1194 = vset.pattern.permute.xlu0 0
      %1195 = vperm.xlu0 %1194, %v1069
      %v1196 = vpop.permute.xlu0 %1195
      %1199 = vset.pattern.permute.xlu0 0
      %1200 = vperm.xlu0 %1199, %v1070
      %v1201 = vpop.permute.xlu0 %1200
      %1204 = vset.pattern.permute.xlu0 0
      %1205 = vperm.xlu0 %1204, %v1071
      %v1206 = vpop.permute.xlu0 %1205
      %1209 = vset.pattern.permute.xlu0 0
      %1210 = vperm.xlu0 %1209, %v1072
      %v1211 = vpop.permute.xlu0 %1210
      %1214 = vset.pattern.permute.xlu0 0
      %1215 = vperm.xlu0 %1214, %v1073
      %v1216 = vpop.permute.xlu0 %1215
      %1219 = vset.pattern.permute.xlu0 0
      %1220 = vperm.xlu0 %1219, %v1074
      %v1221 = vpop.permute.xlu0 %1220
      %1224 = vset.pattern.permute.xlu0 0
      %1225 = vperm.xlu0 %1224, %v1075
      %v1226 = vpop.permute.xlu0 %1225
      %1229 = vset.pattern.permute.xlu0 0
      %1230 = vperm.xlu0 %1229, %v1076
      %v1231 = vpop.permute.xlu0 %1230
      %1234 = vset.pattern.permute.xlu0 0
      %1235 = vperm.xlu0 %1234, %v1077
      %v1236 = vpop.permute.xlu0 %1235
      %v1238 = vmul.f32 %v750, %v1081
      %v1239 = vmul.f32 %v751, %v1086
      %v1240 = vmul.f32 %v752, %v1091
      %v1241 = vmul.f32 %v753, %v1096
      %v1242 = vmul.f32 %v754, %v1101
      %v1243 = vmul.f32 %v755, %v1106
      %v1244 = vmul.f32 %v756, %v1111
      %v1245 = vmul.f32 %v757, %v1116
      %v1246 = vmul.f32 %v758, %v1121
      %v1247 = vmul.f32 %v759, %v1126
      %v1248 = vmul.f32 %v760, %v1131
      %v1249 = vmul.f32 %v761, %v1136
      %v1250 = vmul.f32 %v762, %v1141
      %v1251 = vmul.f32 %v763, %v1146
      %v1252 = vmul.f32 %v764, %v1151
      %v1253 = vmul.f32 %v765, %v1156
      %v1254 = vmul.f32 %v766, %v1161
      %v1255 = vmul.f32 %v767, %v1166
      %v1256 = vmul.f32 %v768, %v1171
      %v1257 = vmul.f32 %v769, %v1176
      %v1258 = vmul.f32 %v770, %v1181
      %v1259 = vmul.f32 %v771, %v1186
      %v1260 = vmul.f32 %v772, %v1191
      %v1261 = vmul.f32 %v773, %v1196
      %v1262 = vmul.f32 %v774, %v1201
      %v1263 = vmul.f32 %v775, %v1206
      %v1264 = vmul.f32 %v776, %v1211
      %v1265 = vmul.f32 %v777, %v1216
      %v1266 = vmul.f32 %v778, %v1221
      %v1267 = vmul.f32 %v779, %v1226
      %v1268 = vmul.f32 %v780, %v1231
      %v1269 = vmul.f32 %v781, %v1236
      %v1270 = vand.u32 2147483647, %v1238
      %v1271 = vand.u32 2147483647, %v1239
      %v1272 = vand.u32 2147483647, %v1242
      %v1273 = vand.u32 2147483647, %v1243
      %v1274 = vand.u32 2147483647, %v1246
      %v1275 = vand.u32 2147483647, %v1247
      %v1276 = vand.u32 2147483647, %v1250
      %v1277 = vand.u32 2147483647, %v1251
      %v1278 = vand.u32 2147483647, %v1254
      %v1279 = vand.u32 2147483647, %v1255
      %v1280 = vand.u32 2147483647, %v1258
      %v1281 = vand.u32 2147483647, %v1259
      %v1282 = vand.u32 2147483647, %v1262
      %v1283 = vand.u32 2147483647, %v1263
      %v1284 = vand.u32 2147483647, %v1266
      %v1285 = vand.u32 2147483647, %v1267
      %v1286 = vand.u32 2147483647, %v1240
      %v1287 = vand.u32 2147483647, %v1241
      %v1288 = vand.u32 2147483647, %v1244
      %v1289 = vand.u32 2147483647, %v1245
      %v1290 = vand.u32 2147483647, %v1248
      %v1291 = vand.u32 2147483647, %v1249
      %v1292 = vand.u32 2147483647, %v1252
      %v1293 = vand.u32 2147483647, %v1253
      %v1294 = vand.u32 2147483647, %v1256
      %v1295 = vand.u32 2147483647, %v1257
      %v1296 = vand.u32 2147483647, %v1260
      %v1297 = vand.u32 2147483647, %v1261
      %v1298 = vand.u32 2147483647, %v1264
      %v1299 = vand.u32 2147483647, %v1265
      %v1300 = vand.u32 2147483647, %v1268
      %v1301 = vand.u32 2147483647, %v1269
      %vm1302 = vcmp.ge.f32.partialorder %v1270, %v1286
      %vm1303 = vcmp.ge.f32.partialorder %v1271, %v1287
      %vm1304 = vcmp.ge.f32.partialorder %v1272, %v1288
      %vm1305 = vcmp.ge.f32.partialorder %v1273, %v1289
      %vm1306 = vcmp.ge.f32.partialorder %v1274, %v1290
      %vm1307 = vcmp.ge.f32.partialorder %v1275, %v1291
      %vm1308 = vcmp.ge.f32.partialorder %v1276, %v1292
      %vm1309 = vcmp.ge.f32.partialorder %v1277, %v1293
      %vm1310 = vcmp.ge.f32.partialorder %v1278, %v1294
      %vm1311 = vcmp.ge.f32.partialorder %v1279, %v1295
      %vm1312 = vcmp.ge.f32.partialorder %v1280, %v1296
      %vm1313 = vcmp.ge.f32.partialorder %v1281, %v1297
      %vm1314 = vcmp.ge.f32.partialorder %v1282, %v1298
      %vm1315 = vcmp.ge.f32.partialorder %v1283, %v1299
      %vm1316 = vcmp.ge.f32.partialorder %v1284, %v1300
      %vm1317 = vcmp.ge.f32.partialorder %v1285, %v1301
      %v1318 = vsel %vm1302, %v1238, %v1240
      %v1319 = vsel %vm1303, %v1239, %v1241
      %v1320 = vsel %vm1304, %v1242, %v1244
      %v1321 = vsel %vm1305, %v1243, %v1245
      %v1322 = vsel %vm1306, %v1246, %v1248
      %v1323 = vsel %vm1307, %v1247, %v1249
      %v1324 = vsel %vm1308, %v1250, %v1252
      %v1325 = vsel %vm1309, %v1251, %v1253
      %v1326 = vsel %vm1310, %v1254, %v1256
      %v1327 = vsel %vm1311, %v1255, %v1257
      %v1328 = vsel %vm1312, %v1258, %v1260
      %v1329 = vsel %vm1313, %v1259, %v1261
      %v1330 = vsel %vm1314, %v1262, %v1264
      %v1331 = vsel %vm1315, %v1263, %v1265
      %v1332 = vsel %vm1316, %v1266, %v1268
      %v1333 = vsel %vm1317, %v1267, %v1269
      %v1350 = vcombine.high %v1318, %v1318
      %v1352 = vunpack.c.l.s4 1983009808
      %v1353 = vunpack.c.0.s8 %v1352
      %v1354 = vlaneseq
      %v1355 = vshrl.u32 %v1354, 7
      %v1356 = vsub.s32 %v1353, %v1355
      %v1357 = vrot.slane %v1318, %v1356
      %v1359 = vunpack.c.l.s4 1983009808
      %v1360 = vunpack.c.0.s8 %v1359
      %v1361 = vlaneseq
      %v1362 = vshrl.u32 %v1361, 7
      %v1363 = vsub.s32 %v1360, %v1362
      %v1364 = vrot.slane %v1350, %v1363
      %v1365 = vcombine.high %v1357, %v1357
      %v1366 = vcombine.high %v1364, %v1364
      %v1367 = vcombine.high %v1319, %v1319
      %v1369 = vunpack.c.l.s4 1983009808
      %v1370 = vunpack.c.0.s8 %v1369
      %v1371 = vlaneseq
      %v1372 = vshrl.u32 %v1371, 7
      %v1373 = vsub.s32 %v1370, %v1372
      %v1374 = vrot.slane %v1319, %v1373
      %v1376 = vunpack.c.l.s4 1983009808
      %v1377 = vunpack.c.0.s8 %v1376
      %v1378 = vlaneseq
      %v1379 = vshrl.u32 %v1378, 7
      %v1380 = vsub.s32 %v1377, %v1379
      %v1381 = vrot.slane %v1367, %v1380
      %v1382 = vcombine.high %v1374, %v1374
      %v1383 = vcombine.high %v1381, %v1381
      %v1384 = vcombine.high %v1320, %v1320
      %v1386 = vunpack.c.l.s4 1983009808
      %v1387 = vunpack.c.0.s8 %v1386
      %v1388 = vlaneseq
      %v1389 = vshrl.u32 %v1388, 7
      %v1390 = vsub.s32 %v1387, %v1389
      %v1391 = vrot.slane %v1320, %v1390
      %v1393 = vunpack.c.l.s4 1983009808
      %v1394 = vunpack.c.0.s8 %v1393
      %v1395 = vlaneseq
      %v1396 = vshrl.u32 %v1395, 7
      %v1397 = vsub.s32 %v1394, %v1396
      %v1398 = vrot.slane %v1384, %v1397
      %v1399 = vcombine.high %v1391, %v1391
      %v1400 = vcombine.high %v1398, %v1398
      %v1401 = vcombine.high %v1321, %v1321
      %v1403 = vunpack.c.l.s4 1983009808
      %v1404 = vunpack.c.0.s8 %v1403
      %v1405 = vlaneseq
      %v1406 = vshrl.u32 %v1405, 7
      %v1407 = vsub.s32 %v1404, %v1406
      %v1408 = vrot.slane %v1321, %v1407
      %v1410 = vunpack.c.l.s4 1983009808
      %v1411 = vunpack.c.0.s8 %v1410
      %v1412 = vlaneseq
      %v1413 = vshrl.u32 %v1412, 7
      %v1414 = vsub.s32 %v1411, %v1413
      %v1415 = vrot.slane %v1401, %v1414
      %v1416 = vcombine.high %v1408, %v1408
      %v1417 = vcombine.high %v1415, %v1415
      %v1418 = vcombine.high %v1322, %v1322
      %v1420 = vunpack.c.l.s4 1983009808
      %v1421 = vunpack.c.0.s8 %v1420
      %v1422 = vlaneseq
      %v1423 = vshrl.u32 %v1422, 7
      %v1424 = vsub.s32 %v1421, %v1423
      %v1425 = vrot.slane %v1322, %v1424
      %v1427 = vunpack.c.l.s4 1983009808
      %v1428 = vunpack.c.0.s8 %v1427
      %v1429 = vlaneseq
      %v1430 = vshrl.u32 %v1429, 7
      %v1431 = vsub.s32 %v1428, %v1430
      %v1432 = vrot.slane %v1418, %v1431
      %v1433 = vcombine.high %v1425, %v1425
      %v1434 = vcombine.high %v1432, %v1432
      %v1435 = vcombine.high %v1323, %v1323
      %v1437 = vunpack.c.l.s4 1983009808
      %v1438 = vunpack.c.0.s8 %v1437
      %v1439 = vlaneseq
      %v1440 = vshrl.u32 %v1439, 7
      %v1441 = vsub.s32 %v1438, %v1440
      %v1442 = vrot.slane %v1323, %v1441
      %v1444 = vunpack.c.l.s4 1983009808
      %v1445 = vunpack.c.0.s8 %v1444
      %v1446 = vlaneseq
      %v1447 = vshrl.u32 %v1446, 7
      %v1448 = vsub.s32 %v1445, %v1447
      %v1449 = vrot.slane %v1435, %v1448
      %v1450 = vcombine.high %v1442, %v1442
      %v1451 = vcombine.high %v1449, %v1449
      %v1452 = vcombine.high %v1324, %v1324
      %v1454 = vunpack.c.l.s4 1983009808
      %v1455 = vunpack.c.0.s8 %v1454
      %v1456 = vlaneseq
      %v1457 = vshrl.u32 %v1456, 7
      %v1458 = vsub.s32 %v1455, %v1457
      %v1459 = vrot.slane %v1324, %v1458
      %v1461 = vunpack.c.l.s4 1983009808
      %v1462 = vunpack.c.0.s8 %v1461
      %v1463 = vlaneseq
      %v1464 = vshrl.u32 %v1463, 7
      %v1465 = vsub.s32 %v1462, %v1464
      %v1466 = vrot.slane %v1452, %v1465
      %v1467 = vcombine.high %v1459, %v1459
      %v1468 = vcombine.high %v1466, %v1466
      %v1469 = vcombine.high %v1325, %v1325
      %v1471 = vunpack.c.l.s4 1983009808
      %v1472 = vunpack.c.0.s8 %v1471
      %v1473 = vlaneseq
      %v1474 = vshrl.u32 %v1473, 7
      %v1475 = vsub.s32 %v1472, %v1474
      %v1476 = vrot.slane %v1325, %v1475
      %v1478 = vunpack.c.l.s4 1983009808
      %v1479 = vunpack.c.0.s8 %v1478
      %v1480 = vlaneseq
      %v1481 = vshrl.u32 %v1480, 7
      %v1482 = vsub.s32 %v1479, %v1481
      %v1483 = vrot.slane %v1469, %v1482
      %v1484 = vcombine.high %v1476, %v1476
      %v1485 = vcombine.high %v1483, %v1483
      %v1486 = vcombine.high %v1326, %v1326
      %v1488 = vunpack.c.l.s4 1983009808
      %v1489 = vunpack.c.0.s8 %v1488
      %v1490 = vlaneseq
      %v1491 = vshrl.u32 %v1490, 7
      %v1492 = vsub.s32 %v1489, %v1491
      %v1493 = vrot.slane %v1326, %v1492
      %v1495 = vunpack.c.l.s4 1983009808
      %v1496 = vunpack.c.0.s8 %v1495
      %v1497 = vlaneseq
      %v1498 = vshrl.u32 %v1497, 7
      %v1499 = vsub.s32 %v1496, %v1498
      %v1500 = vrot.slane %v1486, %v1499
      %v1501 = vcombine.high %v1493, %v1493
      %v1502 = vcombine.high %v1500, %v1500
      %v1503 = vcombine.high %v1327, %v1327
      %v1505 = vunpack.c.l.s4 1983009808
      %v1506 = vunpack.c.0.s8 %v1505
      %v1507 = vlaneseq
      %v1508 = vshrl.u32 %v1507, 7
      %v1509 = vsub.s32 %v1506, %v1508
      %v1510 = vrot.slane %v1327, %v1509
      %v1512 = vunpack.c.l.s4 1983009808
      %v1513 = vunpack.c.0.s8 %v1512
      %v1514 = vlaneseq
      %v1515 = vshrl.u32 %v1514, 7
      %v1516 = vsub.s32 %v1513, %v1515
      %v1517 = vrot.slane %v1503, %v1516
      %v1518 = vcombine.high %v1510, %v1510
      %v1519 = vcombine.high %v1517, %v1517
      %v1520 = vcombine.high %v1328, %v1328
      %v1522 = vunpack.c.l.s4 1983009808
      %v1523 = vunpack.c.0.s8 %v1522
      %v1524 = vlaneseq
      %v1525 = vshrl.u32 %v1524, 7
      %v1526 = vsub.s32 %v1523, %v1525
      %v1527 = vrot.slane %v1328, %v1526
      %v1529 = vunpack.c.l.s4 1983009808
      %v1530 = vunpack.c.0.s8 %v1529
      %v1531 = vlaneseq
      %v1532 = vshrl.u32 %v1531, 7
      %v1533 = vsub.s32 %v1530, %v1532
      %v1534 = vrot.slane %v1520, %v1533
      %v1535 = vcombine.high %v1527, %v1527
      %v1536 = vcombine.high %v1534, %v1534
      %v1537 = vcombine.high %v1329, %v1329
      %v1539 = vunpack.c.l.s4 1983009808
      %v1540 = vunpack.c.0.s8 %v1539
      %v1541 = vlaneseq
      %v1542 = vshrl.u32 %v1541, 7
      %v1543 = vsub.s32 %v1540, %v1542
      %v1544 = vrot.slane %v1329, %v1543
      %v1546 = vunpack.c.l.s4 1983009808
      %v1547 = vunpack.c.0.s8 %v1546
      %v1548 = vlaneseq
      %v1549 = vshrl.u32 %v1548, 7
      %v1550 = vsub.s32 %v1547, %v1549
      %v1551 = vrot.slane %v1537, %v1550
      %v1552 = vcombine.high %v1544, %v1544
      %v1553 = vcombine.high %v1551, %v1551
      %v1554 = vcombine.high %v1330, %v1330
      %v1556 = vunpack.c.l.s4 1983009808
      %v1557 = vunpack.c.0.s8 %v1556
      %v1558 = vlaneseq
      %v1559 = vshrl.u32 %v1558, 7
      %v1560 = vsub.s32 %v1557, %v1559
      %v1561 = vrot.slane %v1330, %v1560
      %v1563 = vunpack.c.l.s4 1983009808
      %v1564 = vunpack.c.0.s8 %v1563
      %v1565 = vlaneseq
      %v1566 = vshrl.u32 %v1565, 7
      %v1567 = vsub.s32 %v1564, %v1566
      %v1568 = vrot.slane %v1554, %v1567
      %v1569 = vcombine.high %v1561, %v1561
      %v1570 = vcombine.high %v1568, %v1568
      %v1571 = vcombine.high %v1331, %v1331
      %v1573 = vunpack.c.l.s4 1983009808
      %v1574 = vunpack.c.0.s8 %v1573
      %v1575 = vlaneseq
      %v1576 = vshrl.u32 %v1575, 7
      %v1577 = vsub.s32 %v1574, %v1576
      %v1578 = vrot.slane %v1331, %v1577
      %v1580 = vunpack.c.l.s4 1983009808
      %v1581 = vunpack.c.0.s8 %v1580
      %v1582 = vlaneseq
      %v1583 = vshrl.u32 %v1582, 7
      %v1584 = vsub.s32 %v1581, %v1583
      %v1585 = vrot.slane %v1571, %v1584
      %v1586 = vcombine.high %v1578, %v1578
      %v1587 = vcombine.high %v1585, %v1585
      %v1588 = vcombine.high %v1332, %v1332
      %v1590 = vunpack.c.l.s4 1983009808
      %v1591 = vunpack.c.0.s8 %v1590
      %v1592 = vlaneseq
      %v1593 = vshrl.u32 %v1592, 7
      %v1594 = vsub.s32 %v1591, %v1593
      %v1595 = vrot.slane %v1332, %v1594
      %v1597 = vunpack.c.l.s4 1983009808
      %v1598 = vunpack.c.0.s8 %v1597
      %v1599 = vlaneseq
      %v1600 = vshrl.u32 %v1599, 7
      %v1601 = vsub.s32 %v1598, %v1600
      %v1602 = vrot.slane %v1588, %v1601
      %v1603 = vcombine.high %v1595, %v1595
      %v1604 = vcombine.high %v1602, %v1602
      %v1605 = vcombine.high %v1333, %v1333
      %v1607 = vunpack.c.l.s4 1983009808
      %v1608 = vunpack.c.0.s8 %v1607
      %v1609 = vlaneseq
      %v1610 = vshrl.u32 %v1609, 7
      %v1611 = vsub.s32 %v1608, %v1610
      %v1612 = vrot.slane %v1333, %v1611
      %v1614 = vunpack.c.l.s4 1983009808
      %v1615 = vunpack.c.0.s8 %v1614
      %v1616 = vlaneseq
      %v1617 = vshrl.u32 %v1616, 7
      %v1618 = vsub.s32 %v1615, %v1617
      %v1619 = vrot.slane %v1605, %v1618
      %v1620 = vcombine.high %v1612, %v1612
      %v1621 = vcombine.high %v1619, %v1619
      %v1686 = vand.u32 2147483647, %v1357
      %v1687 = vand.u32 2147483647, %v1365
      %v1688 = vand.u32 2147483647, %v1364
      %v1689 = vand.u32 2147483647, %v1366
      %v1690 = vand.u32 2147483647, %v1374
      %v1691 = vand.u32 2147483647, %v1382
      %v1692 = vand.u32 2147483647, %v1381
      %v1693 = vand.u32 2147483647, %v1383
      %v1694 = vand.u32 2147483647, %v1391
      %v1695 = vand.u32 2147483647, %v1399
      %v1696 = vand.u32 2147483647, %v1398
      %v1697 = vand.u32 2147483647, %v1400
      %v1698 = vand.u32 2147483647, %v1408
      %v1699 = vand.u32 2147483647, %v1416
      %v1700 = vand.u32 2147483647, %v1415
      %v1701 = vand.u32 2147483647, %v1417
      %v1702 = vand.u32 2147483647, %v1425
      %v1703 = vand.u32 2147483647, %v1433
      %v1704 = vand.u32 2147483647, %v1432
      %v1705 = vand.u32 2147483647, %v1434
      %v1706 = vand.u32 2147483647, %v1442
      %v1707 = vand.u32 2147483647, %v1450
      %v1708 = vand.u32 2147483647, %v1449
      %v1709 = vand.u32 2147483647, %v1451
      %v1710 = vand.u32 2147483647, %v1459
      %v1711 = vand.u32 2147483647, %v1467
      %v1712 = vand.u32 2147483647, %v1466
      %v1713 = vand.u32 2147483647, %v1468
      %v1714 = vand.u32 2147483647, %v1476
      %v1715 = vand.u32 2147483647, %v1484
      %v1716 = vand.u32 2147483647, %v1483
      %v1717 = vand.u32 2147483647, %v1485
      %v1718 = vand.u32 2147483647, %v1493
      %v1719 = vand.u32 2147483647, %v1501
      %v1720 = vand.u32 2147483647, %v1500
      %v1721 = vand.u32 2147483647, %v1502
      %v1722 = vand.u32 2147483647, %v1510
      %v1723 = vand.u32 2147483647, %v1518
      %v1724 = vand.u32 2147483647, %v1517
      %v1725 = vand.u32 2147483647, %v1519
      %v1726 = vand.u32 2147483647, %v1527
      %v1727 = vand.u32 2147483647, %v1535
      %v1728 = vand.u32 2147483647, %v1534
      %v1729 = vand.u32 2147483647, %v1536
      %v1730 = vand.u32 2147483647, %v1544
      %v1731 = vand.u32 2147483647, %v1552
      %v1732 = vand.u32 2147483647, %v1551
      %v1733 = vand.u32 2147483647, %v1553
      %v1734 = vand.u32 2147483647, %v1561
      %v1735 = vand.u32 2147483647, %v1569
      %v1736 = vand.u32 2147483647, %v1568
      %v1737 = vand.u32 2147483647, %v1570
      %v1738 = vand.u32 2147483647, %v1578
      %v1739 = vand.u32 2147483647, %v1586
      %v1740 = vand.u32 2147483647, %v1585
      %v1741 = vand.u32 2147483647, %v1587
      %v1742 = vand.u32 2147483647, %v1595
      %v1743 = vand.u32 2147483647, %v1603
      %v1744 = vand.u32 2147483647, %v1602
      %v1745 = vand.u32 2147483647, %v1604
      %v1746 = vand.u32 2147483647, %v1612
      %v1747 = vand.u32 2147483647, %v1620
      %v1748 = vand.u32 2147483647, %v1619
      %v1749 = vand.u32 2147483647, %v1621
      %v1814 = vrot.slane %v1686, 7
      %v1815 = vrot.slane %v1814, 2
      %v1816 = vrot.slane %v1687, 7
      %v1817 = vrot.slane %v1816, 2
      %v1818 = vrot.slane %v1688, 7
      %v1819 = vrot.slane %v1818, 2
      %v1820 = vrot.slane %v1689, 7
      %v1821 = vrot.slane %v1820, 2
      %v1822 = vrot.slane %v1690, 7
      %v1823 = vrot.slane %v1822, 2
      %v1824 = vrot.slane %v1691, 7
      %v1825 = vrot.slane %v1824, 2
      %v1826 = vrot.slane %v1692, 7
      %v1827 = vrot.slane %v1826, 2
      %v1828 = vrot.slane %v1693, 7
      %v1829 = vrot.slane %v1828, 2
      %v1830 = vrot.slane %v1694, 7
      %v1831 = vrot.slane %v1830, 2
      %v1832 = vrot.slane %v1695, 7
      %v1833 = vrot.slane %v1832, 2
      %v1834 = vrot.slane %v1696, 7
      %v1835 = vrot.slane %v1834, 2
      %v1836 = vrot.slane %v1697, 7
      %v1837 = vrot.slane %v1836, 2
      %v1838 = vrot.slane %v1698, 7
      %v1839 = vrot.slane %v1838, 2
      %v1840 = vrot.slane %v1699, 7
      %v1841 = vrot.slane %v1840, 2
      %v1842 = vrot.slane %v1700, 7
      %v1843 = vrot.slane %v1842, 2
      %v1844 = vrot.slane %v1701, 7
      %v1845 = vrot.slane %v1844, 2
      %v1846 = vrot.slane %v1702, 7
      %v1847 = vrot.slane %v1846, 2
      %v1848 = vrot.slane %v1703, 7
      %v1849 = vrot.slane %v1848, 2
      %v1850 = vrot.slane %v1704, 7
      %v1851 = vrot.slane %v1850, 2
      %v1852 = vrot.slane %v1705, 7
      %v1853 = vrot.slane %v1852, 2
      %v1854 = vrot.slane %v1706, 7
      %v1855 = vrot.slane %v1854, 2
      %v1856 = vrot.slane %v1707, 7
      %v1857 = vrot.slane %v1856, 2
      %v1858 = vrot.slane %v1708, 7
      %v1859 = vrot.slane %v1858, 2
      %v1860 = vrot.slane %v1709, 7
      %v1861 = vrot.slane %v1860, 2
      %v1862 = vrot.slane %v1710, 7
      %v1863 = vrot.slane %v1862, 2
      %v1864 = vrot.slane %v1711, 7
      %v1865 = vrot.slane %v1864, 2
      %v1866 = vrot.slane %v1712, 7
      %v1867 = vrot.slane %v1866, 2
      %v1868 = vrot.slane %v1713, 7
      %v1869 = vrot.slane %v1868, 2
      %v1870 = vrot.slane %v1714, 7
      %v1871 = vrot.slane %v1870, 2
      %v1872 = vrot.slane %v1715, 7
      %v1873 = vrot.slane %v1872, 2
      %v1874 = vrot.slane %v1716, 7
      %v1875 = vrot.slane %v1874, 2
      %v1876 = vrot.slane %v1717, 7
      %v1877 = vrot.slane %v1876, 2
      %v1878 = vrot.slane %v1718, 7
      %v1879 = vrot.slane %v1878, 2
      %v1880 = vrot.slane %v1719, 7
      %v1881 = vrot.slane %v1880, 2
      %v1882 = vrot.slane %v1720, 7
      %v1883 = vrot.slane %v1882, 2
      %v1884 = vrot.slane %v1721, 7
      %v1885 = vrot.slane %v1884, 2
      %v1886 = vrot.slane %v1722, 7
      %v1887 = vrot.slane %v1886, 2
      %v1888 = vrot.slane %v1723, 7
      %v1889 = vrot.slane %v1888, 2
      %v1890 = vrot.slane %v1724, 7
      %v1891 = vrot.slane %v1890, 2
      %v1892 = vrot.slane %v1725, 7
      %v1893 = vrot.slane %v1892, 2
      %v1894 = vrot.slane %v1726, 7
      %v1895 = vrot.slane %v1894, 2
      %v1896 = vrot.slane %v1727, 7
      %v1897 = vrot.slane %v1896, 2
      %v1898 = vrot.slane %v1728, 7
      %v1899 = vrot.slane %v1898, 2
      %v1900 = vrot.slane %v1729, 7
      %v1901 = vrot.slane %v1900, 2
      %v1902 = vrot.slane %v1730, 7
      %v1903 = vrot.slane %v1902, 2
      %v1904 = vrot.slane %v1731, 7
      %v1905 = vrot.slane %v1904, 2
      %v1906 = vrot.slane %v1732, 7
      %v1907 = vrot.slane %v1906, 2
      %v1908 = vrot.slane %v1733, 7
      %v1909 = vrot.slane %v1908, 2
      %v1910 = vrot.slane %v1734, 7
      %v1911 = vrot.slane %v1910, 2
      %v1912 = vrot.slane %v1735, 7
      %v1913 = vrot.slane %v1912, 2
      %v1914 = vrot.slane %v1736, 7
      %v1915 = vrot.slane %v1914, 2
      %v1916 = vrot.slane %v1737, 7
      %v1917 = vrot.slane %v1916, 2
      %v1918 = vrot.slane %v1738, 7
      %v1919 = vrot.slane %v1918, 2
      %v1920 = vrot.slane %v1739, 7
      %v1921 = vrot.slane %v1920, 2
      %v1922 = vrot.slane %v1740, 7
      %v1923 = vrot.slane %v1922, 2
      %v1924 = vrot.slane %v1741, 7
      %v1925 = vrot.slane %v1924, 2
      %v1926 = vrot.slane %v1742, 7
      %v1927 = vrot.slane %v1926, 2
      %v1928 = vrot.slane %v1743, 7
      %v1929 = vrot.slane %v1928, 2
      %v1930 = vrot.slane %v1744, 7
      %v1931 = vrot.slane %v1930, 2
      %v1932 = vrot.slane %v1745, 7
      %v1933 = vrot.slane %v1932, 2
      %v1934 = vrot.slane %v1746, 7
      %v1935 = vrot.slane %v1934, 2
      %v1936 = vrot.slane %v1747, 7
      %v1937 = vrot.slane %v1936, 2
      %v1938 = vrot.slane %v1748, 7
      %v1939 = vrot.slane %v1938, 2
      %v1940 = vrot.slane %v1749, 7
      %v1941 = vrot.slane %v1940, 2
      %vm2006 = vcmp.ge.f32.partialorder %v1686, %v1815
      %vm2007 = vcmp.ge.f32.partialorder %v1687, %v1817
      %vm2008 = vcmp.ge.f32.partialorder %v1688, %v1819
      %vm2009 = vcmp.ge.f32.partialorder %v1689, %v1821
      %vm2010 = vcmp.ge.f32.partialorder %v1690, %v1823
      %vm2011 = vcmp.ge.f32.partialorder %v1691, %v1825
      %vm2012 = vcmp.ge.f32.partialorder %v1692, %v1827
      %vm2013 = vcmp.ge.f32.partialorder %v1693, %v1829
      %vm2014 = vcmp.ge.f32.partialorder %v1694, %v1831
      %vm2015 = vcmp.ge.f32.partialorder %v1695, %v1833
      %vm2016 = vcmp.ge.f32.partialorder %v1696, %v1835
      %vm2017 = vcmp.ge.f32.partialorder %v1697, %v1837
      %vm2018 = vcmp.ge.f32.partialorder %v1698, %v1839
      %vm2019 = vcmp.ge.f32.partialorder %v1699, %v1841
      %vm2020 = vcmp.ge.f32.partialorder %v1700, %v1843
      %vm2021 = vcmp.ge.f32.partialorder %v1701, %v1845
      %vm2022 = vcmp.ge.f32.partialorder %v1702, %v1847
      %vm2023 = vcmp.ge.f32.partialorder %v1703, %v1849
      %vm2024 = vcmp.ge.f32.partialorder %v1704, %v1851
      %vm2025 = vcmp.ge.f32.partialorder %v1705, %v1853
      %vm2026 = vcmp.ge.f32.partialorder %v1706, %v1855
      %vm2027 = vcmp.ge.f32.partialorder %v1707, %v1857
      %vm2028 = vcmp.ge.f32.partialorder %v1708, %v1859
      %vm2029 = vcmp.ge.f32.partialorder %v1709, %v1861
      %vm2030 = vcmp.ge.f32.partialorder %v1710, %v1863
      %vm2031 = vcmp.ge.f32.partialorder %v1711, %v1865
      %vm2032 = vcmp.ge.f32.partialorder %v1712, %v1867
      %vm2033 = vcmp.ge.f32.partialorder %v1713, %v1869
      %vm2034 = vcmp.ge.f32.partialorder %v1714, %v1871
      %vm2035 = vcmp.ge.f32.partialorder %v1715, %v1873
      %vm2036 = vcmp.ge.f32.partialorder %v1716, %v1875
      %vm2037 = vcmp.ge.f32.partialorder %v1717, %v1877
      %vm2038 = vcmp.ge.f32.partialorder %v1718, %v1879
      %vm2039 = vcmp.ge.f32.partialorder %v1719, %v1881
      %vm2040 = vcmp.ge.f32.partialorder %v1720, %v1883
      %vm2041 = vcmp.ge.f32.partialorder %v1721, %v1885
      %vm2042 = vcmp.ge.f32.partialorder %v1722, %v1887
      %vm2043 = vcmp.ge.f32.partialorder %v1723, %v1889
      %vm2044 = vcmp.ge.f32.partialorder %v1724, %v1891
      %vm2045 = vcmp.ge.f32.partialorder %v1725, %v1893
      %vm2046 = vcmp.ge.f32.partialorder %v1726, %v1895
      %vm2047 = vcmp.ge.f32.partialorder %v1727, %v1897
      %vm2048 = vcmp.ge.f32.partialorder %v1728, %v1899
      %vm2049 = vcmp.ge.f32.partialorder %v1729, %v1901
      %vm2050 = vcmp.ge.f32.partialorder %v1730, %v1903
      %vm2051 = vcmp.ge.f32.partialorder %v1731, %v1905
      %vm2052 = vcmp.ge.f32.partialorder %v1732, %v1907
      %vm2053 = vcmp.ge.f32.partialorder %v1733, %v1909
      %vm2054 = vcmp.ge.f32.partialorder %v1734, %v1911
      %vm2055 = vcmp.ge.f32.partialorder %v1735, %v1913
      %vm2056 = vcmp.ge.f32.partialorder %v1736, %v1915
      %vm2057 = vcmp.ge.f32.partialorder %v1737, %v1917
      %vm2058 = vcmp.ge.f32.partialorder %v1738, %v1919
      %vm2059 = vcmp.ge.f32.partialorder %v1739, %v1921
      %vm2060 = vcmp.ge.f32.partialorder %v1740, %v1923
      %vm2061 = vcmp.ge.f32.partialorder %v1741, %v1925
      %vm2062 = vcmp.ge.f32.partialorder %v1742, %v1927
      %vm2063 = vcmp.ge.f32.partialorder %v1743, %v1929
      %vm2064 = vcmp.ge.f32.partialorder %v1744, %v1931
      %vm2065 = vcmp.ge.f32.partialorder %v1745, %v1933
      %vm2066 = vcmp.ge.f32.partialorder %v1746, %v1935
      %vm2067 = vcmp.ge.f32.partialorder %v1747, %v1937
      %vm2068 = vcmp.ge.f32.partialorder %v1748, %v1939
      %vm2069 = vcmp.ge.f32.partialorder %v1749, %v1941
      %v2070 = vrot.slane %v1357, 7
      %v2071 = vrot.slane %v2070, 2
      %v2072 = vrot.slane %v1365, 7
      %v2073 = vrot.slane %v2072, 2
      %v2074 = vrot.slane %v1364, 7
      %v2075 = vrot.slane %v2074, 2
      %v2076 = vrot.slane %v1366, 7
      %v2077 = vrot.slane %v2076, 2
      %v2078 = vrot.slane %v1374, 7
      %v2079 = vrot.slane %v2078, 2
      %v2080 = vrot.slane %v1382, 7
      %v2081 = vrot.slane %v2080, 2
      %v2082 = vrot.slane %v1381, 7
      %v2083 = vrot.slane %v2082, 2
      %v2084 = vrot.slane %v1383, 7
      %v2085 = vrot.slane %v2084, 2
      %v2086 = vrot.slane %v1391, 7
      %v2087 = vrot.slane %v2086, 2
      %v2088 = vrot.slane %v1399, 7
      %v2089 = vrot.slane %v2088, 2
      %v2090 = vrot.slane %v1398, 7
      %v2091 = vrot.slane %v2090, 2
      %v2092 = vrot.slane %v1400, 7
      %v2093 = vrot.slane %v2092, 2
      %v2094 = vrot.slane %v1408, 7
      %v2095 = vrot.slane %v2094, 2
      %v2096 = vrot.slane %v1416, 7
      %v2097 = vrot.slane %v2096, 2
      %v2098 = vrot.slane %v1415, 7
      %v2099 = vrot.slane %v2098, 2
      %v2100 = vrot.slane %v1417, 7
      %v2101 = vrot.slane %v2100, 2
      %v2102 = vrot.slane %v1425, 7
      %v2103 = vrot.slane %v2102, 2
      %v2104 = vrot.slane %v1433, 7
      %v2105 = vrot.slane %v2104, 2
      %v2106 = vrot.slane %v1432, 7
      %v2107 = vrot.slane %v2106, 2
      %v2108 = vrot.slane %v1434, 7
      %v2109 = vrot.slane %v2108, 2
      %v2110 = vrot.slane %v1442, 7
      %v2111 = vrot.slane %v2110, 2
      %v2112 = vrot.slane %v1450, 7
      %v2113 = vrot.slane %v2112, 2
      %v2114 = vrot.slane %v1449, 7
      %v2115 = vrot.slane %v2114, 2
      %v2116 = vrot.slane %v1451, 7
      %v2117 = vrot.slane %v2116, 2
      %v2118 = vrot.slane %v1459, 7
      %v2119 = vrot.slane %v2118, 2
      %v2120 = vrot.slane %v1467, 7
      %v2121 = vrot.slane %v2120, 2
      %v2122 = vrot.slane %v1466, 7
      %v2123 = vrot.slane %v2122, 2
      %v2124 = vrot.slane %v1468, 7
      %v2125 = vrot.slane %v2124, 2
      %v2126 = vrot.slane %v1476, 7
      %v2127 = vrot.slane %v2126, 2
      %v2128 = vrot.slane %v1484, 7
      %v2129 = vrot.slane %v2128, 2
      %v2130 = vrot.slane %v1483, 7
      %v2131 = vrot.slane %v2130, 2
      %v2132 = vrot.slane %v1485, 7
      %v2133 = vrot.slane %v2132, 2
      %v2134 = vrot.slane %v1493, 7
      %v2135 = vrot.slane %v2134, 2
      %v2136 = vrot.slane %v1501, 7
      %v2137 = vrot.slane %v2136, 2
      %v2138 = vrot.slane %v1500, 7
      %v2139 = vrot.slane %v2138, 2
      %v2140 = vrot.slane %v1502, 7
      %v2141 = vrot.slane %v2140, 2
      %v2142 = vrot.slane %v1510, 7
      %v2143 = vrot.slane %v2142, 2
      %v2144 = vrot.slane %v1518, 7
      %v2145 = vrot.slane %v2144, 2
      %v2146 = vrot.slane %v1517, 7
      %v2147 = vrot.slane %v2146, 2
      %v2148 = vrot.slane %v1519, 7
      %v2149 = vrot.slane %v2148, 2
      %v2150 = vrot.slane %v1527, 7
      %v2151 = vrot.slane %v2150, 2
      %v2152 = vrot.slane %v1535, 7
      %v2153 = vrot.slane %v2152, 2
      %v2154 = vrot.slane %v1534, 7
      %v2155 = vrot.slane %v2154, 2
      %v2156 = vrot.slane %v1536, 7
      %v2157 = vrot.slane %v2156, 2
      %v2158 = vrot.slane %v1544, 7
      %v2159 = vrot.slane %v2158, 2
      %v2160 = vrot.slane %v1552, 7
      %v2161 = vrot.slane %v2160, 2
      %v2162 = vrot.slane %v1551, 7
      %v2163 = vrot.slane %v2162, 2
      %v2164 = vrot.slane %v1553, 7
      %v2165 = vrot.slane %v2164, 2
      %v2166 = vrot.slane %v1561, 7
      %v2167 = vrot.slane %v2166, 2
      %v2168 = vrot.slane %v1569, 7
      %v2169 = vrot.slane %v2168, 2
      %v2170 = vrot.slane %v1568, 7
      %v2171 = vrot.slane %v2170, 2
      %v2172 = vrot.slane %v1570, 7
      %v2173 = vrot.slane %v2172, 2
      %v2174 = vrot.slane %v1578, 7
      %v2175 = vrot.slane %v2174, 2
      %v2176 = vrot.slane %v1586, 7
      %v2177 = vrot.slane %v2176, 2
      %v2178 = vrot.slane %v1585, 7
      %v2179 = vrot.slane %v2178, 2
      %v2180 = vrot.slane %v1587, 7
      %v2181 = vrot.slane %v2180, 2
      %v2182 = vrot.slane %v1595, 7
      %v2183 = vrot.slane %v2182, 2
      %v2184 = vrot.slane %v1603, 7
      %v2185 = vrot.slane %v2184, 2
      %v2186 = vrot.slane %v1602, 7
      %v2187 = vrot.slane %v2186, 2
      %v2188 = vrot.slane %v1604, 7
      %v2189 = vrot.slane %v2188, 2
      %v2190 = vrot.slane %v1612, 7
      %v2191 = vrot.slane %v2190, 2
      %v2192 = vrot.slane %v1620, 7
      %v2193 = vrot.slane %v2192, 2
      %v2194 = vrot.slane %v1619, 7
      %v2195 = vrot.slane %v2194, 2
      %v2196 = vrot.slane %v1621, 7
      %v2197 = vrot.slane %v2196, 2
      %v2262 = vsel %vm2006, %v1357, %v2071
      %v2263 = vsel %vm2007, %v1365, %v2073
      %v2264 = vsel %vm2008, %v1364, %v2075
      %v2265 = vsel %vm2009, %v1366, %v2077
      %v2266 = vsel %vm2010, %v1374, %v2079
      %v2267 = vsel %vm2011, %v1382, %v2081
      %v2268 = vsel %vm2012, %v1381, %v2083
      %v2269 = vsel %vm2013, %v1383, %v2085
      %v2270 = vsel %vm2014, %v1391, %v2087
      %v2271 = vsel %vm2015, %v1399, %v2089
      %v2272 = vsel %vm2016, %v1398, %v2091
      %v2273 = vsel %vm2017, %v1400, %v2093
      %v2274 = vsel %vm2018, %v1408, %v2095
      %v2275 = vsel %vm2019, %v1416, %v2097
      %v2276 = vsel %vm2020, %v1415, %v2099
      %v2277 = vsel %vm2021, %v1417, %v2101
      %v2278 = vsel %vm2022, %v1425, %v2103
      %v2279 = vsel %vm2023, %v1433, %v2105
      %v2280 = vsel %vm2024, %v1432, %v2107
      %v2281 = vsel %vm2025, %v1434, %v2109
      %v2282 = vsel %vm2026, %v1442, %v2111
      %v2283 = vsel %vm2027, %v1450, %v2113
      %v2284 = vsel %vm2028, %v1449, %v2115
      %v2285 = vsel %vm2029, %v1451, %v2117
      %v2286 = vsel %vm2030, %v1459, %v2119
      %v2287 = vsel %vm2031, %v1467, %v2121
      %v2288 = vsel %vm2032, %v1466, %v2123
      %v2289 = vsel %vm2033, %v1468, %v2125
      %v2290 = vsel %vm2034, %v1476, %v2127
      %v2291 = vsel %vm2035, %v1484, %v2129
      %v2292 = vsel %vm2036, %v1483, %v2131
      %v2293 = vsel %vm2037, %v1485, %v2133
      %v2294 = vsel %vm2038, %v1493, %v2135
      %v2295 = vsel %vm2039, %v1501, %v2137
      %v2296 = vsel %vm2040, %v1500, %v2139
      %v2297 = vsel %vm2041, %v1502, %v2141
      %v2298 = vsel %vm2042, %v1510, %v2143
      %v2299 = vsel %vm2043, %v1518, %v2145
      %v2300 = vsel %vm2044, %v1517, %v2147
      %v2301 = vsel %vm2045, %v1519, %v2149
      %v2302 = vsel %vm2046, %v1527, %v2151
      %v2303 = vsel %vm2047, %v1535, %v2153
      %v2304 = vsel %vm2048, %v1534, %v2155
      %v2305 = vsel %vm2049, %v1536, %v2157
      %v2306 = vsel %vm2050, %v1544, %v2159
      %v2307 = vsel %vm2051, %v1552, %v2161
      %v2308 = vsel %vm2052, %v1551, %v2163
      %v2309 = vsel %vm2053, %v1553, %v2165
      %v2310 = vsel %vm2054, %v1561, %v2167
      %v2311 = vsel %vm2055, %v1569, %v2169
      %v2312 = vsel %vm2056, %v1568, %v2171
      %v2313 = vsel %vm2057, %v1570, %v2173
      %v2314 = vsel %vm2058, %v1578, %v2175
      %v2315 = vsel %vm2059, %v1586, %v2177
      %v2316 = vsel %vm2060, %v1585, %v2179
      %v2317 = vsel %vm2061, %v1587, %v2181
      %v2318 = vsel %vm2062, %v1595, %v2183
      %v2319 = vsel %vm2063, %v1603, %v2185
      %v2320 = vsel %vm2064, %v1602, %v2187
      %v2321 = vsel %vm2065, %v1604, %v2189
      %v2322 = vsel %vm2066, %v1612, %v2191
      %v2323 = vsel %vm2067, %v1620, %v2193
      %v2324 = vsel %vm2068, %v1619, %v2195
      %v2325 = vsel %vm2069, %v1621, %v2197
      %2326 = vst.msk [vmem:[#allocation2] sm:$0xff] %vm268, 0.0
      %vm2327 = vcmask 123904
      %2328 = vst.msk [vmem:[#allocation2 + $0x8] sm:$0x3] %vm2327, 0.0
      %2329 = vst.msk [vmem:[#allocation2 + $0x10] sm:$0xff] %vm268, 0.0
      %2330 = vst.msk [vmem:[#allocation2 + $0x18] sm:$0x3] %vm2327, 0.0
      %2331 = vst.msk [vmem:[#allocation2 + $0x20] sm:$0xff] %vm268, 0.0
      %2332 = vst.msk [vmem:[#allocation2 + $0x28] sm:$0x3] %vm2327, 0.0
      %2333 = vst.msk [vmem:[#allocation2 + $0x30] sm:$0xff] %vm268, 0.0
      %2334 = vst.msk [vmem:[#allocation2 + $0x38] sm:$0x3] %vm2327, 0.0
      %2335 = vst.msk [vmem:[#allocation2 + $0x40] sm:$0xff] %vm268, 0.0
      %2336 = vst.msk [vmem:[#allocation2 + $0x48] sm:$0x3] %vm2327, 0.0
      %2337 = vst.msk [vmem:[#allocation2 + $0x50] sm:$0xff] %vm268, 0.0
      %2338 = vst.msk [vmem:[#allocation2 + $0x58] sm:$0x3] %vm2327, 0.0
      %2339 = vst.msk [vmem:[#allocation2 + $0x60] sm:$0xff] %vm268, 0.0
      %2340 = vst.msk [vmem:[#allocation2 + $0x68] sm:$0x3] %vm2327, 0.0
      %2341 = vst.msk [vmem:[#allocation2 + $0x70] sm:$0xff] %vm268, 0.0
      %2342 = vst.msk [vmem:[#allocation2 + $0x78] sm:$0x3] %vm2327, 0.0
      %2343 = vst.msk [vmem:[#allocation2 + $0x80] sm:$0xff] %vm268, 0.0
      %2344 = vst.msk [vmem:[#allocation2 + $0x88] sm:$0x3] %vm2327, 0.0
      %2345 = vst.msk [vmem:[#allocation2 + $0x90] sm:$0xff] %vm268, 0.0
      %2346 = vst.msk [vmem:[#allocation2 + $0x98] sm:$0x3] %vm2327, 0.0
      %v2411 = vlaneseq
      %v2412 = vshrl.u32 %v2411, 7
      %v2413 = vsub.s32 0, %v2412
      %v2414 = vrot.slane %v2262, %v2413
      %v2415 = vlaneseq
      %v2416 = vshrl.u32 %v2415, 7
      %v2417 = vsub.s32 0, %v2416
      %v2418 = vrot.slane %v2263, %v2417
      %v2419 = vlaneseq
      %v2420 = vshrl.u32 %v2419, 7
      %v2421 = vsub.s32 0, %v2420
      %v2422 = vrot.slane %v2264, %v2421
      %v2423 = vlaneseq
      %v2424 = vshrl.u32 %v2423, 7
      %v2425 = vsub.s32 0, %v2424
      %v2426 = vrot.slane %v2265, %v2425
      %v2427 = vlaneseq
      %v2428 = vshrl.u32 %v2427, 7
      %v2429 = vsub.s32 0, %v2428
      %v2430 = vrot.slane %v2266, %v2429
      %v2431 = vlaneseq
      %v2432 = vshrl.u32 %v2431, 7
      %v2433 = vsub.s32 0, %v2432
      %v2434 = vrot.slane %v2267, %v2433
      %v2435 = vlaneseq
      %v2436 = vshrl.u32 %v2435, 7
      %v2437 = vsub.s32 0, %v2436
      %v2438 = vrot.slane %v2268, %v2437
      %v2439 = vlaneseq
      %v2440 = vshrl.u32 %v2439, 7
      %v2441 = vsub.s32 0, %v2440
      %v2442 = vrot.slane %v2269, %v2441
      %v2443 = vlaneseq
      %v2444 = vshrl.u32 %v2443, 7
      %v2445 = vsub.s32 0, %v2444
      %v2446 = vrot.slane %v2270, %v2445
      %v2447 = vlaneseq
      %v2448 = vshrl.u32 %v2447, 7
      %v2449 = vsub.s32 0, %v2448
      %v2450 = vrot.slane %v2271, %v2449
      %v2451 = vlaneseq
      %v2452 = vshrl.u32 %v2451, 7
      %v2453 = vsub.s32 0, %v2452
      %v2454 = vrot.slane %v2272, %v2453
      %v2455 = vlaneseq
      %v2456 = vshrl.u32 %v2455, 7
      %v2457 = vsub.s32 0, %v2456
      %v2458 = vrot.slane %v2273, %v2457
      %v2459 = vlaneseq
      %v2460 = vshrl.u32 %v2459, 7
      %v2461 = vsub.s32 0, %v2460
      %v2462 = vrot.slane %v2274, %v2461
      %v2463 = vlaneseq
      %v2464 = vshrl.u32 %v2463, 7
      %v2465 = vsub.s32 0, %v2464
      %v2466 = vrot.slane %v2275, %v2465
      %v2467 = vlaneseq
      %v2468 = vshrl.u32 %v2467, 7
      %v2469 = vsub.s32 0, %v2468
      %v2470 = vrot.slane %v2276, %v2469
      %v2471 = vlaneseq
      %v2472 = vshrl.u32 %v2471, 7
      %v2473 = vsub.s32 0, %v2472
      %v2474 = vrot.slane %v2277, %v2473
      %v2475 = vlaneseq
      %v2476 = vshrl.u32 %v2475, 7
      %v2477 = vsub.s32 0, %v2476
      %v2478 = vrot.slane %v2278, %v2477
      %v2479 = vlaneseq
      %v2480 = vshrl.u32 %v2479, 7
      %v2481 = vsub.s32 0, %v2480
      %v2482 = vrot.slane %v2279, %v2481
      %v2483 = vlaneseq
      %v2484 = vshrl.u32 %v2483, 7
      %v2485 = vsub.s32 0, %v2484
      %v2486 = vrot.slane %v2280, %v2485
      %v2487 = vlaneseq
      %v2488 = vshrl.u32 %v2487, 7
      %v2489 = vsub.s32 0, %v2488
      %v2490 = vrot.slane %v2281, %v2489
      %v2491 = vlaneseq
      %v2492 = vshrl.u32 %v2491, 7
      %v2493 = vsub.s32 0, %v2492
      %v2494 = vrot.slane %v2282, %v2493
      %v2495 = vlaneseq
      %v2496 = vshrl.u32 %v2495, 7
      %v2497 = vsub.s32 0, %v2496
      %v2498 = vrot.slane %v2283, %v2497
      %v2499 = vlaneseq
      %v2500 = vshrl.u32 %v2499, 7
      %v2501 = vsub.s32 0, %v2500
      %v2502 = vrot.slane %v2284, %v2501
      %v2503 = vlaneseq
      %v2504 = vshrl.u32 %v2503, 7
      %v2505 = vsub.s32 0, %v2504
      %v2506 = vrot.slane %v2285, %v2505
      %v2507 = vlaneseq
      %v2508 = vshrl.u32 %v2507, 7
      %v2509 = vsub.s32 0, %v2508
      %v2510 = vrot.slane %v2286, %v2509
      %v2511 = vlaneseq
      %v2512 = vshrl.u32 %v2511, 7
      %v2513 = vsub.s32 0, %v2512
      %v2514 = vrot.slane %v2287, %v2513
      %v2515 = vlaneseq
      %v2516 = vshrl.u32 %v2515, 7
      %v2517 = vsub.s32 0, %v2516
      %v2518 = vrot.slane %v2288, %v2517
      %v2519 = vlaneseq
      %v2520 = vshrl.u32 %v2519, 7
      %v2521 = vsub.s32 0, %v2520
      %v2522 = vrot.slane %v2289, %v2521
      %v2523 = vlaneseq
      %v2524 = vshrl.u32 %v2523, 7
      %v2525 = vsub.s32 0, %v2524
      %v2526 = vrot.slane %v2290, %v2525
      %v2527 = vlaneseq
      %v2528 = vshrl.u32 %v2527, 7
      %v2529 = vsub.s32 0, %v2528
      %v2530 = vrot.slane %v2291, %v2529
      %v2531 = vlaneseq
      %v2532 = vshrl.u32 %v2531, 7
      %v2533 = vsub.s32 0, %v2532
      %v2534 = vrot.slane %v2292, %v2533
      %v2535 = vlaneseq
      %v2536 = vshrl.u32 %v2535, 7
      %v2537 = vsub.s32 0, %v2536
      %v2538 = vrot.slane %v2293, %v2537
      %v2539 = vlaneseq
      %v2540 = vshrl.u32 %v2539, 7
      %v2541 = vsub.s32 0, %v2540
      %v2542 = vrot.slane %v2294, %v2541
      %v2543 = vlaneseq
      %v2544 = vshrl.u32 %v2543, 7
      %v2545 = vsub.s32 0, %v2544
      %v2546 = vrot.slane %v2295, %v2545
      %v2547 = vlaneseq
      %v2548 = vshrl.u32 %v2547, 7
      %v2549 = vsub.s32 0, %v2548
      %v2550 = vrot.slane %v2296, %v2549
      %v2551 = vlaneseq
      %v2552 = vshrl.u32 %v2551, 7
      %v2553 = vsub.s32 0, %v2552
      %v2554 = vrot.slane %v2297, %v2553
      %v2555 = vlaneseq
      %v2556 = vshrl.u32 %v2555, 7
      %v2557 = vsub.s32 0, %v2556
      %v2558 = vrot.slane %v2298, %v2557
      %v2559 = vlaneseq
      %v2560 = vshrl.u32 %v2559, 7
      %v2561 = vsub.s32 0, %v2560
      %v2562 = vrot.slane %v2299, %v2561
      %v2563 = vlaneseq
      %v2564 = vshrl.u32 %v2563, 7
      %v2565 = vsub.s32 0, %v2564
      %v2566 = vrot.slane %v2300, %v2565
      %v2567 = vlaneseq
      %v2568 = vshrl.u32 %v2567, 7
      %v2569 = vsub.s32 0, %v2568
      %v2570 = vrot.slane %v2301, %v2569
      %v2571 = vlaneseq
      %v2572 = vshrl.u32 %v2571, 7
      %v2573 = vsub.s32 0, %v2572
      %v2574 = vrot.slane %v2302, %v2573
      %v2575 = vlaneseq
      %v2576 = vshrl.u32 %v2575, 7
      %v2577 = vsub.s32 0, %v2576
      %v2578 = vrot.slane %v2303, %v2577
      %v2579 = vlaneseq
      %v2580 = vshrl.u32 %v2579, 7
      %v2581 = vsub.s32 0, %v2580
      %v2582 = vrot.slane %v2304, %v2581
      %v2583 = vlaneseq
      %v2584 = vshrl.u32 %v2583, 7
      %v2585 = vsub.s32 0, %v2584
      %v2586 = vrot.slane %v2305, %v2585
      %v2587 = vlaneseq
      %v2588 = vshrl.u32 %v2587, 7
      %v2589 = vsub.s32 0, %v2588
      %v2590 = vrot.slane %v2306, %v2589
      %v2591 = vlaneseq
      %v2592 = vshrl.u32 %v2591, 7
      %v2593 = vsub.s32 0, %v2592
      %v2594 = vrot.slane %v2307, %v2593
      %v2595 = vlaneseq
      %v2596 = vshrl.u32 %v2595, 7
      %v2597 = vsub.s32 0, %v2596
      %v2598 = vrot.slane %v2308, %v2597
      %v2599 = vlaneseq
      %v2600 = vshrl.u32 %v2599, 7
      %v2601 = vsub.s32 0, %v2600
      %v2602 = vrot.slane %v2309, %v2601
      %v2603 = vlaneseq
      %v2604 = vshrl.u32 %v2603, 7
      %v2605 = vsub.s32 0, %v2604
      %v2606 = vrot.slane %v2310, %v2605
      %v2607 = vlaneseq
      %v2608 = vshrl.u32 %v2607, 7
      %v2609 = vsub.s32 0, %v2608
      %v2610 = vrot.slane %v2311, %v2609
      %v2611 = vlaneseq
      %v2612 = vshrl.u32 %v2611, 7
      %v2613 = vsub.s32 0, %v2612
      %v2614 = vrot.slane %v2312, %v2613
      %v2615 = vlaneseq
      %v2616 = vshrl.u32 %v2615, 7
      %v2617 = vsub.s32 0, %v2616
      %v2618 = vrot.slane %v2313, %v2617
      %v2619 = vlaneseq
      %v2620 = vshrl.u32 %v2619, 7
      %v2621 = vsub.s32 0, %v2620
      %v2622 = vrot.slane %v2314, %v2621
      %v2623 = vlaneseq
      %v2624 = vshrl.u32 %v2623, 7
      %v2625 = vsub.s32 0, %v2624
      %v2626 = vrot.slane %v2315, %v2625
      %v2627 = vlaneseq
      %v2628 = vshrl.u32 %v2627, 7
      %v2629 = vsub.s32 0, %v2628
      %v2630 = vrot.slane %v2316, %v2629
      %v2631 = vlaneseq
      %v2632 = vshrl.u32 %v2631, 7
      %v2633 = vsub.s32 0, %v2632
      %v2634 = vrot.slane %v2317, %v2633
      %v2635 = vlaneseq
      %v2636 = vshrl.u32 %v2635, 7
      %v2637 = vsub.s32 0, %v2636
      %v2638 = vrot.slane %v2318, %v2637
      %v2639 = vlaneseq
      %v2640 = vshrl.u32 %v2639, 7
      %v2641 = vsub.s32 0, %v2640
      %v2642 = vrot.slane %v2319, %v2641
      %v2643 = vlaneseq
      %v2644 = vshrl.u32 %v2643, 7
      %v2645 = vsub.s32 0, %v2644
      %v2646 = vrot.slane %v2320, %v2645
      %v2647 = vlaneseq
      %v2648 = vshrl.u32 %v2647, 7
      %v2649 = vsub.s32 0, %v2648
      %v2650 = vrot.slane %v2321, %v2649
      %v2651 = vlaneseq
      %v2652 = vshrl.u32 %v2651, 7
      %v2653 = vsub.s32 0, %v2652
      %v2654 = vrot.slane %v2322, %v2653
      %v2655 = vlaneseq
      %v2656 = vshrl.u32 %v2655, 7
      %v2657 = vsub.s32 0, %v2656
      %v2658 = vrot.slane %v2323, %v2657
      %v2659 = vlaneseq
      %v2660 = vshrl.u32 %v2659, 7
      %v2661 = vsub.s32 0, %v2660
      %v2662 = vrot.slane %v2324, %v2661
      %v2663 = vlaneseq
      %v2664 = vshrl.u32 %v2663, 7
      %v2665 = vsub.s32 0, %v2664
      %v2666 = vrot.slane %v2325, %v2665
      %vm2667 = vcmask 1041409
      %v2668 = vsel %vm2667, %v2418, %v2414
      %vm2669 = vcmask 1042434
      %v2670 = vsel %vm2669, %v2422, %v2668
      %vm2671 = vcmask 1043459
      %v2672 = vsel %vm2671, %v2426, %v2670
      %vm2673 = vcmask 1044484
      %v2674 = vsel %vm2673, %v2430, %v2672
      %vm2675 = vcmask 1045509
      %v2676 = vsel %vm2675, %v2434, %v2674
      %vm2677 = vcmask 1046534
      %v2678 = vsel %vm2677, %v2438, %v2676
      %vm2679 = vcmask 1047559
      %v2680 = vsel %vm2679, %v2442, %v2678
      %v2681 = vsel %vm2667, %v2450, %v2446
      %v2682 = vsel %vm2669, %v2454, %v2681
      %v2683 = vsel %vm2671, %v2458, %v2682
      %v2684 = vsel %vm2673, %v2462, %v2683
      %v2685 = vsel %vm2675, %v2466, %v2684
      %v2686 = vsel %vm2677, %v2470, %v2685
      %v2687 = vsel %vm2679, %v2474, %v2686
      %v2688 = vsel %vm2667, %v2482, %v2478
      %v2689 = vsel %vm2669, %v2486, %v2688
      %v2690 = vsel %vm2671, %v2490, %v2689
      %v2691 = vsel %vm2673, %v2494, %v2690
      %v2692 = vsel %vm2675, %v2498, %v2691
      %v2693 = vsel %vm2677, %v2502, %v2692
      %v2694 = vsel %vm2679, %v2506, %v2693
      %v2695 = vsel %vm2667, %v2514, %v2510
      %v2696 = vsel %vm2669, %v2518, %v2695
      %v2697 = vsel %vm2671, %v2522, %v2696
      %v2698 = vsel %vm2673, %v2526, %v2697
      %v2699 = vsel %vm2675, %v2530, %v2698
      %v2700 = vsel %vm2677, %v2534, %v2699
      %v2701 = vsel %vm2679, %v2538, %v2700
      %v2702 = vsel %vm2667, %v2546, %v2542
      %v2703 = vsel %vm2669, %v2550, %v2702
      %v2704 = vsel %vm2671, %v2554, %v2703
      %v2705 = vsel %vm2673, %v2558, %v2704
      %v2706 = vsel %vm2675, %v2562, %v2705
      %v2707 = vsel %vm2677, %v2566, %v2706
      %v2708 = vsel %vm2679, %v2570, %v2707
      %v2709 = vsel %vm2667, %v2578, %v2574
      %v2710 = vsel %vm2669, %v2582, %v2709
      %v2711 = vsel %vm2671, %v2586, %v2710
      %v2712 = vsel %vm2673, %v2590, %v2711
      %v2713 = vsel %vm2675, %v2594, %v2712
      %v2714 = vsel %vm2677, %v2598, %v2713
      %v2715 = vsel %vm2679, %v2602, %v2714
      %v2716 = vsel %vm2667, %v2610, %v2606
      %v2717 = vsel %vm2669, %v2614, %v2716
      %v2718 = vsel %vm2671, %v2618, %v2717
      %v2719 = vsel %vm2673, %v2622, %v2718
      %v2720 = vsel %vm2675, %v2626, %v2719
      %v2721 = vsel %vm2677, %v2630, %v2720
      %v2722 = vsel %vm2679, %v2634, %v2721
      %v2723 = vsel %vm2667, %v2642, %v2638
      %v2724 = vsel %vm2669, %v2646, %v2723
      %v2725 = vsel %vm2671, %v2650, %v2724
      %v2726 = vsel %vm2673, %v2654, %v2725
      %v2727 = vsel %vm2675, %v2658, %v2726
      %v2728 = vsel %vm2677, %v2662, %v2727
      %v2729 = vsel %vm2679, %v2666, %v2728
      %s2738 = scalar_lea.vmem [#allocation2], 16
      %2739 = vst.msk [vmem:[%s2738 + $0x1] sm:$0xff] %vm268, %v2680
      %2740 = vst.msk [vmem:[%s2738 + $0x11] sm:$0xff] %vm268, %v2687
      %2741 = vst.msk [vmem:[%s2738 + $0x21] sm:$0xff] %vm268, %v2694
      %2742 = vst.msk [vmem:[%s2738 + $0x31] sm:$0xff] %vm268, %v2701
      %2743 = vst.msk [vmem:[%s2738 + $0x41] sm:$0xff] %vm268, %v2708
      %2744 = vst.msk [vmem:[%s2738 + $0x51] sm:$0xff] %vm268, %v2715
      %2745 = vst.msk [vmem:[%s2738 + $0x61] sm:$0xff] %vm268, %v2722
      %2746 = vst.msk [vmem:[%s2738 + $0x71] sm:$0xff] %vm268, %v2729
      %v2747 = vld [vmem:[#allocation2] sm:$0xff]
      %v2748 = vld [vmem:[#allocation2 + $0x10] sm:$0xff]
      %v2749 = vld [vmem:[#allocation2 + $0x20] sm:$0xff]
      %v2750 = vld [vmem:[#allocation2 + $0x30] sm:$0xff]
      %v2751 = vld [vmem:[#allocation2 + $0x40] sm:$0xff]
      %v2752 = vld [vmem:[#allocation2 + $0x50] sm:$0xff]
      %v2753 = vld [vmem:[#allocation2 + $0x60] sm:$0xff]
      %v2754 = vld [vmem:[#allocation2 + $0x70] sm:$0xff]
      %v2755 = vld [vmem:[%s2] sm:$0xff]
      %v2756 = vld [vmem:[%s2 + $0x8] sm:$0xff]
      %v2757 = vld [vmem:[#allocation2 + $0x1] sm:$0xff]
      %v2758 = vld [vmem:[#allocation2 + $0x11] sm:$0xff]
      %v2759 = vld [vmem:[#allocation2 + $0x21] sm:$0xff]
      %v2760 = vld [vmem:[#allocation2 + $0x31] sm:$0xff]
      %v2761 = vld [vmem:[#allocation2 + $0x41] sm:$0xff]
      %v2762 = vld [vmem:[#allocation2 + $0x51] sm:$0xff]
      %v2763 = vld [vmem:[#allocation2 + $0x61] sm:$0xff]
      %v2764 = vld [vmem:[#allocation2 + $0x71] sm:$0xff]
      %s2765 = scalar_lea.vmem %s2, 16
      %v2766 = vld [vmem:[%s2765] sm:$0xff]
      %v2767 = vld [vmem:[%s2765 + $0x8] sm:$0xff]
      %v2769 = vsel %vm268, %v2757, 0
      %v2772 = vsel %vm268, %v2758, 0
      %v2775 = vsel %vm268, %v2759, 0
      %v2778 = vsel %vm268, %v2760, 0
      %v2781 = vsel %vm268, %v2761, 0
      %v2784 = vsel %vm268, %v2762, 0
      %v2787 = vsel %vm268, %v2763, 0
      %v2790 = vsel %vm268, %v2764, 0
      %2792 = vmatprep.subr.mxu0 0.0
      %2793 = vmatpush1.msra.mxu0 %v2766
      %2794 = vmatprep.subr.mxu0 0.0
      %2795 = vmatpush1.msra.mxu0 %v2767
      %2796 = vmatprep.subr.mxu0 0.0
      %2797 = vmatpush1.msra.mxu0 0.0
      %2798 = vmatprep.subr.mxu0 0.0
      %2799 = vmatpush1.msra.mxu0 0.0
      %2800 = vmatprep.subr.mxu0 0.0
      %2801 = vmatpush1.msra.mxu0 0.0
      %2802 = vmatprep.subr.mxu0 0.0
      %2803 = vmatpush1.msra.mxu0 0.0
      %2804 = vmatprep.subr.mxu0 0.0
      %2805 = vmatpush1.msra.mxu0 0.0
      %2806 = vmatprep.subr.mxu0 0.0
      %2807 = vmatpush1.msra.mxu0 0.0
      %2808 = vmatprep.subr.mxu0 0.0
      %2809 = vmatpush1.msra.mxu0 0.0
      %2810 = vmatprep.subr.mxu0 0.0
      %2811 = vmatpush1.msra.mxu0 0.0
      %2812 = vmatprep.subr.mxu0 0.0
      %2813 = vmatpush1.msra.mxu0 0.0
      %2814 = vmatprep.subr.mxu0 0.0
      %2815 = vmatpush1.msra.mxu0 0.0
      %2816 = vmatprep.subr.mxu0 0.0
      %2817 = vmatpush1.msra.mxu0 0.0
      %2818 = vmatprep.subr.mxu0 0.0
      %2819 = vmatpush1.msra.mxu0 0.0
      %2820 = vmatprep.subr.mxu0 0.0
      %2821 = vmatpush1.msra.mxu0 0.0
      %2822 = vmatprep.subr.mxu0 0.0
      %2823 = vmatpush1.msra.mxu0 0.0
      %2824 = vmatprep.subr.mxu0 0.0
      %2825 = vmatpush1.msra.mxu0 0.0
      %2826 = vmatprep.subr.mxu0 0.0
      %2827 = vmatpush1.msra.mxu0 0.0
      %2828 = vmatprep.subr.mxu0 0.0
      %2829 = vmatpush1.msra.mxu0 0.0
      %2830 = vmatprep.subr.mxu0 0.0
      %2831 = vmatpush1.msra.mxu0 0.0
      %2832 = vmatprep.subr.mxu0 0.0
      %2833 = vmatpush1.msra.mxu0 0.0
      %2834 = vmatprep.subr.mxu0 0.0
      %2835 = vmatpush1.msra.mxu0 0.0
      %2836 = vmatprep.subr.mxu0 0.0
      %2837 = vmatpush1.msra.mxu0 0.0
      %2838 = vmatprep.subr.mxu0 0.0
      %2839 = vmatpush1.msra.mxu0 0.0
      %2840 = vmatprep.subr.mxu0 0.0
      %2841 = vmatpush1.msra.mxu0 0.0
      %2842 = vmatprep.subr.mxu0 0.0
      %2843 = vmatpush1.msra.mxu0 0.0
      %2844 = vmatprep.subr.mxu0 0.0
      %2845 = vmatpush1.msra.mxu0 0.0
      %2846 = vmatprep.subr.mxu0 0.0
      %2847 = vmatpush1.msra.mxu0 0.0
      %2848 = vmatprep.subr.mxu0 0.0
      %2849 = vmatpush1.msra.mxu0 0.0
      %2850 = vmatprep.subr.mxu0 0.0
      %2851 = vmatpush1.msra.mxu0 0.0
      %2852 = vmatprep.subr.mxu0 0.0
      %2853 = vmatpush1.msra.mxu0 0.0
      %2854 = vmatprep.subr.mxu0 0.0
      %2855 = vmatpush1.msra.mxu0 0.0
      %2856 = vmatprep.mubr.f32.mxu0 0.0
      %2857 = vmatmul.mubr.f32.gmra.mrb[0].mxu0 %v2769
      %v2858 = vpop.f32.mrb[0].mxu0
      %v2859 = vadd.f32 0.0, %v2858
      %v2860 = vpop.f32.mrb[0].mxu0
      %2861 = vmatprep.mubr.f32.mxu0 0.0
      %2862 = vmatmul.mubr.f32.gmra.mrb[0].mxu0 %v2772
      %v2863 = vpop.f32.mrb[0].mxu0
      %v2864 = vadd.f32 0.0, %v2863
      %v2865 = vpop.f32.mrb[0].mxu0
      %2866 = vmatprep.mubr.f32.mxu0 0.0
      %2867 = vmatmul.mubr.f32.gmra.mrb[0].mxu0 %v2775
      %v2868 = vpop.f32.mrb[0].mxu0
      %v2869 = vadd.f32 0.0, %v2868
      %v2870 = vpop.f32.mrb[0].mxu0
      %2871 = vmatprep.mubr.f32.mxu0 0.0
      %2872 = vmatmul.mubr.f32.gmra.mrb[0].mxu0 %v2778
      %v2873 = vpop.f32.mrb[0].mxu0
      %v2874 = vadd.f32 0.0, %v2873
      %v2875 = vpop.f32.mrb[0].mxu0
      %2876 = vmatprep.mubr.f32.mxu0 0.0
      %2877 = vmatmul.mubr.f32.gmra.mrb[0].mxu0 %v2781
      %v2878 = vpop.f32.mrb[0].mxu0
      %v2879 = vadd.f32 0.0, %v2878
      %v2880 = vpop.f32.mrb[0].mxu0
      %2881 = vmatprep.mubr.f32.mxu0 0.0
      %2882 = vmatmul.mubr.f32.gmra.mrb[0].mxu0 %v2784
      %v2883 = vpop.f32.mrb[0].mxu0
      %v2884 = vadd.f32 0.0, %v2883
      %v2885 = vpop.f32.mrb[0].mxu0
      %2886 = vmatprep.mubr.f32.mxu0 0.0
      %2887 = vmatmul.mubr.f32.gmra.mrb[0].mxu0 %v2787
      %v2888 = vpop.f32.mrb[0].mxu0
      %v2889 = vadd.f32 0.0, %v2888
      %v2890 = vpop.f32.mrb[0].mxu0
      %2891 = vmatprep.mubr.f32.mxu0 0.0
      %2892 = vmatmul.mubr.f32.gmra.mrb[0].mxu0 %v2790
      %v2893 = vpop.f32.mrb[0].mxu0
      %v2894 = vadd.f32 0.0, %v2893
      %v2895 = vpop.f32.mrb[0].mxu0
      %2896 = vdwg.mxu0
      %v2898 = vsel %vm268, %v2747, 0
      %v2901 = vsel %vm268, %v2748, 0
      %v2904 = vsel %vm268, %v2749, 0
      %v2907 = vsel %vm268, %v2750, 0
      %v2910 = vsel %vm268, %v2751, 0
      %v2913 = vsel %vm268, %v2752, 0
      %v2916 = vsel %vm268, %v2753, 0
      %v2919 = vsel %vm268, %v2754, 0
      %2921 = vmatprep.subr.mxu0 0.0
      %2922 = vmatpush1.msra.mxu0 %v2755
      %2923 = vmatprep.subr.mxu0 0.0
      %2924 = vmatpush1.msra.mxu0 %v2756
      %2925 = vmatprep.subr.mxu0 0.0
      %2926 = vmatpush1.msra.mxu0 0.0
      %2927 = vmatprep.subr.mxu0 0.0
      %2928 = vmatpush1.msra.mxu0 0.0
      %2929 = vmatprep.subr.mxu0 0.0
      %2930 = vmatpush1.msra.mxu0 0.0
      %2931 = vmatprep.subr.mxu0 0.0
      %2932 = vmatpush1.msra.mxu0 0.0
      %2933 = vmatprep.subr.mxu0 0.0
      %2934 = vmatpush1.msra.mxu0 0.0
      %2935 = vmatprep.subr.mxu0 0.0
      %2936 = vmatpush1.msra.mxu0 0.0
      %2937 = vmatprep.subr.mxu0 0.0
      %2938 = vmatpush1.msra.mxu0 0.0
      %2939 = vmatprep.subr.mxu0 0.0
      %2940 = vmatpush1.msra.mxu0 0.0
      %2941 = vmatprep.subr.mxu0 0.0
      %2942 = vmatpush1.msra.mxu0 0.0
      %2943 = vmatprep.subr.mxu0 0.0
      %2944 = vmatpush1.msra.mxu0 0.0
      %2945 = vmatprep.subr.mxu0 0.0
      %2946 = vmatpush1.msra.mxu0 0.0
      %2947 = vmatprep.subr.mxu0 0.0
      %2948 = vmatpush1.msra.mxu0 0.0
      %2949 = vmatprep.subr.mxu0 0.0
      %2950 = vmatpush1.msra.mxu0 0.0
      %2951 = vmatprep.subr.mxu0 0.0
      %2952 = vmatpush1.msra.mxu0 0.0
      %2953 = vmatprep.subr.mxu0 0.0
      %2954 = vmatpush1.msra.mxu0 0.0
      %2955 = vmatprep.subr.mxu0 0.0
      %2956 = vmatpush1.msra.mxu0 0.0
      %2957 = vmatprep.subr.mxu0 0.0
      %2958 = vmatpush1.msra.mxu0 0.0
      %2959 = vmatprep.subr.mxu0 0.0
      %2960 = vmatpush1.msra.mxu0 0.0
      %2961 = vmatprep.subr.mxu0 0.0
      %2962 = vmatpush1.msra.mxu0 0.0
      %2963 = vmatprep.subr.mxu0 0.0
      %2964 = vmatpush1.msra.mxu0 0.0
      %2965 = vmatprep.subr.mxu0 0.0
      %2966 = vmatpush1.msra.mxu0 0.0
      %2967 = vmatprep.subr.mxu0 0.0
      %2968 = vmatpush1.msra.mxu0 0.0
      %2969 = vmatprep.subr.mxu0 0.0
      %2970 = vmatpush1.msra.mxu0 0.0
      %2971 = vmatprep.subr.mxu0 0.0
      %2972 = vmatpush1.msra.mxu0 0.0
      %2973 = vmatprep.subr.mxu0 0.0
      %2974 = vmatpush1.msra.mxu0 0.0
      %2975 = vmatprep.subr.mxu0 0.0
      %2976 = vmatpush1.msra.mxu0 0.0
      %2977 = vmatprep.subr.mxu0 0.0
      %2978 = vmatpush1.msra.mxu0 0.0
      %2979 = vmatprep.subr.mxu0 0.0
      %2980 = vmatpush1.msra.mxu0 0.0
      %2981 = vmatprep.subr.mxu0 0.0
      %2982 = vmatpush1.msra.mxu0 0.0
      %2983 = vmatprep.subr.mxu0 0.0
      %2984 = vmatpush1.msra.mxu0 0.0
      %2985 = vmatprep.mubr.f32.mxu0 0.0
      %2986 = vmatmul.mubr.f32.gmra.mrb[0].mxu0 %v2898
      %v2987 = vpop.f32.mrb[0].mxu0
      %v2988 = vadd.f32 %v2859, %v2987
      %v2989 = vpop.f32.mrb[0].mxu0
      %2990 = vmatprep.mubr.f32.mxu0 0.0
      %2991 = vmatmul.mubr.f32.gmra.mrb[0].mxu0 %v2901
      %v2992 = vpop.f32.mrb[0].mxu0
      %v2993 = vadd.f32 %v2864, %v2992
      %v2994 = vpop.f32.mrb[0].mxu0
      %2995 = vmatprep.mubr.f32.mxu0 0.0
      %2996 = vmatmul.mubr.f32.gmra.mrb[0].mxu0 %v2904
      %v2997 = vpop.f32.mrb[0].mxu0
      %v2998 = vadd.f32 %v2869, %v2997
      %v2999 = vpop.f32.mrb[0].mxu0
      %3000 = vmatprep.mubr.f32.mxu0 0.0
      %3001 = vmatmul.mubr.f32.gmra.mrb[0].mxu0 %v2907
      %v3002 = vpop.f32.mrb[0].mxu0
      %v3003 = vadd.f32 %v2874, %v3002
      %v3004 = vpop.f32.mrb[0].mxu0
      %3005 = vmatprep.mubr.f32.mxu0 0.0
      %3006 = vmatmul.mubr.f32.gmra.mrb[0].mxu0 %v2910
      %v3007 = vpop.f32.mrb[0].mxu0
      %v3008 = vadd.f32 %v2879, %v3007
      %v3009 = vpop.f32.mrb[0].mxu0
      %3010 = vmatprep.mubr.f32.mxu0 0.0
      %3011 = vmatmul.mubr.f32.gmra.mrb[0].mxu0 %v2913
      %v3012 = vpop.f32.mrb[0].mxu0
      %v3013 = vadd.f32 %v2884, %v3012
      %v3014 = vpop.f32.mrb[0].mxu0
      %3015 = vmatprep.mubr.f32.mxu0 0.0
      %3016 = vmatmul.mubr.f32.gmra.mrb[0].mxu0 %v2916
      %v3017 = vpop.f32.mrb[0].mxu0
      %v3018 = vadd.f32 %v2889, %v3017
      %v3019 = vpop.f32.mrb[0].mxu0
      %3020 = vmatprep.mubr.f32.mxu0 0.0
      %3021 = vmatmul.mubr.f32.gmra.mrb[0].mxu0 %v2919
      %v3022 = vpop.f32.mrb[0].mxu0
      %v3023 = vadd.f32 %v2894, %v3022
      %v3024 = vpop.f32.mrb[0].mxu0
      %3025 = vdwg.mxu0
      %v3026 = vld [vmem:[#allocation2 + $0x2] sm:$0xff]
      %v3027 = vld [vmem:[#allocation2 + $0x12] sm:$0xff]
      %v3028 = vld [vmem:[#allocation2 + $0x22] sm:$0xff]
      %v3029 = vld [vmem:[#allocation2 + $0x32] sm:$0xff]
      %v3030 = vld [vmem:[#allocation2 + $0x42] sm:$0xff]
      %v3031 = vld [vmem:[#allocation2 + $0x52] sm:$0xff]
      %v3032 = vld [vmem:[#allocation2 + $0x62] sm:$0xff]
      %v3033 = vld [vmem:[#allocation2 + $0x72] sm:$0xff]
      %s3034 = scalar_lea.vmem %s2, 32
      %v3035 = vld [vmem:[%s3034] sm:$0xff]
      %v3036 = vld [vmem:[%s3034 + $0x8] sm:$0xff]
      %v3038 = vsel %vm268, %v3026, 0
      %v3041 = vsel %vm268, %v3027, 0
      %v3044 = vsel %vm268, %v3028, 0
      %v3047 = vsel %vm268, %v3029, 0
      %v3050 = vsel %vm268, %v3030, 0
      %v3053 = vsel %vm268, %v3031, 0
      %v3056 = vsel %vm268, %v3032, 0
      %v3059 = vsel %vm268, %v3033, 0
      %3061 = vmatprep.subr.mxu0 0.0
      %3062 = vmatpush1.msra.mxu0 %v3035
      %3063 = vmatprep.subr.mxu0 0.0
      %3064 = vmatpush1.msra.mxu0 %v3036
      %3065 = vmatprep.subr.mxu0 0.0
      %3066 = vmatpush1.msra.mxu0 0.0
      %3067 = vmatprep.subr.mxu0 0.0
      %3068 = vmatpush1.msra.mxu0 0.0
      %3069 = vmatprep.subr.mxu0 0.0
      %3070 = vmatpush1.msra.mxu0 0.0
      %3071 = vmatprep.subr.mxu0 0.0
      %3072 = vmatpush1.msra.mxu0 0.0
      %3073 = vmatprep.subr.mxu0 0.0
      %3074 = vmatpush1.msra.mxu0 0.0
      %3075 = vmatprep.subr.mxu0 0.0
      %3076 = vmatpush1.msra.mxu0 0.0
      %3077 = vmatprep.subr.mxu0 0.0
      %3078 = vmatpush1.msra.mxu0 0.0
      %3079 = vmatprep.subr.mxu0 0.0
      %3080 = vmatpush1.msra.mxu0 0.0
      %3081 = vmatprep.subr.mxu0 0.0
      %3082 = vmatpush1.msra.mxu0 0.0
      %3083 = vmatprep.subr.mxu0 0.0
      %3084 = vmatpush1.msra.mxu0 0.0
      %3085 = vmatprep.subr.mxu0 0.0
      %3086 = vmatpush1.msra.mxu0 0.0
      %3087 = vmatprep.subr.mxu0 0.0
      %3088 = vmatpush1.msra.mxu0 0.0
      %3089 = vmatprep.subr.mxu0 0.0
      %3090 = vmatpush1.msra.mxu0 0.0
      %3091 = vmatprep.subr.mxu0 0.0
      %3092 = vmatpush1.msra.mxu0 0.0
      %3093 = vmatprep.subr.mxu0 0.0
      %3094 = vmatpush1.msra.mxu0 0.0
      %3095 = vmatprep.subr.mxu0 0.0
      %3096 = vmatpush1.msra.mxu0 0.0
      %3097 = vmatprep.subr.mxu0 0.0
      %3098 = vmatpush1.msra.mxu0 0.0
      %3099 = vmatprep.subr.mxu0 0.0
      %3100 = vmatpush1.msra.mxu0 0.0
      %3101 = vmatprep.subr.mxu0 0.0
      %3102 = vmatpush1.msra.mxu0 0.0
      %3103 = vmatprep.subr.mxu0 0.0
      %3104 = vmatpush1.msra.mxu0 0.0
      %3105 = vmatprep.subr.mxu0 0.0
      %3106 = vmatpush1.msra.mxu0 0.0
      %3107 = vmatprep.subr.mxu0 0.0
      %3108 = vmatpush1.msra.mxu0 0.0
      %3109 = vmatprep.subr.mxu0 0.0
      %3110 = vmatpush1.msra.mxu0 0.0
      %3111 = vmatprep.subr.mxu0 0.0
      %3112 = vmatpush1.msra.mxu0 0.0
      %3113 = vmatprep.subr.mxu0 0.0
      %3114 = vmatpush1.msra.mxu0 0.0
      %3115 = vmatprep.subr.mxu0 0.0
      %3116 = vmatpush1.msra.mxu0 0.0
      %3117 = vmatprep.subr.mxu0 0.0
      %3118 = vmatpush1.msra.mxu0 0.0
      %3119 = vmatprep.subr.mxu0 0.0
      %3120 = vmatpush1.msra.mxu0 0.0
      %3121 = vmatprep.subr.mxu0 0.0
      %3122 = vmatpush1.msra.mxu0 0.0
      %3123 = vmatprep.subr.mxu0 0.0
      %3124 = vmatpush1.msra.mxu0 0.0
      %3125 = vmatprep.mubr.f32.mxu0 0.0
      %3126 = vmatmul.mubr.f32.gmra.mrb[0].mxu0 %v3038
      %v3127 = vpop.f32.mrb[0].mxu0
      %v3128 = vadd.f32 0.0, %v3127
      %v3129 = vpop.f32.mrb[0].mxu0
      %3130 = vmatprep.mubr.f32.mxu0 0.0
      %3131 = vmatmul.mubr.f32.gmra.mrb[0].mxu0 %v3041
      %v3132 = vpop.f32.mrb[0].mxu0
      %v3133 = vadd.f32 0.0, %v3132
      %v3134 = vpop.f32.mrb[0].mxu0
      %3135 = vmatprep.mubr.f32.mxu0 0.0
      %3136 = vmatmul.mubr.f32.gmra.mrb[0].mxu0 %v3044
      %v3137 = vpop.f32.mrb[0].mxu0
      %v3138 = vadd.f32 0.0, %v3137
      %v3139 = vpop.f32.mrb[0].mxu0
      %3140 = vmatprep.mubr.f32.mxu0 0.0
      %3141 = vmatmul.mubr.f32.gmra.mrb[0].mxu0 %v3047
      %v3142 = vpop.f32.mrb[0].mxu0
      %v3143 = vadd.f32 0.0, %v3142
      %v3144 = vpop.f32.mrb[0].mxu0
      %3145 = vmatprep.mubr.f32.mxu0 0.0
      %3146 = vmatmul.mubr.f32.gmra.mrb[0].mxu0 %v3050
      %v3147 = vpop.f32.mrb[0].mxu0
      %v3148 = vadd.f32 0.0, %v3147
      %v3149 = vpop.f32.mrb[0].mxu0
      %3150 = vmatprep.mubr.f32.mxu0 0.0
      %3151 = vmatmul.mubr.f32.gmra.mrb[0].mxu0 %v3053
      %v3152 = vpop.f32.mrb[0].mxu0
      %v3153 = vadd.f32 0.0, %v3152
      %v3154 = vpop.f32.mrb[0].mxu0
      %3155 = vmatprep.mubr.f32.mxu0 0.0
      %3156 = vmatmul.mubr.f32.gmra.mrb[0].mxu0 %v3056
      %v3157 = vpop.f32.mrb[0].mxu0
      %v3158 = vadd.f32 0.0, %v3157
      %v3159 = vpop.f32.mrb[0].mxu0
      %3160 = vmatprep.mubr.f32.mxu0 0.0
      %3161 = vmatmul.mubr.f32.gmra.mrb[0].mxu0 %v3059
      %v3162 = vpop.f32.mrb[0].mxu0
      %v3163 = vadd.f32 0.0, %v3162
      %v3164 = vpop.f32.mrb[0].mxu0
      %3165 = vdwg.mxu0
      %v3166 = vadd.f32 %v2988, %v3128
      %v3167 = vadd.f32 %v2993, %v3133
      %v3168 = vadd.f32 %v2998, %v3138
      %v3169 = vadd.f32 %v3003, %v3143
      %v3170 = vadd.f32 %v3008, %v3148
      %v3171 = vadd.f32 %v3013, %v3153
      %v3172 = vadd.f32 %v3018, %v3158
      %v3173 = vadd.f32 %v3023, %v3163
      %v3174 = vld [vmem:[%s2738] sm:$0xff]
      %v3175 = vld [vmem:[%s2738 + $0x10] sm:$0xff]
      %v3176 = vld [vmem:[%s2738 + $0x20] sm:$0xff]
      %v3177 = vld [vmem:[%s2738 + $0x30] sm:$0xff]
      %v3178 = vld [vmem:[%s2738 + $0x40] sm:$0xff]
      %v3179 = vld [vmem:[%s2738 + $0x50] sm:$0xff]
      %v3180 = vld [vmem:[%s2738 + $0x60] sm:$0xff]
      %v3181 = vld [vmem:[%s2738 + $0x70] sm:$0xff]
      %s3182 = scalar_lea.vmem %s2, 48
      %v3183 = vld [vmem:[%s3182] sm:$0xff]
      %v3184 = vld [vmem:[%s3182 + $0x8] sm:$0xff]
      %v3186 = vsel %vm268, %v3174, 0
      %v3189 = vsel %vm268, %v3175, 0
      %v3192 = vsel %vm268, %v3176, 0
      %v3195 = vsel %vm268, %v3177, 0
      %v3198 = vsel %vm268, %v3178, 0
      %v3201 = vsel %vm268, %v3179, 0
      %v3204 = vsel %vm268, %v3180, 0
      %v3207 = vsel %vm268, %v3181, 0
      %3209 = vmatprep.subr.mxu0 0.0
      %3210 = vmatpush1.msra.mxu0 %v3183
      %3211 = vmatprep.subr.mxu0 0.0
      %3212 = vmatpush1.msra.mxu0 %v3184
      %3213 = vmatprep.subr.mxu0 0.0
      %3214 = vmatpush1.msra.mxu0 0.0
      %3215 = vmatprep.subr.mxu0 0.0
      %3216 = vmatpush1.msra.mxu0 0.0
      %3217 = vmatprep.subr.mxu0 0.0
      %3218 = vmatpush1.msra.mxu0 0.0
      %3219 = vmatprep.subr.mxu0 0.0
      %3220 = vmatpush1.msra.mxu0 0.0
      %3221 = vmatprep.subr.mxu0 0.0
      %3222 = vmatpush1.msra.mxu0 0.0
      %3223 = vmatprep.subr.mxu0 0.0
      %3224 = vmatpush1.msra.mxu0 0.0
      %3225 = vmatprep.subr.mxu0 0.0
      %3226 = vmatpush1.msra.mxu0 0.0
      %3227 = vmatprep.subr.mxu0 0.0
      %3228 = vmatpush1.msra.mxu0 0.0
      %3229 = vmatprep.subr.mxu0 0.0
      %3230 = vmatpush1.msra.mxu0 0.0
      %3231 = vmatprep.subr.mxu0 0.0
      %3232 = vmatpush1.msra.mxu0 0.0
      %3233 = vmatprep.subr.mxu0 0.0
      %3234 = vmatpush1.msra.mxu0 0.0
      %3235 = vmatprep.subr.mxu0 0.0
      %3236 = vmatpush1.msra.mxu0 0.0
      %3237 = vmatprep.subr.mxu0 0.0
      %3238 = vmatpush1.msra.mxu0 0.0
      %3239 = vmatprep.subr.mxu0 0.0
      %3240 = vmatpush1.msra.mxu0 0.0
      %3241 = vmatprep.subr.mxu0 0.0
      %3242 = vmatpush1.msra.mxu0 0.0
      %3243 = vmatprep.subr.mxu0 0.0
      %3244 = vmatpush1.msra.mxu0 0.0
      %3245 = vmatprep.subr.mxu0 0.0
      %3246 = vmatpush1.msra.mxu0 0.0
      %3247 = vmatprep.subr.mxu0 0.0
      %3248 = vmatpush1.msra.mxu0 0.0
      %3249 = vmatprep.subr.mxu0 0.0
      %3250 = vmatpush1.msra.mxu0 0.0
      %3251 = vmatprep.subr.mxu0 0.0
      %3252 = vmatpush1.msra.mxu0 0.0
      %3253 = vmatprep.subr.mxu0 0.0
      %3254 = vmatpush1.msra.mxu0 0.0
      %3255 = vmatprep.subr.mxu0 0.0
      %3256 = vmatpush1.msra.mxu0 0.0
      %3257 = vmatprep.subr.mxu0 0.0
      %3258 = vmatpush1.msra.mxu0 0.0
      %3259 = vmatprep.subr.mxu0 0.0
      %3260 = vmatpush1.msra.mxu0 0.0
      %3261 = vmatprep.subr.mxu0 0.0
      %3262 = vmatpush1.msra.mxu0 0.0
      %3263 = vmatprep.subr.mxu0 0.0
      %3264 = vmatpush1.msra.mxu0 0.0
      %3265 = vmatprep.subr.mxu0 0.0
      %3266 = vmatpush1.msra.mxu0 0.0
      %3267 = vmatprep.subr.mxu0 0.0
      %3268 = vmatpush1.msra.mxu0 0.0
      %3269 = vmatprep.subr.mxu0 0.0
      %3270 = vmatpush1.msra.mxu0 0.0
      %3271 = vmatprep.subr.mxu0 0.0
      %3272 = vmatpush1.msra.mxu0 0.0
      %3273 = vmatprep.mubr.f32.mxu0 0.0
      %3274 = vmatmul.mubr.f32.gmra.mrb[0].mxu0 %v3186
      %v3275 = vpop.f32.mrb[0].mxu0
      %v3276 = vadd.f32 0.0, %v3275
      %v3277 = vpop.f32.mrb[0].mxu0
      %3278 = vmatprep.mubr.f32.mxu0 0.0
      %3279 = vmatmul.mubr.f32.gmra.mrb[0].mxu0 %v3189
      %v3280 = vpop.f32.mrb[0].mxu0
      %v3281 = vadd.f32 0.0, %v3280
      %v3282 = vpop.f32.mrb[0].mxu0
      %3283 = vmatprep.mubr.f32.mxu0 0.0
      %3284 = vmatmul.mubr.f32.gmra.mrb[0].mxu0 %v3192
      %v3285 = vpop.f32.mrb[0].mxu0
      %v3286 = vadd.f32 0.0, %v3285
      %v3287 = vpop.f32.mrb[0].mxu0
      %3288 = vmatprep.mubr.f32.mxu0 0.0
      %3289 = vmatmul.mubr.f32.gmra.mrb[0].mxu0 %v3195
      %v3290 = vpop.f32.mrb[0].mxu0
      %v3291 = vadd.f32 0.0, %v3290
      %v3292 = vpop.f32.mrb[0].mxu0
      %3293 = vmatprep.mubr.f32.mxu0 0.0
      %3294 = vmatmul.mubr.f32.gmra.mrb[0].mxu0 %v3198
      %v3295 = vpop.f32.mrb[0].mxu0
      %v3296 = vadd.f32 0.0, %v3295
      %v3297 = vpop.f32.mrb[0].mxu0
      %3298 = vmatprep.mubr.f32.mxu0 0.0
      %3299 = vmatmul.mubr.f32.gmra.mrb[0].mxu0 %v3201
      %v3300 = vpop.f32.mrb[0].mxu0
      %v3301 = vadd.f32 0.0, %v3300
      %v3302 = vpop.f32.mrb[0].mxu0
      %3303 = vmatprep.mubr.f32.mxu0 0.0
      %3304 = vmatmul.mubr.f32.gmra.mrb[0].mxu0 %v3204
      %v3305 = vpop.f32.mrb[0].mxu0
      %v3306 = vadd.f32 0.0, %v3305
      %v3307 = vpop.f32.mrb[0].mxu0
      %3308 = vmatprep.mubr.f32.mxu0 0.0
      %3309 = vmatmul.mubr.f32.gmra.mrb[0].mxu0 %v3207
      %v3310 = vpop.f32.mrb[0].mxu0
      %v3311 = vadd.f32 0.0, %v3310
      %v3312 = vpop.f32.mrb[0].mxu0
      %3313 = vdwg.mxu0
      %v3314 = vadd.f32 %v3166, %v3276
      %v3315 = vadd.f32 %v3167, %v3281
      %v3316 = vadd.f32 %v3168, %v3286
      %v3317 = vadd.f32 %v3169, %v3291
      %v3318 = vadd.f32 %v3170, %v3296
      %v3319 = vadd.f32 %v3171, %v3301
      %v3320 = vadd.f32 %v3172, %v3306
      %v3321 = vadd.f32 %v3173, %v3311
      %v3322 = vld [vmem:[%s2738 + $0x1] sm:$0xff]
      %v3323 = vld [vmem:[%s2738 + $0x11] sm:$0xff]
      %v3324 = vld [vmem:[%s2738 + $0x21] sm:$0xff]
      %v3325 = vld [vmem:[%s2738 + $0x31] sm:$0xff]
      %v3326 = vld [vmem:[%s2738 + $0x41] sm:$0xff]
      %v3327 = vld [vmem:[%s2738 + $0x51] sm:$0xff]
      %v3328 = vld [vmem:[%s2738 + $0x61] sm:$0xff]
      %v3329 = vld [vmem:[%s2738 + $0x71] sm:$0xff]
      %s3330 = scalar_lea.vmem %s2, 64
      %v3331 = vld [vmem:[%s3330] sm:$0xff]
      %v3332 = vld [vmem:[%s3330 + $0x8] sm:$0xff]
      %v3334 = vsel %vm268, %v3322, 0
      %v3337 = vsel %vm268, %v3323, 0
      %v3340 = vsel %vm268, %v3324, 0
      %v3343 = vsel %vm268, %v3325, 0
      %v3346 = vsel %vm268, %v3326, 0
      %v3349 = vsel %vm268, %v3327, 0
      %v3352 = vsel %vm268, %v3328, 0
      %v3355 = vsel %vm268, %v3329, 0
      %3357 = vmatprep.subr.mxu0 0.0
      %3358 = vmatpush1.msra.mxu0 %v3331
      %3359 = vmatprep.subr.mxu0 0.0
      %3360 = vmatpush1.msra.mxu0 %v3332
      %3361 = vmatprep.subr.mxu0 0.0
      %3362 = vmatpush1.msra.mxu0 0.0
      %3363 = vmatprep.subr.mxu0 0.0
      %3364 = vmatpush1.msra.mxu0 0.0
      %3365 = vmatprep.subr.mxu0 0.0
      %3366 = vmatpush1.msra.mxu0 0.0
      %3367 = vmatprep.subr.mxu0 0.0
      %3368 = vmatpush1.msra.mxu0 0.0
      %3369 = vmatprep.subr.mxu0 0.0
      %3370 = vmatpush1.msra.mxu0 0.0
      %3371 = vmatprep.subr.mxu0 0.0
      %3372 = vmatpush1.msra.mxu0 0.0
      %3373 = vmatprep.subr.mxu0 0.0
      %3374 = vmatpush1.msra.mxu0 0.0
      %3375 = vmatprep.subr.mxu0 0.0
      %3376 = vmatpush1.msra.mxu0 0.0
      %3377 = vmatprep.subr.mxu0 0.0
      %3378 = vmatpush1.msra.mxu0 0.0
      %3379 = vmatprep.subr.mxu0 0.0
      %3380 = vmatpush1.msra.mxu0 0.0
      %3381 = vmatprep.subr.mxu0 0.0
      %3382 = vmatpush1.msra.mxu0 0.0
      %3383 = vmatprep.subr.mxu0 0.0
      %3384 = vmatpush1.msra.mxu0 0.0
      %3385 = vmatprep.subr.mxu0 0.0
      %3386 = vmatpush1.msra.mxu0 0.0
      %3387 = vmatprep.subr.mxu0 0.0
      %3388 = vmatpush1.msra.mxu0 0.0
      %3389 = vmatprep.subr.mxu0 0.0
      %3390 = vmatpush1.msra.mxu0 0.0
      %3391 = vmatprep.subr.mxu0 0.0
      %3392 = vmatpush1.msra.mxu0 0.0
      %3393 = vmatprep.subr.mxu0 0.0
      %3394 = vmatpush1.msra.mxu0 0.0
      %3395 = vmatprep.subr.mxu0 0.0
      %3396 = vmatpush1.msra.mxu0 0.0
      %3397 = vmatprep.subr.mxu0 0.0
      %3398 = vmatpush1.msra.mxu0 0.0
      %3399 = vmatprep.subr.mxu0 0.0
      %3400 = vmatpush1.msra.mxu0 0.0
      %3401 = vmatprep.subr.mxu0 0.0
      %3402 = vmatpush1.msra.mxu0 0.0
      %3403 = vmatprep.subr.mxu0 0.0
      %3404 = vmatpush1.msra.mxu0 0.0
      %3405 = vmatprep.subr.mxu0 0.0
      %3406 = vmatpush1.msra.mxu0 0.0
      %3407 = vmatprep.subr.mxu0 0.0
      %3408 = vmatpush1.msra.mxu0 0.0
      %3409 = vmatprep.subr.mxu0 0.0
      %3410 = vmatpush1.msra.mxu0 0.0
      %3411 = vmatprep.subr.mxu0 0.0
      %3412 = vmatpush1.msra.mxu0 0.0
      %3413 = vmatprep.subr.mxu0 0.0
      %3414 = vmatpush1.msra.mxu0 0.0
      %3415 = vmatprep.subr.mxu0 0.0
      %3416 = vmatpush1.msra.mxu0 0.0
      %3417 = vmatprep.subr.mxu0 0.0
      %3418 = vmatpush1.msra.mxu0 0.0
      %3419 = vmatprep.subr.mxu0 0.0
      %3420 = vmatpush1.msra.mxu0 0.0
      %3421 = vmatprep.mubr.f32.mxu0 0.0
      %3422 = vmatmul.mubr.f32.gmra.mrb[0].mxu0 %v3334
      %v3423 = vpop.f32.mrb[0].mxu0
      %v3424 = vadd.f32 0.0, %v3423
      %v3425 = vpop.f32.mrb[0].mxu0
      %3426 = vmatprep.mubr.f32.mxu0 0.0
      %3427 = vmatmul.mubr.f32.gmra.mrb[0].mxu0 %v3337
      %v3428 = vpop.f32.mrb[0].mxu0
      %v3429 = vadd.f32 0.0, %v3428
      %v3430 = vpop.f32.mrb[0].mxu0
      %3431 = vmatprep.mubr.f32.mxu0 0.0
      %3432 = vmatmul.mubr.f32.gmra.mrb[0].mxu0 %v3340
      %v3433 = vpop.f32.mrb[0].mxu0
      %v3434 = vadd.f32 0.0, %v3433
      %v3435 = vpop.f32.mrb[0].mxu0
      %3436 = vmatprep.mubr.f32.mxu0 0.0
      %3437 = vmatmul.mubr.f32.gmra.mrb[0].mxu0 %v3343
      %v3438 = vpop.f32.mrb[0].mxu0
      %v3439 = vadd.f32 0.0, %v3438
      %v3440 = vpop.f32.mrb[0].mxu0
      %3441 = vmatprep.mubr.f32.mxu0 0.0
      %3442 = vmatmul.mubr.f32.gmra.mrb[0].mxu0 %v3346
      %v3443 = vpop.f32.mrb[0].mxu0
      %v3444 = vadd.f32 0.0, %v3443
      %v3445 = vpop.f32.mrb[0].mxu0
      %3446 = vmatprep.mubr.f32.mxu0 0.0
      %3447 = vmatmul.mubr.f32.gmra.mrb[0].mxu0 %v3349
      %v3448 = vpop.f32.mrb[0].mxu0
      %v3449 = vadd.f32 0.0, %v3448
      %v3450 = vpop.f32.mrb[0].mxu0
      %3451 = vmatprep.mubr.f32.mxu0 0.0
      %3452 = vmatmul.mubr.f32.gmra.mrb[0].mxu0 %v3352
      %v3453 = vpop.f32.mrb[0].mxu0
      %v3454 = vadd.f32 0.0, %v3453
      %v3455 = vpop.f32.mrb[0].mxu0
      %3456 = vmatprep.mubr.f32.mxu0 0.0
      %3457 = vmatmul.mubr.f32.gmra.mrb[0].mxu0 %v3355
      %v3458 = vpop.f32.mrb[0].mxu0
      %v3459 = vadd.f32 0.0, %v3458
      %v3460 = vpop.f32.mrb[0].mxu0
      %3461 = vdwg.mxu0
      %v3462 = vadd.f32 %v3314, %v3424
      %v3463 = vadd.f32 %v3315, %v3429
      %v3464 = vadd.f32 %v3316, %v3434
      %v3465 = vadd.f32 %v3317, %v3439
      %v3466 = vadd.f32 %v3318, %v3444
      %v3467 = vadd.f32 %v3319, %v3449
      %v3468 = vadd.f32 %v3320, %v3454
      %v3469 = vadd.f32 %v3321, %v3459
      %v3470 = vld [vmem:[%s2738 + $0x2] sm:$0xff]
      %v3471 = vld [vmem:[%s2738 + $0x12] sm:$0xff]
      %v3472 = vld [vmem:[%s2738 + $0x22] sm:$0xff]
      %v3473 = vld [vmem:[%s2738 + $0x32] sm:$0xff]
      %v3474 = vld [vmem:[%s2738 + $0x42] sm:$0xff]
      %v3475 = vld [vmem:[%s2738 + $0x52] sm:$0xff]
      %v3476 = vld [vmem:[%s2738 + $0x62] sm:$0xff]
      %v3477 = vld [vmem:[%s2738 + $0x72] sm:$0xff]
      %s3478 = scalar_lea.vmem %s2, 80
      %v3479 = vld [vmem:[%s3478] sm:$0xff]
      %v3480 = vld [vmem:[%s3478 + $0x8] sm:$0xff]
      %v3482 = vsel %vm268, %v3470, 0
      %v3485 = vsel %vm268, %v3471, 0
      %v3488 = vsel %vm268, %v3472, 0
      %v3491 = vsel %vm268, %v3473, 0
      %v3494 = vsel %vm268, %v3474, 0
      %v3497 = vsel %vm268, %v3475, 0
      %v3500 = vsel %vm268, %v3476, 0
      %v3503 = vsel %vm268, %v3477, 0
      %3505 = vmatprep.subr.mxu0 0.0
      %3506 = vmatpush1.msra.mxu0 %v3479
      %3507 = vmatprep.subr.mxu0 0.0
      %3508 = vmatpush1.msra.mxu0 %v3480
      %3509 = vmatprep.subr.mxu0 0.0
      %3510 = vmatpush1.msra.mxu0 0.0
      %3511 = vmatprep.subr.mxu0 0.0
      %3512 = vmatpush1.msra.mxu0 0.0
      %3513 = vmatprep.subr.mxu0 0.0
      %3514 = vmatpush1.msra.mxu0 0.0
      %3515 = vmatprep.subr.mxu0 0.0
      %3516 = vmatpush1.msra.mxu0 0.0
      %3517 = vmatprep.subr.mxu0 0.0
      %3518 = vmatpush1.msra.mxu0 0.0
      %3519 = vmatprep.subr.mxu0 0.0
      %3520 = vmatpush1.msra.mxu0 0.0
      %3521 = vmatprep.subr.mxu0 0.0
      %3522 = vmatpush1.msra.mxu0 0.0
      %3523 = vmatprep.subr.mxu0 0.0
      %3524 = vmatpush1.msra.mxu0 0.0
      %3525 = vmatprep.subr.mxu0 0.0
      %3526 = vmatpush1.msra.mxu0 0.0
      %3527 = vmatprep.subr.mxu0 0.0
      %3528 = vmatpush1.msra.mxu0 0.0
      %3529 = vmatprep.subr.mxu0 0.0
      %3530 = vmatpush1.msra.mxu0 0.0
      %3531 = vmatprep.subr.mxu0 0.0
      %3532 = vmatpush1.msra.mxu0 0.0
      %3533 = vmatprep.subr.mxu0 0.0
      %3534 = vmatpush1.msra.mxu0 0.0
      %3535 = vmatprep.subr.mxu0 0.0
      %3536 = vmatpush1.msra.mxu0 0.0
      %3537 = vmatprep.subr.mxu0 0.0
      %3538 = vmatpush1.msra.mxu0 0.0
      %3539 = vmatprep.subr.mxu0 0.0
      %3540 = vmatpush1.msra.mxu0 0.0
      %3541 = vmatprep.subr.mxu0 0.0
      %3542 = vmatpush1.msra.mxu0 0.0
      %3543 = vmatprep.subr.mxu0 0.0
      %3544 = vmatpush1.msra.mxu0 0.0
      %3545 = vmatprep.subr.mxu0 0.0
      %3546 = vmatpush1.msra.mxu0 0.0
      %3547 = vmatprep.subr.mxu0 0.0
      %3548 = vmatpush1.msra.mxu0 0.0
      %3549 = vmatprep.subr.mxu0 0.0
      %3550 = vmatpush1.msra.mxu0 0.0
      %3551 = vmatprep.subr.mxu0 0.0
      %3552 = vmatpush1.msra.mxu0 0.0
      %3553 = vmatprep.subr.mxu0 0.0
      %3554 = vmatpush1.msra.mxu0 0.0
      %3555 = vmatprep.subr.mxu0 0.0
      %3556 = vmatpush1.msra.mxu0 0.0
      %3557 = vmatprep.subr.mxu0 0.0
      %3558 = vmatpush1.msra.mxu0 0.0
      %3559 = vmatprep.subr.mxu0 0.0
      %3560 = vmatpush1.msra.mxu0 0.0
      %3561 = vmatprep.subr.mxu0 0.0
      %3562 = vmatpush1.msra.mxu0 0.0
      %3563 = vmatprep.subr.mxu0 0.0
      %3564 = vmatpush1.msra.mxu0 0.0
      %3565 = vmatprep.subr.mxu0 0.0
      %3566 = vmatpush1.msra.mxu0 0.0
      %3567 = vmatprep.subr.mxu0 0.0
      %3568 = vmatpush1.msra.mxu0 0.0
      %3569 = vmatprep.mubr.f32.mxu0 0.0
      %3570 = vmatmul.mubr.f32.gmra.mrb[0].mxu0 %v3482
      %v3571 = vpop.f32.mrb[0].mxu0
      %v3572 = vadd.f32 0.0, %v3571
      %v3573 = vpop.f32.mrb[0].mxu0
      %3574 = vmatprep.mubr.f32.mxu0 0.0
      %3575 = vmatmul.mubr.f32.gmra.mrb[0].mxu0 %v3485
      %v3576 = vpop.f32.mrb[0].mxu0
      %v3577 = vadd.f32 0.0, %v3576
      %v3578 = vpop.f32.mrb[0].mxu0
      %3579 = vmatprep.mubr.f32.mxu0 0.0
      %3580 = vmatmul.mubr.f32.gmra.mrb[0].mxu0 %v3488
      %v3581 = vpop.f32.mrb[0].mxu0
      %v3582 = vadd.f32 0.0, %v3581
      %v3583 = vpop.f32.mrb[0].mxu0
      %3584 = vmatprep.mubr.f32.mxu0 0.0
      %3585 = vmatmul.mubr.f32.gmra.mrb[0].mxu0 %v3491
      %v3586 = vpop.f32.mrb[0].mxu0
      %v3587 = vadd.f32 0.0, %v3586
      %v3588 = vpop.f32.mrb[0].mxu0
      %3589 = vmatprep.mubr.f32.mxu0 0.0
      %3590 = vmatmul.mubr.f32.gmra.mrb[0].mxu0 %v3494
      %v3591 = vpop.f32.mrb[0].mxu0
      %v3592 = vadd.f32 0.0, %v3591
      %v3593 = vpop.f32.mrb[0].mxu0
      %3594 = vmatprep.mubr.f32.mxu0 0.0
      %3595 = vmatmul.mubr.f32.gmra.mrb[0].mxu0 %v3497
      %v3596 = vpop.f32.mrb[0].mxu0
      %v3597 = vadd.f32 0.0, %v3596
      %v3598 = vpop.f32.mrb[0].mxu0
      %3599 = vmatprep.mubr.f32.mxu0 0.0
      %3600 = vmatmul.mubr.f32.gmra.mrb[0].mxu0 %v3500
      %v3601 = vpop.f32.mrb[0].mxu0
      %v3602 = vadd.f32 0.0, %v3601
      %v3603 = vpop.f32.mrb[0].mxu0
      %3604 = vmatprep.mubr.f32.mxu0 0.0
      %3605 = vmatmul.mubr.f32.gmra.mrb[0].mxu0 %v3503
      %v3606 = vpop.f32.mrb[0].mxu0
      %v3607 = vadd.f32 0.0, %v3606
      %v3608 = vpop.f32.mrb[0].mxu0
      %3609 = vdwg.mxu0
      %v3610 = vadd.f32 %v3462, %v3572
      %v3611 = vadd.f32 %v3463, %v3577
      %v3612 = vadd.f32 %v3464, %v3582
      %v3613 = vadd.f32 %v3465, %v3587
      %v3614 = vadd.f32 %v3466, %v3592
      %v3615 = vadd.f32 %v3467, %v3597
      %v3616 = vadd.f32 %v3468, %v3602
      %v3617 = vadd.f32 %v3469, %v3607
      %s3618 = scalar_lea.vmem [#allocation2], 32
      %v3619 = vld [vmem:[%s3618] sm:$0xff]
      %v3620 = vld [vmem:[%s3618 + $0x10] sm:$0xff]
      %v3621 = vld [vmem:[%s3618 + $0x20] sm:$0xff]
      %v3622 = vld [vmem:[%s3618 + $0x30] sm:$0xff]
      %v3623 = vld [vmem:[%s3618 + $0x40] sm:$0xff]
      %v3624 = vld [vmem:[%s3618 + $0x50] sm:$0xff]
      %v3625 = vld [vmem:[%s3618 + $0x60] sm:$0xff]
      %v3626 = vld [vmem:[%s3618 + $0x70] sm:$0xff]
      %s3627 = scalar_lea.vmem %s2, 96
      %v3628 = vld [vmem:[%s3627] sm:$0xff]
      %v3629 = vld [vmem:[%s3627 + $0x8] sm:$0xff]
      %v3631 = vsel %vm268, %v3619, 0
      %v3634 = vsel %vm268, %v3620, 0
      %v3637 = vsel %vm268, %v3621, 0
      %v3640 = vsel %vm268, %v3622, 0
      %v3643 = vsel %vm268, %v3623, 0
      %v3646 = vsel %vm268, %v3624, 0
      %v3649 = vsel %vm268, %v3625, 0
      %v3652 = vsel %vm268, %v3626, 0
      %3654 = vmatprep.subr.mxu0 0.0
      %3655 = vmatpush1.msra.mxu0 %v3628
      %3656 = vmatprep.subr.mxu0 0.0
      %3657 = vmatpush1.msra.mxu0 %v3629
      %3658 = vmatprep.subr.mxu0 0.0
      %3659 = vmatpush1.msra.mxu0 0.0
      %3660 = vmatprep.subr.mxu0 0.0
      %3661 = vmatpush1.msra.mxu0 0.0
      %3662 = vmatprep.subr.mxu0 0.0
      %3663 = vmatpush1.msra.mxu0 0.0
      %3664 = vmatprep.subr.mxu0 0.0
      %3665 = vmatpush1.msra.mxu0 0.0
      %3666 = vmatprep.subr.mxu0 0.0
      %3667 = vmatpush1.msra.mxu0 0.0
      %3668 = vmatprep.subr.mxu0 0.0
      %3669 = vmatpush1.msra.mxu0 0.0
      %3670 = vmatprep.subr.mxu0 0.0
      %3671 = vmatpush1.msra.mxu0 0.0
      %3672 = vmatprep.subr.mxu0 0.0
      %3673 = vmatpush1.msra.mxu0 0.0
      %3674 = vmatprep.subr.mxu0 0.0
      %3675 = vmatpush1.msra.mxu0 0.0
      %3676 = vmatprep.subr.mxu0 0.0
      %3677 = vmatpush1.msra.mxu0 0.0
      %3678 = vmatprep.subr.mxu0 0.0
      %3679 = vmatpush1.msra.mxu0 0.0
      %3680 = vmatprep.subr.mxu0 0.0
      %3681 = vmatpush1.msra.mxu0 0.0
      %3682 = vmatprep.subr.mxu0 0.0
      %3683 = vmatpush1.msra.mxu0 0.0
      %3684 = vmatprep.subr.mxu0 0.0
      %3685 = vmatpush1.msra.mxu0 0.0
      %3686 = vmatprep.subr.mxu0 0.0
      %3687 = vmatpush1.msra.mxu0 0.0
      %3688 = vmatprep.subr.mxu0 0.0
      %3689 = vmatpush1.msra.mxu0 0.0
      %3690 = vmatprep.subr.mxu0 0.0
      %3691 = vmatpush1.msra.mxu0 0.0
      %3692 = vmatprep.subr.mxu0 0.0
      %3693 = vmatpush1.msra.mxu0 0.0
      %3694 = vmatprep.subr.mxu0 0.0
      %3695 = vmatpush1.msra.mxu0 0.0
      %3696 = vmatprep.subr.mxu0 0.0
      %3697 = vmatpush1.msra.mxu0 0.0
      %3698 = vmatprep.subr.mxu0 0.0
      %3699 = vmatpush1.msra.mxu0 0.0
      %3700 = vmatprep.subr.mxu0 0.0
      %3701 = vmatpush1.msra.mxu0 0.0
      %3702 = vmatprep.subr.mxu0 0.0
      %3703 = vmatpush1.msra.mxu0 0.0
      %3704 = vmatprep.subr.mxu0 0.0
      %3705 = vmatpush1.msra.mxu0 0.0
      %3706 = vmatprep.subr.mxu0 0.0
      %3707 = vmatpush1.msra.mxu0 0.0
      %3708 = vmatprep.subr.mxu0 0.0
      %3709 = vmatpush1.msra.mxu0 0.0
      %3710 = vmatprep.subr.mxu0 0.0
      %3711 = vmatpush1.msra.mxu0 0.0
      %3712 = vmatprep.subr.mxu0 0.0
      %3713 = vmatpush1.msra.mxu0 0.0
      %3714 = vmatprep.subr.mxu0 0.0
      %3715 = vmatpush1.msra.mxu0 0.0
      %3716 = vmatprep.subr.mxu0 0.0
      %3717 = vmatpush1.msra.mxu0 0.0
      %3718 = vmatprep.mubr.f32.mxu0 0.0
      %3719 = vmatmul.mubr.f32.gmra.mrb[0].mxu0 %v3631
      %v3720 = vpop.f32.mrb[0].mxu0
      %v3721 = vadd.f32 0.0, %v3720
      %v3722 = vpop.f32.mrb[0].mxu0
      %3723 = vmatprep.mubr.f32.mxu0 0.0
      %3724 = vmatmul.mubr.f32.gmra.mrb[0].mxu0 %v3634
      %v3725 = vpop.f32.mrb[0].mxu0
      %v3726 = vadd.f32 0.0, %v3725
      %v3727 = vpop.f32.mrb[0].mxu0
      %3728 = vmatprep.mubr.f32.mxu0 0.0
      %3729 = vmatmul.mubr.f32.gmra.mrb[0].mxu0 %v3637
      %v3730 = vpop.f32.mrb[0].mxu0
      %v3731 = vadd.f32 0.0, %v3730
      %v3732 = vpop.f32.mrb[0].mxu0
      %3733 = vmatprep.mubr.f32.mxu0 0.0
      %3734 = vmatmul.mubr.f32.gmra.mrb[0].mxu0 %v3640
      %v3735 = vpop.f32.mrb[0].mxu0
      %v3736 = vadd.f32 0.0, %v3735
      %v3737 = vpop.f32.mrb[0].mxu0
      %3738 = vmatprep.mubr.f32.mxu0 0.0
      %3739 = vmatmul.mubr.f32.gmra.mrb[0].mxu0 %v3643
      %v3740 = vpop.f32.mrb[0].mxu0
      %v3741 = vadd.f32 0.0, %v3740
      %v3742 = vpop.f32.mrb[0].mxu0
      %3743 = vmatprep.mubr.f32.mxu0 0.0
      %3744 = vmatmul.mubr.f32.gmra.mrb[0].mxu0 %v3646
      %v3745 = vpop.f32.mrb[0].mxu0
      %v3746 = vadd.f32 0.0, %v3745
      %v3747 = vpop.f32.mrb[0].mxu0
      %3748 = vmatprep.mubr.f32.mxu0 0.0
      %3749 = vmatmul.mubr.f32.gmra.mrb[0].mxu0 %v3649
      %v3750 = vpop.f32.mrb[0].mxu0
      %v3751 = vadd.f32 0.0, %v3750
      %v3752 = vpop.f32.mrb[0].mxu0
      %3753 = vmatprep.mubr.f32.mxu0 0.0
      %3754 = vmatmul.mubr.f32.gmra.mrb[0].mxu0 %v3652
      %v3755 = vpop.f32.mrb[0].mxu0
      %v3756 = vadd.f32 0.0, %v3755
      %v3757 = vpop.f32.mrb[0].mxu0
      %3758 = vdwg.mxu0
      %v3759 = vadd.f32 %v3610, %v3721
      %v3760 = vadd.f32 %v3611, %v3726
      %v3761 = vadd.f32 %v3612, %v3731
      %v3762 = vadd.f32 %v3613, %v3736
      %v3763 = vadd.f32 %v3614, %v3741
      %v3764 = vadd.f32 %v3615, %v3746
      %v3765 = vadd.f32 %v3616, %v3751
      %v3766 = vadd.f32 %v3617, %v3756
      %v3767 = vld [vmem:[%s3618 + $0x1] sm:$0xff]
      %v3768 = vld [vmem:[%s3618 + $0x11] sm:$0xff]
      %v3769 = vld [vmem:[%s3618 + $0x21] sm:$0xff]
      %v3770 = vld [vmem:[%s3618 + $0x31] sm:$0xff]
      %v3771 = vld [vmem:[%s3618 + $0x41] sm:$0xff]
      %v3772 = vld [vmem:[%s3618 + $0x51] sm:$0xff]
      %v3773 = vld [vmem:[%s3618 + $0x61] sm:$0xff]
      %v3774 = vld [vmem:[%s3618 + $0x71] sm:$0xff]
      %s3775 = scalar_lea.vmem %s2, 112
      %v3776 = vld [vmem:[%s3775] sm:$0xff]
      %v3777 = vld [vmem:[%s3775 + $0x8] sm:$0xff]
      %v3779 = vsel %vm268, %v3767, 0
      %v3782 = vsel %vm268, %v3768, 0
      %v3785 = vsel %vm268, %v3769, 0
      %v3788 = vsel %vm268, %v3770, 0
      %v3791 = vsel %vm268, %v3771, 0
      %v3794 = vsel %vm268, %v3772, 0
      %v3797 = vsel %vm268, %v3773, 0
      %v3800 = vsel %vm268, %v3774, 0
      %3802 = vmatprep.subr.mxu0 0.0
      %3803 = vmatpush1.msra.mxu0 %v3776
      %3804 = vmatprep.subr.mxu0 0.0
      %3805 = vmatpush1.msra.mxu0 %v3777
      %3806 = vmatprep.subr.mxu0 0.0
      %3807 = vmatpush1.msra.mxu0 0.0
      %3808 = vmatprep.subr.mxu0 0.0
      %3809 = vmatpush1.msra.mxu0 0.0
      %3810 = vmatprep.subr.mxu0 0.0
      %3811 = vmatpush1.msra.mxu0 0.0
      %3812 = vmatprep.subr.mxu0 0.0
      %3813 = vmatpush1.msra.mxu0 0.0
      %3814 = vmatprep.subr.mxu0 0.0
      %3815 = vmatpush1.msra.mxu0 0.0
      %3816 = vmatprep.subr.mxu0 0.0
      %3817 = vmatpush1.msra.mxu0 0.0
      %3818 = vmatprep.subr.mxu0 0.0
      %3819 = vmatpush1.msra.mxu0 0.0
      %3820 = vmatprep.subr.mxu0 0.0
      %3821 = vmatpush1.msra.mxu0 0.0
      %3822 = vmatprep.subr.mxu0 0.0
      %3823 = vmatpush1.msra.mxu0 0.0
      %3824 = vmatprep.subr.mxu0 0.0
      %3825 = vmatpush1.msra.mxu0 0.0
      %3826 = vmatprep.subr.mxu0 0.0
      %3827 = vmatpush1.msra.mxu0 0.0
      %3828 = vmatprep.subr.mxu0 0.0
      %3829 = vmatpush1.msra.mxu0 0.0
      %3830 = vmatprep.subr.mxu0 0.0
      %3831 = vmatpush1.msra.mxu0 0.0
      %3832 = vmatprep.subr.mxu0 0.0
      %3833 = vmatpush1.msra.mxu0 0.0
      %3834 = vmatprep.subr.mxu0 0.0
      %3835 = vmatpush1.msra.mxu0 0.0
      %3836 = vmatprep.subr.mxu0 0.0
      %3837 = vmatpush1.msra.mxu0 0.0
      %3838 = vmatprep.subr.mxu0 0.0
      %3839 = vmatpush1.msra.mxu0 0.0
      %3840 = vmatprep.subr.mxu0 0.0
      %3841 = vmatpush1.msra.mxu0 0.0
      %3842 = vmatprep.subr.mxu0 0.0
      %3843 = vmatpush1.msra.mxu0 0.0
      %3844 = vmatprep.subr.mxu0 0.0
      %3845 = vmatpush1.msra.mxu0 0.0
      %3846 = vmatprep.subr.mxu0 0.0
      %3847 = vmatpush1.msra.mxu0 0.0
      %3848 = vmatprep.subr.mxu0 0.0
      %3849 = vmatpush1.msra.mxu0 0.0
      %3850 = vmatprep.subr.mxu0 0.0
      %3851 = vmatpush1.msra.mxu0 0.0
      %3852 = vmatprep.subr.mxu0 0.0
      %3853 = vmatpush1.msra.mxu0 0.0
      %3854 = vmatprep.subr.mxu0 0.0
      %3855 = vmatpush1.msra.mxu0 0.0
      %3856 = vmatprep.subr.mxu0 0.0
      %3857 = vmatpush1.msra.mxu0 0.0
      %3858 = vmatprep.subr.mxu0 0.0
      %3859 = vmatpush1.msra.mxu0 0.0
      %3860 = vmatprep.subr.mxu0 0.0
      %3861 = vmatpush1.msra.mxu0 0.0
      %3862 = vmatprep.subr.mxu0 0.0
      %3863 = vmatpush1.msra.mxu0 0.0
      %3864 = vmatprep.subr.mxu0 0.0
      %3865 = vmatpush1.msra.mxu0 0.0
      %3866 = vmatprep.mubr.f32.mxu0 0.0
      %3867 = vmatmul.mubr.f32.gmra.mrb[0].mxu0 %v3779
      %v3868 = vpop.f32.mrb[0].mxu0
      %v3869 = vadd.f32 0.0, %v3868
      %v3870 = vpop.f32.mrb[0].mxu0
      %3871 = vmatprep.mubr.f32.mxu0 0.0
      %3872 = vmatmul.mubr.f32.gmra.mrb[0].mxu0 %v3782
      %v3873 = vpop.f32.mrb[0].mxu0
      %v3874 = vadd.f32 0.0, %v3873
      %v3875 = vpop.f32.mrb[0].mxu0
      %3876 = vmatprep.mubr.f32.mxu0 0.0
      %3877 = vmatmul.mubr.f32.gmra.mrb[0].mxu0 %v3785
      %v3878 = vpop.f32.mrb[0].mxu0
      %v3879 = vadd.f32 0.0, %v3878
      %v3880 = vpop.f32.mrb[0].mxu0
      %3881 = vmatprep.mubr.f32.mxu0 0.0
      %3882 = vmatmul.mubr.f32.gmra.mrb[0].mxu0 %v3788
      %v3883 = vpop.f32.mrb[0].mxu0
      %v3884 = vadd.f32 0.0, %v3883
      %v3885 = vpop.f32.mrb[0].mxu0
      %3886 = vmatprep.mubr.f32.mxu0 0.0
      %3887 = vmatmul.mubr.f32.gmra.mrb[0].mxu0 %v3791
      %v3888 = vpop.f32.mrb[0].mxu0
      %v3889 = vadd.f32 0.0, %v3888
      %v3890 = vpop.f32.mrb[0].mxu0
      %3891 = vmatprep.mubr.f32.mxu0 0.0
      %3892 = vmatmul.mubr.f32.gmra.mrb[0].mxu0 %v3794
      %v3893 = vpop.f32.mrb[0].mxu0
      %v3894 = vadd.f32 0.0, %v3893
      %v3895 = vpop.f32.mrb[0].mxu0
      %3896 = vmatprep.mubr.f32.mxu0 0.0
      %3897 = vmatmul.mubr.f32.gmra.mrb[0].mxu0 %v3797
      %v3898 = vpop.f32.mrb[0].mxu0
      %v3899 = vadd.f32 0.0, %v3898
      %v3900 = vpop.f32.mrb[0].mxu0
      %3901 = vmatprep.mubr.f32.mxu0 0.0
      %3902 = vmatmul.mubr.f32.gmra.mrb[0].mxu0 %v3800
      %v3903 = vpop.f32.mrb[0].mxu0
      %v3904 = vadd.f32 0.0, %v3903
      %v3905 = vpop.f32.mrb[0].mxu0
      %3906 = vdwg.mxu0
      %v3907 = vadd.f32 %v3759, %v3869
      %v3908 = vadd.f32 %v3760, %v3874
      %v3909 = vadd.f32 %v3761, %v3879
      %v3910 = vadd.f32 %v3762, %v3884
      %v3911 = vadd.f32 %v3763, %v3889
      %v3912 = vadd.f32 %v3764, %v3894
      %v3913 = vadd.f32 %v3765, %v3899
      %v3914 = vadd.f32 %v3766, %v3904
      %v3915 = vld [vmem:[%s3618 + $0x2] sm:$0xff]
      %v3916 = vld [vmem:[%s3618 + $0x12] sm:$0xff]
      %v3917 = vld [vmem:[%s3618 + $0x22] sm:$0xff]
      %v3918 = vld [vmem:[%s3618 + $0x32] sm:$0xff]
      %v3919 = vld [vmem:[%s3618 + $0x42] sm:$0xff]
      %v3920 = vld [vmem:[%s3618 + $0x52] sm:$0xff]
      %v3921 = vld [vmem:[%s3618 + $0x62] sm:$0xff]
      %v3922 = vld [vmem:[%s3618 + $0x72] sm:$0xff]
      %s3923 = scalar_lea.vmem %s2, 128
      %v3924 = vld [vmem:[%s3923] sm:$0xff]
      %v3925 = vld [vmem:[%s3923 + $0x8] sm:$0xff]
      %v3927 = vsel %vm268, %v3915, 0
      %v3930 = vsel %vm268, %v3916, 0
      %v3933 = vsel %vm268, %v3917, 0
      %v3936 = vsel %vm268, %v3918, 0
      %v3939 = vsel %vm268, %v3919, 0
      %v3942 = vsel %vm268, %v3920, 0
      %v3945 = vsel %vm268, %v3921, 0
      %v3948 = vsel %vm268, %v3922, 0
      %3950 = vmatprep.subr.mxu0 0.0
      %3951 = vmatpush1.msra.mxu0 %v3924
      %3952 = vmatprep.subr.mxu0 0.0
      %3953 = vmatpush1.msra.mxu0 %v3925
      %3954 = vmatprep.subr.mxu0 0.0
      %3955 = vmatpush1.msra.mxu0 0.0
      %3956 = vmatprep.subr.mxu0 0.0
      %3957 = vmatpush1.msra.mxu0 0.0
      %3958 = vmatprep.subr.mxu0 0.0
      %3959 = vmatpush1.msra.mxu0 0.0
      %3960 = vmatprep.subr.mxu0 0.0
      %3961 = vmatpush1.msra.mxu0 0.0
      %3962 = vmatprep.subr.mxu0 0.0
      %3963 = vmatpush1.msra.mxu0 0.0
      %3964 = vmatprep.subr.mxu0 0.0
      %3965 = vmatpush1.msra.mxu0 0.0
      %3966 = vmatprep.subr.mxu0 0.0
      %3967 = vmatpush1.msra.mxu0 0.0
      %3968 = vmatprep.subr.mxu0 0.0
      %3969 = vmatpush1.msra.mxu0 0.0
      %3970 = vmatprep.subr.mxu0 0.0
      %3971 = vmatpush1.msra.mxu0 0.0
      %3972 = vmatprep.subr.mxu0 0.0
      %3973 = vmatpush1.msra.mxu0 0.0
      %3974 = vmatprep.subr.mxu0 0.0
      %3975 = vmatpush1.msra.mxu0 0.0
      %3976 = vmatprep.subr.mxu0 0.0
      %3977 = vmatpush1.msra.mxu0 0.0
      %3978 = vmatprep.subr.mxu0 0.0
      %3979 = vmatpush1.msra.mxu0 0.0
      %3980 = vmatprep.subr.mxu0 0.0
      %3981 = vmatpush1.msra.mxu0 0.0
      %3982 = vmatprep.subr.mxu0 0.0
      %3983 = vmatpush1.msra.mxu0 0.0
      %3984 = vmatprep.subr.mxu0 0.0
      %3985 = vmatpush1.msra.mxu0 0.0
      %3986 = vmatprep.subr.mxu0 0.0
      %3987 = vmatpush1.msra.mxu0 0.0
      %3988 = vmatprep.subr.mxu0 0.0
      %3989 = vmatpush1.msra.mxu0 0.0
      %3990 = vmatprep.subr.mxu0 0.0
      %3991 = vmatpush1.msra.mxu0 0.0
      %3992 = vmatprep.subr.mxu0 0.0
      %3993 = vmatpush1.msra.mxu0 0.0
      %3994 = vmatprep.subr.mxu0 0.0
      %3995 = vmatpush1.msra.mxu0 0.0
      %3996 = vmatprep.subr.mxu0 0.0
      %3997 = vmatpush1.msra.mxu0 0.0
      %3998 = vmatprep.subr.mxu0 0.0
      %3999 = vmatpush1.msra.mxu0 0.0
      %4000 = vmatprep.subr.mxu0 0.0
      %4001 = vmatpush1.msra.mxu0 0.0
      %4002 = vmatprep.subr.mxu0 0.0
      %4003 = vmatpush1.msra.mxu0 0.0
      %4004 = vmatprep.subr.mxu0 0.0
      %4005 = vmatpush1.msra.mxu0 0.0
      %4006 = vmatprep.subr.mxu0 0.0
      %4007 = vmatpush1.msra.mxu0 0.0
      %4008 = vmatprep.subr.mxu0 0.0
      %4009 = vmatpush1.msra.mxu0 0.0
      %4010 = vmatprep.subr.mxu0 0.0
      %4011 = vmatpush1.msra.mxu0 0.0
      %4012 = vmatprep.subr.mxu0 0.0
      %4013 = vmatpush1.msra.mxu0 0.0
      %4014 = vmatprep.mubr.f32.mxu0 0.0
      %4015 = vmatmul.mubr.f32.gmra.mrb[0].mxu0 %v3927
      %v4016 = vpop.f32.mrb[0].mxu0
      %v4017 = vadd.f32 0.0, %v4016
      %v4018 = vpop.f32.mrb[0].mxu0
      %4019 = vmatprep.mubr.f32.mxu0 0.0
      %4020 = vmatmul.mubr.f32.gmra.mrb[0].mxu0 %v3930
      %v4021 = vpop.f32.mrb[0].mxu0
      %v4022 = vadd.f32 0.0, %v4021
      %v4023 = vpop.f32.mrb[0].mxu0
      %4024 = vmatprep.mubr.f32.mxu0 0.0
      %4025 = vmatmul.mubr.f32.gmra.mrb[0].mxu0 %v3933
      %v4026 = vpop.f32.mrb[0].mxu0
      %v4027 = vadd.f32 0.0, %v4026
      %v4028 = vpop.f32.mrb[0].mxu0
      %4029 = vmatprep.mubr.f32.mxu0 0.0
      %4030 = vmatmul.mubr.f32.gmra.mrb[0].mxu0 %v3936
      %v4031 = vpop.f32.mrb[0].mxu0
      %v4032 = vadd.f32 0.0, %v4031
      %v4033 = vpop.f32.mrb[0].mxu0
      %4034 = vmatprep.mubr.f32.mxu0 0.0
      %4035 = vmatmul.mubr.f32.gmra.mrb[0].mxu0 %v3939
      %v4036 = vpop.f32.mrb[0].mxu0
      %v4037 = vadd.f32 0.0, %v4036
      %v4038 = vpop.f32.mrb[0].mxu0
      %4039 = vmatprep.mubr.f32.mxu0 0.0
      %4040 = vmatmul.mubr.f32.gmra.mrb[0].mxu0 %v3942
      %v4041 = vpop.f32.mrb[0].mxu0
      %v4042 = vadd.f32 0.0, %v4041
      %v4043 = vpop.f32.mrb[0].mxu0
      %4044 = vmatprep.mubr.f32.mxu0 0.0
      %4045 = vmatmul.mubr.f32.gmra.mrb[0].mxu0 %v3945
      %v4046 = vpop.f32.mrb[0].mxu0
      %v4047 = vadd.f32 0.0, %v4046
      %v4048 = vpop.f32.mrb[0].mxu0
      %4049 = vmatprep.mubr.f32.mxu0 0.0
      %4050 = vmatmul.mubr.f32.gmra.mrb[0].mxu0 %v3948
      %v4051 = vpop.f32.mrb[0].mxu0
      %v4052 = vadd.f32 0.0, %v4051
      %v4053 = vpop.f32.mrb[0].mxu0
      %4054 = vdwg.mxu0
      %v4055 = vadd.f32 %v3907, %v4017
      %v4056 = vadd.f32 %v3908, %v4022
      %v4057 = vadd.f32 %v3909, %v4027
      %v4058 = vadd.f32 %v3910, %v4032
      %v4059 = vadd.f32 %v3911, %v4037
      %v4060 = vadd.f32 %v3912, %v4042
      %v4061 = vadd.f32 %v3913, %v4047
      %v4062 = vadd.f32 %v3914, %v4052
      %v4063 = vlaneseq
      %v4064 = vshrl.u32 %v4063, 7
      %v4065 = vsub.s32 0, %v4064
      %v4066 = vrot.slane %v228, %v4065
      %v4067 = vadd.f32 %v4055, %v4066
      %v4068 = vadd.f32 %v4056, %v4066
      %v4069 = vadd.f32 %v4057, %v4066
      %v4070 = vadd.f32 %v4058, %v4066
      %v4071 = vadd.f32 %v4059, %v4066
      %v4072 = vadd.f32 %v4060, %v4066
      %v4073 = vadd.f32 %v4061, %v4066
      %v4074 = vadd.f32 %v4062, %v4066
      %v4075 = vmax.f32 %v4067, 0.0
      %v4076 = vmax.f32 %v4068, 0.0
      %v4077 = vmax.f32 %v4069, 0.0
      %v4078 = vmax.f32 %v4070, 0.0
      %v4079 = vmax.f32 %v4071, 0.0
      %v4080 = vmax.f32 %v4072, 0.0
      %v4081 = vmax.f32 %v4073, 0.0
      %v4082 = vmax.f32 %v4074, 0.0
      %v4083 = vadd.f32 %v4075, %v4076
      %v4084 = vadd.f32 %v4083, %v4077
      %v4085 = vadd.f32 %v4084, %v4078
      %v4086 = vadd.f32 %v4085, %v4079
      %v4087 = vadd.f32 %v4086, %v4080
      %v4088 = vadd.f32 %v4087, %v4081
      %v4089 = vadd.f32 %v4088, %v4082
      %v4090 = vrot.slane %v4089, 4
      %v4091 = vadd.f32 %v4089, %v4090
      %v4092 = vrot.slane %v4091, 2
      %v4093 = vadd.f32 %v4091, %v4092
      %v4094 = vrot.slane %v4093, 1
      %v4095 = vadd.f32 %v4093, %v4094
      %v4096 = vrcp.pop 64.0
      %v4097 = vmul.f32 %v4095, %v4096
      %v4098 = vld [vmem:[%s3] sm:$0xff]
      %v4099 = vld [vmem:[%s3 + $0x8] sm:$0xff]
      %v4100 = vld [vmem:[%s3 + $0x10] sm:$0xff]
      %v4101 = vld [vmem:[%s3 + $0x18] sm:$0xff]
      %v4102 = vlaneseq
      %v4103 = vshrl.u32 %v4102, 7
      %v4104 = vsub.s32 0, %v4103
      %v4105 = vrot.slane %v229, %v4104
      %vm4106 = vcmask 261120
      %v4108 = vsel %vm4106, %v4097, 0
      %4110 = vmatprep.subr.mxu0 0.0
      %4111 = vmatpush1.msra.mxu0 %v4098
      %4112 = vmatprep.subr.mxu0 0.0
      %4113 = vmatpush1.msra.mxu0 %v4099
      %4114 = vmatprep.subr.mxu0 0.0
      %4115 = vmatpush1.msra.mxu0 %v4100
      %4116 = vmatprep.subr.mxu0 0.0
      %4117 = vmatpush1.msra.mxu0 %v4101
      %4118 = vmatprep.subr.mxu0 0.0
      %4119 = vmatpush1.msra.mxu0 0.0
      %4120 = vmatprep.subr.mxu0 0.0
      %4121 = vmatpush1.msra.mxu0 0.0
      %4122 = vmatprep.subr.mxu0 0.0
      %4123 = vmatpush1.msra.mxu0 0.0
      %4124 = vmatprep.subr.mxu0 0.0
      %4125 = vmatpush1.msra.mxu0 0.0
      %4126 = vmatprep.subr.mxu0 0.0
      %4127 = vmatpush1.msra.mxu0 0.0
      %4128 = vmatprep.subr.mxu0 0.0
      %4129 = vmatpush1.msra.mxu0 0.0
      %4130 = vmatprep.subr.mxu0 0.0
      %4131 = vmatpush1.msra.mxu0 0.0
      %4132 = vmatprep.subr.mxu0 0.0
      %4133 = vmatpush1.msra.mxu0 0.0
      %4134 = vmatprep.subr.mxu0 0.0
      %4135 = vmatpush1.msra.mxu0 0.0
      %4136 = vmatprep.subr.mxu0 0.0
      %4137 = vmatpush1.msra.mxu0 0.0
      %4138 = vmatprep.subr.mxu0 0.0
      %4139 = vmatpush1.msra.mxu0 0.0
      %4140 = vmatprep.subr.mxu0 0.0
      %4141 = vmatpush1.msra.mxu0 0.0
      %4142 = vmatprep.subr.mxu0 0.0
      %4143 = vmatpush1.msra.mxu0 0.0
      %4144 = vmatprep.subr.mxu0 0.0
      %4145 = vmatpush1.msra.mxu0 0.0
      %4146 = vmatprep.subr.mxu0 0.0
      %4147 = vmatpush1.msra.mxu0 0.0
      %4148 = vmatprep.subr.mxu0 0.0
      %4149 = vmatpush1.msra.mxu0 0.0
      %4150 = vmatprep.subr.mxu0 0.0
      %4151 = vmatpush1.msra.mxu0 0.0
      %4152 = vmatprep.subr.mxu0 0.0
      %4153 = vmatpush1.msra.mxu0 0.0
      %4154 = vmatprep.subr.mxu0 0.0
      %4155 = vmatpush1.msra.mxu0 0.0
      %4156 = vmatprep.subr.mxu0 0.0
      %4157 = vmatpush1.msra.mxu0 0.0
      %4158 = vmatprep.subr.mxu0 0.0
      %4159 = vmatpush1.msra.mxu0 0.0
      %4160 = vmatprep.subr.mxu0 0.0
      %4161 = vmatpush1.msra.mxu0 0.0
      %4162 = vmatprep.subr.mxu0 0.0
      %4163 = vmatpush1.msra.mxu0 0.0
      %4164 = vmatprep.subr.mxu0 0.0
      %4165 = vmatpush1.msra.mxu0 0.0
      %4166 = vmatprep.subr.mxu0 0.0
      %4167 = vmatpush1.msra.mxu0 0.0
      %4168 = vmatprep.subr.mxu0 0.0
      %4169 = vmatpush1.msra.mxu0 0.0
      %4170 = vmatprep.subr.mxu0 0.0
      %4171 = vmatpush1.msra.mxu0 0.0
      %4172 = vmatprep.subr.mxu0 0.0
      %4173 = vmatpush1.msra.mxu0 0.0
      %4174 = vmatprep.mubr.f32.mxu0 0.0
      %4175 = vmatmul.mubr.f32.gmra.mrb[0].mxu0 %v4108
      %v4176 = vpop.f32.mrb[0].mxu0
      %v4177 = vadd.f32 %v4105, %v4176
      %v4178 = vpop.f32.mrb[0].mxu0
      %4179 = vdwg.mxu0
      %4180 = vst [vmem:[%s224] sm:$0xff] %v4177
      %p4181 = scmp.lt.s32.totalorder %s16, 1
      %s4182 = scalar_select %p4181, %s16, 1
      %s4183 = smul.addr %s4182, 8
      %s4184 = scalar_lea.vmem %s5, %s4183
      // Predicated region
      $region41: #{_lambda_.1} parent=39 // pred_check
        %p4185 = pneg %p144
      $region42: #{_lambda_.1} parent=39 // pred_check_branch
        %4187 = sbr.rel (%p4185) target = $region44
      $region43: #{_lambda_.1} parent=39 // pred_region
        _
      $region44: #{_lambda_.1} parent=39 // pred_fallthru
        _
    $region40: #{_lambda_.1} parent=5 // pred_fallthru
      _
    %p4188 = scmp.le.s32.totalorder 2, %s11
    // Predicated region
    $region45: #{_lambda_.1} parent=5 // pred_check
      %p4189 = pneg %p4188
    $region46: #{_lambda_.1} parent=5 // pred_check_branch
      %4191 = sbr.rel (%p4189) target = $region48
    $region47: #{_lambda_.1} parent=5 // pred_region
      %s4192 = ssub.s32 %s11, 2
      // Predicated region
      $region49: #{_lambda_.1} parent=47 // pred_check
        %p4193 = pneg %p150
      $region50: #{_lambda_.1} parent=47 // pred_check_branch
        %4195 = sbr.rel (%p4193) target = $region52
      $region51: #{_lambda_.1} parent=47 // pred_region
        %p4196 = scmp.lt.s32.totalorder %s17, 1
        %s4197 = scalar_select %p4196, %s17, 1
        %s4198 = smul.addr %s4197, 8
        %s4199 = scalar_lea.vmem %s5, %s4198
      $region52: #{_lambda_.1} parent=47 // pred_fallthru
        _
    $region48: #{_lambda_.1} parent=5 // pred_fallthru
      _
  $region6: #{_lambda_.1} parent=0 // loop_footer
    %s15 = sadd.s32 1, %s11
  $region7: #{_lambda_.1} parent=0 // loop_footer_branch
    %10 = sbr.rel target = $region3
  $region8: #{_lambda_.1} parent=0 // loop_exit
    _

</llo_original>
